<compile_context>
chip_gen: v5e
topology: v5e:2x2
jax: 0.10.0
libtpu: 0.0.40
codegen_flags: <defaults>
</compile_context>

<pallas_src>
import math
from functools import partial

import jax
import jax.numpy as jnp
from jax import lax
from jax.experimental import pallas as pl
from jax.experimental.pallas import tpu as pltpu


VMEM_LIMIT_BYTES = 48 * 1024 * 1024   # explicit scoped-VMEM budget (fits v7x)


# ----------------------------- helpers ------------------------------------

def _pick_block(dim, target, mult):
    """Largest block <= target that divides `dim` and is a multiple of `mult`;
    falls back to the full dim (always legal)."""
    if dim <= target:
        return dim
    d = (target // mult) * mult
    while d >= mult:
        if dim % d == 0:
            return d
        d -= mult
    return dim


def _gelu_tanh(x):
    c = math.sqrt(2.0 / math.pi)
    return 0.5 * x * (1.0 + jnp.tanh(c * (x + 0.044715 * x * x * x)))


def _heads_per_block(n_head, head_dim):
    """Smallest head group with lane-dense (multiple-of-128) width that
    divides n_head; falls back to all heads."""
    hp = 1
    while (hp * head_dim) % 128 != 0 and hp < n_head:
        hp += 1
    if (hp * head_dim) % 128 != 0 or n_head % hp != 0:
        return n_head
    return hp


# ------------------------- fused linear kernel -----------------------------

def _linear_kernel(*refs, fuse_ln, has_bias, activation, has_residual,
                   transpose_rhs, single_k):
    it = iter(refs)
    x_ref = next(it)
    w_ref = next(it)
    if fuse_ln:
        g_ref = next(it)
        bln_ref = next(it)
    if has_bias:
        bias_ref = next(it)
    if has_residual:
        res_ref = next(it)
    o_ref = next(it)
    acc_ref = None if single_k else next(it)

    x = x_ref[...]
    if fuse_ln:
        # LayerNorm in f32 over full K rows (K is untiled when fuse_ln).
        xf = x.astype(jnp.float32)
        mean = jnp.mean(xf, axis=-1, keepdims=True)
        var = jnp.mean(jnp.square(xf - mean), axis=-1, keepdims=True)
        xf = (xf - mean) * lax.rsqrt(var + 1e-5)
        xf = xf * g_ref[...] + bln_ref[...]
        xb = xf.astype(jnp.bfloat16)
    else:
        xb = x.astype(jnp.bfloat16)        # MXU operands in bf16

    wb = w_ref[...]                        # stored bf16 in HBM

    if transpose_rhs:
        # x (tm, tk) @ w (tn, tk)^T via dimension numbers — no materialized T.
        part = lax.dot_general(xb, wb, (((1,), (1,)), ((), ())),
                               preferred_element_type=jnp.float32)
    else:
        part = jnp.dot(xb, wb, preferred_element_type=jnp.float32)

    def finalize(acc):
        if has_bias:
            acc = acc + bias_ref[...]
        if activation == "gelu":
            acc = _gelu_tanh(acc)
        if has_residual:
            acc = acc + res_ref[...].astype(jnp.float32)
        o_ref[...] = acc.astype(o_ref.dtype)

    if single_k:
        finalize(part)
    else:
        k = pl.program_id(2)

        @pl.when(k == 0)
        def _():
            acc_ref[...] = part

        @pl.when(k > 0)
        def _():
            acc_ref[...] += part

        @pl.when(k == pl.num_programs(2) - 1)
        def _():
            finalize(acc_ref[...])


def linear(x, w, *, bias=None, ln=None, activation="none", residual=None,
           transpose_rhs=False, out_dtype=None,
           tm_target=512, tn_target=512, tk_target=1024):
    """y = [LN](x) @ w (+ bias) (+ GELU) (+ residual).

    w is (K, N), or (N, K) when transpose_rhs=True, and should already be
    bf16 in HBM (params are stored bf16). Accumulation is f32.
    """
    M, K = x.shape
    if transpose_rhs:
        N, K2 = w.shape
    else:
        K2, N = w.shape
    assert K == K2
    out_dtype = x.dtype if out_dtype is None else out_dtype

    if w.dtype != jnp.bfloat16:
        # One-time conversion safety net; params should be stored bf16.
        w = w.astype(jnp.bfloat16)

    # LN needs full rows of x, so the K axis is untiled when fusing it.
    if ln is not None and K >= 4096:
        tm_target = min(tm_target, 256)    # keep untiled-K block within v7x VMEM
    tm = _pick_block(M, tm_target, 8)
    tn = _pick_block(N, tn_target, 128)
    tk = K if ln is not None else _pick_block(K, tk_target, 128)
    nk = K // tk
    single_k = nk == 1

    if single_k:
        grid = (M // tm, N // tn)
        xmap = lambda i, j: (i, 0)
        wmap = (lambda i, j: (j, 0)) if transpose_rhs else (lambda i, j: (0, j))
        kvec = lambda i, j: (0, 0)
        nvec = lambda i, j: (0, j)
        omap = lambda i, j: (i, j)
        scratch = []
        dims = ("parallel", "parallel")
    else:
        grid = (M // tm, N // tn, nk)
        xmap = lambda i, j, k: (i, k)
        wmap = (lambda i, j, k: (j, k)) if transpose_rhs else (lambda i, j, k: (k, j))
        kvec = lambda i, j, k: (0, k)
        nvec = lambda i, j, k: (0, j)
        omap = lambda i, j, k: (i, j)
        scratch = [pltpu.VMEM((tm, tn), jnp.float32)]
        dims = ("parallel", "parallel", "arbitrary")

    inputs = [x]
    in_specs = [pl.BlockSpec((tm, tk), xmap)]

    inputs.append(w)
    if transpose_rhs:
        in_specs.append(pl.BlockSpec((tn, tk), wmap))
    else:
        in_specs.append(pl.BlockSpec((tk, tn), wmap))

    if ln is not None:
        g, b_ln = ln
        inputs += [g.reshape(1, K), b_ln.reshape(1, K)]
        in_specs += [pl.BlockSpec((1, tk), kvec), pl.BlockSpec((1, tk), kvec)]
    if bias is not None:
        inputs.append(bias.reshape(1, N))
        in_specs.append(pl.BlockSpec((1, tn), nvec))
    if residual is not None:
        inputs.append(residual)
        in_specs.append(pl.BlockSpec((tm, tn), omap))

    kernel = partial(_linear_kernel,
                     fuse_ln=ln is not None,
                     has_bias=bias is not None,
                     activation=activation,
                     has_residual=residual is not None,
                     transpose_rhs=transpose_rhs,
                     single_k=single_k)

    bytes_accessed = (M * K * x.dtype.itemsize + K * N * 2
                      + M * N * jnp.dtype(out_dtype).itemsize)
    if residual is not None:
        bytes_accessed += M * N * residual.dtype.itemsize
    cost = pl.CostEstimate(
        flops=2 * M * N * K,
        transcendentals=(M * N if activation == "gelu" else 0),
        bytes_accessed=int(bytes_accessed))

    return pl.pallas_call(
        kernel,
        out_shape=jax.ShapeDtypeStruct((M, N), out_dtype),
        grid=grid,
        in_specs=in_specs,
        out_specs=pl.BlockSpec((tm, tn), omap),
        scratch_shapes=scratch,
        compiler_params=pltpu.CompilerParams(
            dimension_semantics=dims,
            vmem_limit_bytes=VMEM_LIMIT_BYTES),
        cost_estimate=cost,
    )(*inputs)


# --------------------------- attention kernel ------------------------------

def _attn_kernel(q_ref, k_ref, v_ref, o_ref, *, hp, head_dim, scale):
    T = q_ref.shape[1]
    D = head_dim

    qs = q_ref[0]                                      # (T, hp*D) bf16
    ks = k_ref[0]
    vs = v_ref[0]

    row = lax.broadcasted_iota(jnp.int32, (T, T), 0)
    col = lax.broadcasted_iota(jnp.int32, (T, T), 1)
    mask = col <= row                                  # causal

    outs = []
    for h in range(hp):
        q = qs[:, h * D:(h + 1) * D]
        k = ks[:, h * D:(h + 1) * D]
        v = vs[:, h * D:(h + 1) * D]

        # scores via dimension numbers (contract last dims) — no k.T transpose
        s = lax.dot_general(q, k, (((1,), (1,)), ((), ())),
                            preferred_element_type=jnp.float32) * scale
        s = jnp.where(mask, s, -jnp.inf)
        s = s - jnp.max(s, axis=-1, keepdims=True)
        p = jnp.exp(s)
        # approx reciprocal (EUP) — ~1e-3 rel. error vs bitwise torch parity.
        p = p * pl.reciprocal(jnp.sum(p, axis=-1, keepdims=True), approx=True)
        outs.append(jnp.dot(p.astype(jnp.bfloat16), v,
                            preferred_element_type=jnp.float32))

    out = outs[0] if hp == 1 else jnp.concatenate(outs, axis=-1)
    o_ref[0] = out.astype(o_ref.dtype)                 # single lane-dense store


def causal_attention(qkv, *, n_head):
    """qkv: (B, T, 3C) fused projection output (bf16) → returns (B, T, C)."""
    B, T, C3 = qkv.shape
    C = C3 // 3
    D = C // n_head
    hp = _heads_per_block(n_head, D)
    hpd = hp * D
    n_grp = n_head // hp
    c_blocks = C // hpd                                # blocks per C along lanes
    scale = 1.0 / math.sqrt(D)

    cost = pl.CostEstimate(
        flops=4 * B * n_head * T * T * D,
        transcendentals=B * n_head * T * T,
        bytes_accessed=int(B * T * C3 * qkv.dtype.itemsize
                           + B * T * C * qkv.dtype.itemsize))

    return pl.pallas_call(
        partial(_attn_kernel, hp=hp, head_dim=D, scale=scale),
        out_shape=jax.ShapeDtypeStruct((B, T, C), qkv.dtype),
        grid=(B, n_grp),
        in_specs=[
            pl.BlockSpec((1, T, hpd), lambda b, g: (b, 0, g)),                  # Q
            pl.BlockSpec((1, T, hpd), lambda b, g: (b, 0, c_blocks + g)),       # K
            pl.BlockSpec((1, T, hpd), lambda b, g: (b, 0, 2 * c_blocks + g)),   # V
        ],
        out_specs=pl.BlockSpec((1, T, hpd), lambda b, g: (b, 0, g)),
        compiler_params=pltpu.CompilerParams(
            dimension_semantics=("parallel", "parallel"),
            vmem_limit_bytes=VMEM_LIMIT_BYTES),
        cost_estimate=cost,
    )(qkv, qkv, qkv)


# ------------------------------ GPT forward -------------------------------

def gpt_forward(params, idx, *, n_head, vocab_size):
    B, T = idx.shape
    wte = params["wte"]                               # (vocab_padded, C) bf16, tied lm_head
    n_embd = wte.shape[1]
    assert T <= params["wpe"].shape[0]

    tok_emb = jnp.take(wte, idx, axis=0)              # (B, T, C) bf16
    pos_emb = params["wpe"][:T]                       # (T, C) f32
    x = (tok_emb.astype(jnp.float32) + pos_emb[None, :, :]).reshape(B * T, n_embd)

    for blk in params["blocks"]:
        # ---- x = x + c_proj(attn(ln_1(x))) : LN fused in qkv, residual in proj
        qkv = linear(x, blk["attn_w"], bias=blk["attn_b"],
                     ln=(blk["ln1_g"], blk["ln1_b"]), out_dtype=jnp.bfloat16)
        attn_out = causal_attention(qkv.reshape(B, T, 3 * n_embd), n_head=n_head)
        x = linear(attn_out.reshape(B * T, n_embd), blk["proj_w"],
                   bias=blk["proj_b"], residual=x, out_dtype=jnp.float32)

        # ---- x = x + c_proj(gelu(c_fc(ln_2(x)))) : LN+GELU fused, residual fused
        h = linear(x, blk["fc_w"], bias=blk["fc_b"],
                   ln=(blk["ln2_g"], blk["ln2_b"]), activation="gelu",
                   out_dtype=jnp.bfloat16)
        x = linear(h, blk["fc_proj_w"], bias=blk["fc_proj_b"], residual=x,
                   out_dtype=jnp.float32)

    # ---- logits = ln_f(x) @ wte^T  (LN fused, transposed RHS, no bias)
    vocab_padded = wte.shape[0]
    logits = linear(x, wte, ln=(params["lnf_g"], params["lnf_b"]),
                    transpose_rhs=True, out_dtype=jnp.float32)
    logits = logits.reshape(B, T, vocab_padded)
    if vocab_padded != vocab_size:
        logits = logits[:, :, :vocab_size]
    return logits


# ------------------------------ Param init ---------------------------------

def init_params(key, *, vocab_size, block_size, n_layer, n_head, n_embd):
    std = 0.02
    proj_std = std * (2 * n_layer) ** (-0.5)          # NANOGPT_SCALE_INIT
    vocab_padded = ((vocab_size + 127) // 128) * 128  # lm_head tiling-friendly
    keys = iter(jax.random.split(key, 4 + 4 * n_layer))

    def normal_bf16(k, shape, s):
        # Matmul weights live in bf16 in HBM (halves weight DMA per forward).
        return (s * jax.random.normal(k, shape, jnp.float32)).astype(jnp.bfloat16)

    params = {
        "wte": normal_bf16(next(keys), (vocab_padded, n_embd), std),
        "wpe": (std * jax.random.normal(next(keys), (block_size, n_embd),
                                        jnp.float32)).astype(jnp.float32),
        "lnf_g": jnp.ones((n_embd,), jnp.float32),
        "lnf_b": jnp.zeros((n_embd,), jnp.float32),
        "blocks": [],
    }
    for _ in range(n_layer):
        blk = {
            "ln1_g": jnp.ones((n_embd,), jnp.float32),
            "ln1_b": jnp.zeros((n_embd,), jnp.float32),
            "attn_w": normal_bf16(next(keys), (n_embd, 3 * n_embd), std),
            "attn_b": jnp.zeros((3 * n_embd,), jnp.float32),
            "proj_w": normal_bf16(next(keys), (n_embd, n_embd), proj_std),
            "proj_b": jnp.zeros((n_embd,), jnp.float32),
            "ln2_g": jnp.ones((n_embd,), jnp.float32),
            "ln2_b": jnp.zeros((n_embd,), jnp.float32),
            "fc_w": normal_bf16(next(keys), (n_embd, 4 * n_embd), std),
            "fc_b": jnp.zeros((4 * n_embd,), jnp.float32),
            "fc_proj_w": normal_bf16(next(keys), (4 * n_embd, n_embd), proj_std),
            "fc_proj_b": jnp.zeros((n_embd,), jnp.float32),
        }
        params["blocks"].append(blk)
    return params


# --------------------------------- main -------------------------------------

if __name__ == "__main__":
    # Small GPTConfig-consistent shapes.
    vocab_size = 256
    block_size = 64
    n_layer = 2
    n_head = 4
    n_embd = 128
    B, T = 2, 32

    root = jax.random.PRNGKey(0)
    k_params, k_idx, k_x, k_w = jax.random.split(root, 4)
    params = init_params(k_params, vocab_size=vocab_size, block_size=block_size,
                         n_layer=n_layer, n_head=n_head, n_embd=n_embd)
    idx = jax.random.randint(k_idx, (B, T), 0, vocab_size, dtype=jnp.int32)

    fwd = jax.jit(partial(gpt_forward, n_head=n_head, vocab_size=vocab_size))
    logits = fwd(params, idx)
    jax.block_until_ready(logits)
    assert logits.shape == (B, T, vocab_size) and logits.dtype == jnp.float32
    assert bool(jnp.all(jnp.isfinite(logits)))

    # Self-test of the multi-K accumulation path (not exercised by the tiny
    # model, where every call is single-K).
    xk = jax.random.normal(k_x, (256, 2048), jnp.float32)
    wk = (0.02 * jax.random.normal(k_w, (2048, 256), jnp.float32)).astype(jnp.bfloat16)
    yk = linear(xk, wk, out_dtype=jnp.float32, tk_target=512)
    yr = jnp.dot(xk.astype(jnp.bfloat16), wk, preferred_element_type=jnp.float32)
    jax.block_until_ready(yk)
    assert yk.shape == (256, 256)
    assert bool(jnp.allclose(yk, yr, rtol=1e-2, atol=1e-2))

    print("KERNEL_OK")
</pallas_src>

<mosaic_0001>
module attributes {stable_mosaic.version = 11 : i64} {
  func.func @_attn_kernel(%arg0: i32, %arg1: i32, %arg2: memref<1x32x128xbf16, #tpu.memory_space<vmem>>, %arg3: memref<1x32x128xbf16, #tpu.memory_space<vmem>>, %arg4: memref<1x32x128xbf16, #tpu.memory_space<vmem>>, %arg5: memref<1x32x128xbf16, #tpu.memory_space<vmem>>) attributes {dimension_semantics = [#tpu.dimension_semantics<parallel>, #tpu.dimension_semantics<parallel>], iteration_bounds = array<i64: 2, 1>, scalar_prefetch = 0 : i64, scratch_operands = 0 : i64, tpu.core_type = #tpu.core_type<tc>, window_params = [{transform_indices = @transform_0, window_bounds = array<i64: 1, 32, 128>}, {transform_indices = @transform_1, window_bounds = array<i64: 1, 32, 128>}, {transform_indices = @transform_2, window_bounds = array<i64: 1, 32, 128>}, {transform_indices = @transform_3, window_bounds = array<i64: 1, 32, 128>}]} {
    %c0 = arith.constant 0 : index
    %c0_0 = arith.constant 0 : index
    %c0_1 = arith.constant 0 : index
    %0 = vector.load %arg2[%c0, %c0_0, %c0_1] : memref<1x32x128xbf16, #tpu.memory_space<vmem>>, vector<1x32x128xbf16>
    %1 = vector.shape_cast %0 : vector<1x32x128xbf16> to vector<32x128xbf16>
    %c0_2 = arith.constant 0 : index
    %c0_3 = arith.constant 0 : index
    %c0_4 = arith.constant 0 : index
    %2 = vector.load %arg3[%c0_2, %c0_3, %c0_4] : memref<1x32x128xbf16, #tpu.memory_space<vmem>>, vector<1x32x128xbf16>
    %3 = vector.shape_cast %2 : vector<1x32x128xbf16> to vector<32x128xbf16>
    %c0_5 = arith.constant 0 : index
    %c0_6 = arith.constant 0 : index
    %c0_7 = arith.constant 0 : index
    %4 = vector.load %arg4[%c0_5, %c0_6, %c0_7] : memref<1x32x128xbf16, #tpu.memory_space<vmem>>, vector<1x32x128xbf16>
    %5 = vector.shape_cast %4 : vector<1x32x128xbf16> to vector<32x128xbf16>
    %6 = tpu.iota {dimensions = array<i32: 0>} : vector<32x32xi32>
    %7 = tpu.iota {dimensions = array<i32: 1>} : vector<32x32xi32>
    %8 = arith.cmpi sle, %7, %6 : vector<32x32xi32>
    %9 = vector.extract_strided_slice %1 {offsets = [0, 0], sizes = [32, 32], strides = [1, 1]} : vector<32x128xbf16> to vector<32x32xbf16>
    %10 = vector.extract_strided_slice %3 {offsets = [0, 0], sizes = [32, 32], strides = [1, 1]} : vector<32x128xbf16> to vector<32x32xbf16>
    %11 = vector.extract_strided_slice %5 {offsets = [0, 0], sizes = [32, 32], strides = [1, 1]} : vector<32x128xbf16> to vector<32x32xbf16>
    %cst = arith.constant dense<0.000000e+00> : vector<32x32xf32>
    %12 = tpu.matmul %9, %10, %cst {dimension_numbers = #tpu.dot_dimension_numbers<[1], [1], [0], [0], [0, 0, 1, 0], [], []>} : vector<32x32xbf16>, vector<32x32xbf16>, vector<32x32xf32> -> vector<32x32xf32>
    %cst_8 = arith.constant 0.176776692 : f32
    %13 = vector.broadcast %cst_8 : f32 to vector<32x32xf32>
    %14 = arith.mulf %12, %13 : vector<32x32xf32>
    %cst_9 = arith.constant 0xFF800000 : f32
    %15 = vector.broadcast %cst_9 : f32 to vector<32x32xf32>
    %16 = arith.select %8, %14, %15 : vector<32x32xi1>, vector<32x32xf32>
    %cst_10 = arith.constant dense<0xFF800000> : vector<32xf32>
    %17 = vector.multi_reduction <maximumf>, %16, %cst_10 [1] : vector<32x32xf32> to vector<32xf32>
    %18 = vector.shape_cast %17 : vector<32xf32> to vector<32x1xf32>
    %19 = vector.broadcast %18 : vector<32x1xf32> to vector<32x32xf32>
    %20 = arith.subf %16, %19 : vector<32x32xf32>
    %21 = math.exp %20 : vector<32x32xf32>
    %cst_11 = arith.constant dense<0.000000e+00> : vector<32xf32>
    %22 = vector.multi_reduction <add>, %21, %cst_11 [1] : vector<32x32xf32> to vector<32xf32>
    %23 = vector.shape_cast %22 : vector<32xf32> to vector<32x1xf32>
    %24 = tpu.reciprocal %23 {approx = true} : vector<32x1xf32> -> vector<32x1xf32>
    %25 = vector.broadcast %24 : vector<32x1xf32> to vector<32x32xf32>
    %26 = arith.mulf %21, %25 : vector<32x32xf32>
    %27 = arith.truncf %26 : vector<32x32xf32> to vector<32x32xbf16>
    %cst_12 = arith.constant dense<0.000000e+00> : vector<32x32xf32>
    %28 = tpu.matmul %27, %11, %cst_12 {dimension_numbers = #tpu.dot_dimension_numbers<[1], [0], [0], [1], [0, 0, 1, 1], [], []>} : vector<32x32xbf16>, vector<32x32xbf16>, vector<32x32xf32> -> vector<32x32xf32>
    %29 = vector.extract_strided_slice %1 {offsets = [0, 32], sizes = [32, 32], strides = [1, 1]} : vector<32x128xbf16> to vector<32x32xbf16>
    %30 = vector.extract_strided_slice %3 {offsets = [0, 32], sizes = [32, 32], strides = [1, 1]} : vector<32x128xbf16> to vector<32x32xbf16>
    %31 = vector.extract_strided_slice %5 {offsets = [0, 32], sizes = [32, 32], strides = [1, 1]} : vector<32x128xbf16> to vector<32x32xbf16>
    %cst_13 = arith.constant dense<0.000000e+00> : vector<32x32xf32>
    %32 = tpu.matmul %29, %30, %cst_13 {dimension_numbers = #tpu.dot_dimension_numbers<[1], [1], [0], [0], [0, 0, 1, 0], [], []>} : vector<32x32xbf16>, vector<32x32xbf16>, vector<32x32xf32> -> vector<32x32xf32>
    %cst_14 = arith.constant 0.176776692 : f32
    %33 = vector.broadcast %cst_14 : f32 to vector<32x32xf32>
    %34 = arith.mulf %32, %33 : vector<32x32xf32>
    %cst_15 = arith.constant 0xFF800000 : f32
    %35 = vector.broadcast %cst_15 : f32 to vector<32x32xf32>
    %36 = arith.select %8, %34, %35 : vector<32x32xi1>, vector<32x32xf32>
    %cst_16 = arith.constant dense<0xFF800000> : vector<32xf32>
    %37 = vector.multi_reduction <maximumf>, %36, %cst_16 [1] : vector<32x32xf32> to vector<32xf32>
    %38 = vector.shape_cast %37 : vector<32xf32> to vector<32x1xf32>
    %39 = vector.broadcast %38 : vector<32x1xf32> to vector<32x32xf32>
    %40 = arith.subf %36, %39 : vector<32x32xf32>
    %41 = math.exp %40 : vector<32x32xf32>
    %cst_17 = arith.constant dense<0.000000e+00> : vector<32xf32>
    %42 = vector.multi_reduction <add>, %41, %cst_17 [1] : vector<32x32xf32> to vector<32xf32>
    %43 = vector.shape_cast %42 : vector<32xf32> to vector<32x1xf32>
    %44 = tpu.reciprocal %43 {approx = true} : vector<32x1xf32> -> vector<32x1xf32>
    %45 = vector.broadcast %44 : vector<32x1xf32> to vector<32x32xf32>
    %46 = arith.mulf %41, %45 : vector<32x32xf32>
    %47 = arith.truncf %46 : vector<32x32xf32> to vector<32x32xbf16>
    %cst_18 = arith.constant dense<0.000000e+00> : vector<32x32xf32>
    %48 = tpu.matmul %47, %31, %cst_18 {dimension_numbers = #tpu.dot_dimension_numbers<[1], [0], [0], [1], [0, 0, 1, 1], [], []>} : vector<32x32xbf16>, vector<32x32xbf16>, vector<32x32xf32> -> vector<32x32xf32>
    %49 = vector.extract_strided_slice %1 {offsets = [0, 64], sizes = [32, 32], strides = [1, 1]} : vector<32x128xbf16> to vector<32x32xbf16>
    %50 = vector.extract_strided_slice %3 {offsets = [0, 64], sizes = [32, 32], strides = [1, 1]} : vector<32x128xbf16> to vector<32x32xbf16>
    %51 = vector.extract_strided_slice %5 {offsets = [0, 64], sizes = [32, 32], strides = [1, 1]} : vector<32x128xbf16> to vector<32x32xbf16>
    %cst_19 = arith.constant dense<0.000000e+00> : vector<32x32xf32>
    %52 = tpu.matmul %49, %50, %cst_19 {dimension_numbers = #tpu.dot_dimension_numbers<[1], [1], [0], [0], [0, 0, 1, 0], [], []>} : vector<32x32xbf16>, vector<32x32xbf16>, vector<32x32xf32> -> vector<32x32xf32>
    %cst_20 = arith.constant 0.176776692 : f32
    %53 = vector.broadcast %cst_20 : f32 to vector<32x32xf32>
    %54 = arith.mulf %52, %53 : vector<32x32xf32>
    %cst_21 = arith.constant 0xFF800000 : f32
    %55 = vector.broadcast %cst_21 : f32 to vector<32x32xf32>
    %56 = arith.select %8, %54, %55 : vector<32x32xi1>, vector<32x32xf32>
    %cst_22 = arith.constant dense<0xFF800000> : vector<32xf32>
    %57 = vector.multi_reduction <maximumf>, %56, %cst_22 [1] : vector<32x32xf32> to vector<32xf32>
    %58 = vector.shape_cast %57 : vector<32xf32> to vector<32x1xf32>
    %59 = vector.broadcast %58 : vector<32x1xf32> to vector<32x32xf32>
    %60 = arith.subf %56, %59 : vector<32x32xf32>
    %61 = math.exp %60 : vector<32x32xf32>
    %cst_23 = arith.constant dense<0.000000e+00> : vector<32xf32>
    %62 = vector.multi_reduction <add>, %61, %cst_23 [1] : vector<32x32xf32> to vector<32xf32>
    %63 = vector.shape_cast %62 : vector<32xf32> to vector<32x1xf32>
    %64 = tpu.reciprocal %63 {approx = true} : vector<32x1xf32> -> vector<32x1xf32>
    %65 = vector.broadcast %64 : vector<32x1xf32> to vector<32x32xf32>
    %66 = arith.mulf %61, %65 : vector<32x32xf32>
    %67 = arith.truncf %66 : vector<32x32xf32> to vector<32x32xbf16>
    %cst_24 = arith.constant dense<0.000000e+00> : vector<32x32xf32>
    %68 = tpu.matmul %67, %51, %cst_24 {dimension_numbers = #tpu.dot_dimension_numbers<[1], [0], [0], [1], [0, 0, 1, 1], [], []>} : vector<32x32xbf16>, vector<32x32xbf16>, vector<32x32xf32> -> vector<32x32xf32>
    %69 = vector.extract_strided_slice %1 {offsets = [0, 96], sizes = [32, 32], strides = [1, 1]} : vector<32x128xbf16> to vector<32x32xbf16>
    %70 = vector.extract_strided_slice %3 {offsets = [0, 96], sizes = [32, 32], strides = [1, 1]} : vector<32x128xbf16> to vector<32x32xbf16>
    %71 = vector.extract_strided_slice %5 {offsets = [0, 96], sizes = [32, 32], strides = [1, 1]} : vector<32x128xbf16> to vector<32x32xbf16>
    %cst_25 = arith.constant dense<0.000000e+00> : vector<32x32xf32>
    %72 = tpu.matmul %69, %70, %cst_25 {dimension_numbers = #tpu.dot_dimension_numbers<[1], [1], [0], [0], [0, 0, 1, 0], [], []>} : vector<32x32xbf16>, vector<32x32xbf16>, vector<32x32xf32> -> vector<32x32xf32>
    %cst_26 = arith.constant 0.176776692 : f32
    %73 = vector.broadcast %cst_26 : f32 to vector<32x32xf32>
    %74 = arith.mulf %72, %73 : vector<32x32xf32>
    %cst_27 = arith.constant 0xFF800000 : f32
    %75 = vector.broadcast %cst_27 : f32 to vector<32x32xf32>
    %76 = arith.select %8, %74, %75 : vector<32x32xi1>, vector<32x32xf32>
    %cst_28 = arith.constant dense<0xFF800000> : vector<32xf32>
    %77 = vector.multi_reduction <maximumf>, %76, %cst_28 [1] : vector<32x32xf32> to vector<32xf32>
    %78 = vector.shape_cast %77 : vector<32xf32> to vector<32x1xf32>
    %79 = vector.broadcast %78 : vector<32x1xf32> to vector<32x32xf32>
    %80 = arith.subf %76, %79 : vector<32x32xf32>
    %81 = math.exp %80 : vector<32x32xf32>
    %cst_29 = arith.constant dense<0.000000e+00> : vector<32xf32>
    %82 = vector.multi_reduction <add>, %81, %cst_29 [1] : vector<32x32xf32> to vector<32xf32>
    %83 = vector.shape_cast %82 : vector<32xf32> to vector<32x1xf32>
    %84 = tpu.reciprocal %83 {approx = true} : vector<32x1xf32> -> vector<32x1xf32>
    %85 = vector.broadcast %84 : vector<32x1xf32> to vector<32x32xf32>
    %86 = arith.mulf %81, %85 : vector<32x32xf32>
    %87 = arith.truncf %86 : vector<32x32xf32> to vector<32x32xbf16>
    %cst_30 = arith.constant dense<0.000000e+00> : vector<32x32xf32>
    %88 = tpu.matmul %87, %71, %cst_30 {dimension_numbers = #tpu.dot_dimension_numbers<[1], [0], [0], [1], [0, 0, 1, 1], [], []>} : vector<32x32xbf16>, vector<32x32xbf16>, vector<32x32xf32> -> vector<32x32xf32>
    %89 = tpu.concatenate %28, %48, %68, %88 in 1 : vector<32x32xf32>, vector<32x32xf32>, vector<32x32xf32>, vector<32x32xf32> -> vector<32x128xf32>
    %90 = arith.truncf %89 : vector<32x128xf32> to vector<32x128xbf16>
    %c0_31 = arith.constant 0 : index
    %c0_32 = arith.constant 0 : index
    %c0_33 = arith.constant 0 : index
    %91 = vector.load %arg5[%c0_31, %c0_32, %c0_33] : memref<1x32x128xbf16, #tpu.memory_space<vmem>>, vector<1x32x128xbf16>
    %92 = vector.shape_cast %91 : vector<1x32x128xbf16> to vector<32x128xbf16>
    %93 = vector.shape_cast %90 : vector<32x128xbf16> to vector<1x32x128xbf16>
    tpu.vector_store %arg5[%c0_31, %c0_32, %c0_33], %93 {strides = array<i32>} : memref<1x32x128xbf16, #tpu.memory_space<vmem>>, vector<1x32x128xbf16>,
    return
  }
  func.func @transform_0(%arg0: i32, %arg1: i32) -> (i32, i32, i32) {
    %c0_i32 = arith.constant 0 : i32
    %c0_i32_0 = arith.constant 0 : i32
    return %arg0, %c0_i32, %arg1 : i32, i32, i32
  }
  func.func @transform_1(%arg0: i32, %arg1: i32) -> (i32, i32, i32) {
    %c1_i32 = arith.constant 1 : i32
    %0 = arith.addi %c1_i32, %arg1 : i32
    %c0_i32 = arith.constant 0 : i32
    %c0_i32_0 = arith.constant 0 : i32
    return %arg0, %c0_i32, %0 : i32, i32, i32
  }
  func.func @transform_2(%arg0: i32, %arg1: i32) -> (i32, i32, i32) {
    %c2_i32 = arith.constant 2 : i32
    %0 = arith.addi %c2_i32, %arg1 : i32
    %c0_i32 = arith.constant 0 : i32
    %c0_i32_0 = arith.constant 0 : i32
    return %arg0, %c0_i32, %0 : i32, i32, i32
  }
  func.func @transform_3(%arg0: i32, %arg1: i32) -> (i32, i32, i32) {
    %c0_i32 = arith.constant 0 : i32
    %c0_i32_0 = arith.constant 0 : i32
    return %arg0, %c0_i32, %arg1 : i32, i32, i32
  }
}

module attributes {stable_mosaic.version = 11 : i64} {
  func.func @_linear_kernel(%arg0: i32, %arg1: i32, %arg2: memref<64x128xbf16, #tpu.memory_space<vmem>>, %arg3: memref<128x128xbf16, #tpu.memory_space<vmem>>, %arg4: memref<1x128xf32, #tpu.memory_space<vmem>>, %arg5: memref<64x128xf32, #tpu.memory_space<vmem>>, %arg6: memref<64x128xf32, #tpu.memory_space<vmem>>) attributes {dimension_semantics = [#tpu.dimension_semantics<parallel>, #tpu.dimension_semantics<parallel>], iteration_bounds = array<i64: 1, 1>, scalar_prefetch = 0 : i64, scratch_operands = 0 : i64, tpu.core_type = #tpu.core_type<tc>, window_params = [{transform_indices = @transform_0, window_bounds = array<i64: 64, 128>}, {transform_indices = @transform_1, window_bounds = array<i64: 128, 128>}, {transform_indices = @transform_2, window_bounds = array<i64: 1, 128>}, {transform_indices = @transform_3, window_bounds = array<i64: 64, 128>}, {transform_indices = @transform_4, window_bounds = array<i64: 64, 128>}]} {
    %c0 = arith.constant 0 : index
    %c0_0 = arith.constant 0 : index
    %0 = vector.load %arg2[%c0, %c0_0] : memref<64x128xbf16, #tpu.memory_space<vmem>>, vector<64x128xbf16>
    %c0_1 = arith.constant 0 : index
    %c0_2 = arith.constant 0 : index
    %1 = vector.load %arg3[%c0_1, %c0_2] : memref<128x128xbf16, #tpu.memory_space<vmem>>, vector<128x128xbf16>
    %cst = arith.constant dense<0.000000e+00> : vector<64x128xf32>
    %2 = tpu.matmul %0, %1, %cst {dimension_numbers = #tpu.dot_dimension_numbers<[1], [0], [0], [1], [0, 0, 1, 1], [], []>} : vector<64x128xbf16>, vector<128x128xbf16>, vector<64x128xf32> -> vector<64x128xf32>
    %c0_3 = arith.constant 0 : index
    %c0_4 = arith.constant 0 : index
    %3 = vector.load %arg4[%c0_3, %c0_4] : memref<1x128xf32, #tpu.memory_space<vmem>>, vector<1x128xf32>
    %4 = vector.broadcast %3 : vector<1x128xf32> to vector<64x128xf32>
    %5 = arith.addf %2, %4 : vector<64x128xf32>
    %c0_5 = arith.constant 0 : index
    %c0_6 = arith.constant 0 : index
    %6 = vector.load %arg5[%c0_5, %c0_6] : memref<64x128xf32, #tpu.memory_space<vmem>>, vector<64x128xf32>
    %7 = arith.addf %5, %6 : vector<64x128xf32>
    %c0_7 = arith.constant 0 : index
    %c0_8 = arith.constant 0 : index
    %8 = vector.load %arg6[%c0_7, %c0_8] : memref<64x128xf32, #tpu.memory_space<vmem>>, vector<64x128xf32>
    tpu.vector_store %arg6[%c0_7, %c0_8], %7 {strides = array<i32>} : memref<64x128xf32, #tpu.memory_space<vmem>>, vector<64x128xf32>,
    return
  }
  func.func @transform_0(%arg0: i32, %arg1: i32) -> (i32, i32) {
    %c0_i32 = arith.constant 0 : i32
    %c0_i32_0 = arith.constant 0 : i32
    return %arg0, %c0_i32 : i32, i32
  }
  func.func @transform_1(%arg0: i32, %arg1: i32) -> (i32, i32) {
    %c0_i32 = arith.constant 0 : i32
    %c0_i32_0 = arith.constant 0 : i32
    return %c0_i32, %arg1 : i32, i32
  }
  func.func @transform_2(%arg0: i32, %arg1: i32) -> (i32, i32) {
    %c0_i32 = arith.constant 0 : i32
    %c0_i32_0 = arith.constant 0 : i32
    return %c0_i32, %arg1 : i32, i32
  }
  func.func @transform_3(%arg0: i32, %arg1: i32) -> (i32, i32) {
    %c0_i32 = arith.constant 0 : i32
    return %arg0, %arg1 : i32, i32
  }
  func.func @transform_4(%arg0: i32, %arg1: i32) -> (i32, i32) {
    %c0_i32 = arith.constant 0 : i32
    return %arg0, %arg1 : i32, i32
  }
}

module attributes {stable_mosaic.version = 11 : i64} {
  func.func @_linear_kernel(%arg0: i32, %arg1: i32, %arg2: memref<64x128xf32, #tpu.memory_space<vmem>>, %arg3: memref<128x512xbf16, #tpu.memory_space<vmem>>, %arg4: memref<1x128xf32, #tpu.memory_space<vmem>>, %arg5: memref<1x128xf32, #tpu.memory_space<vmem>>, %arg6: memref<1x512xf32, #tpu.memory_space<vmem>>, %arg7: memref<64x512xbf16, #tpu.memory_space<vmem>>) attributes {dimension_semantics = [#tpu.dimension_semantics<parallel>, #tpu.dimension_semantics<parallel>], iteration_bounds = array<i64: 1, 1>, scalar_prefetch = 0 : i64, scratch_operands = 0 : i64, tpu.core_type = #tpu.core_type<tc>, window_params = [{transform_indices = @transform_0, window_bounds = array<i64: 64, 128>}, {transform_indices = @transform_1, window_bounds = array<i64: 128, 512>}, {pipeline_mode = #tpu.pipeline_mode<synchronous>, transform_indices = @transform_2, window_bounds = array<i64: 1, 128>}, {pipeline_mode = #tpu.pipeline_mode<synchronous>, transform_indices = @transform_3, window_bounds = array<i64: 1, 128>}, {transform_indices = @transform_4, window_bounds = array<i64: 1, 512>}, {transform_indices = @transform_5, window_bounds = array<i64: 64, 512>}]} {
    %c0 = arith.constant 0 : index
    %c0_0 = arith.constant 0 : index
    %0 = vector.load %arg2[%c0, %c0_0] : memref<64x128xf32, #tpu.memory_space<vmem>>, vector<64x128xf32>
    %cst = arith.constant dense<0.000000e+00> : vector<64xf32>
    %1 = vector.multi_reduction <add>, %0, %cst [1] : vector<64x128xf32> to vector<64xf32>
    %2 = vector.shape_cast %1 : vector<64xf32> to vector<64x1xf32>
    %cst_1 = arith.constant 1.280000e+02 : f32
    %3 = vector.broadcast %cst_1 : f32 to vector<64x1xf32>
    %4 = arith.divf %2, %3 : vector<64x1xf32>
    %5 = vector.broadcast %4 : vector<64x1xf32> to vector<64x128xf32>
    %6 = arith.subf %0, %5 : vector<64x128xf32>
    %7 = arith.mulf %6, %6 : vector<64x128xf32>
    %cst_2 = arith.constant dense<0.000000e+00> : vector<64xf32>
    %8 = vector.multi_reduction <add>, %7, %cst_2 [1] : vector<64x128xf32> to vector<64xf32>
    %9 = vector.shape_cast %8 : vector<64xf32> to vector<64x1xf32>
    %cst_3 = arith.constant 1.280000e+02 : f32
    %10 = vector.broadcast %cst_3 : f32 to vector<64x1xf32>
    %11 = arith.divf %9, %10 : vector<64x1xf32>
    %12 = vector.broadcast %4 : vector<64x1xf32> to vector<64x128xf32>
    %13 = arith.subf %0, %12 : vector<64x128xf32>
    %cst_4 = arith.constant 9.99999974E-6 : f32
    %14 = vector.broadcast %cst_4 : f32 to vector<64x1xf32>
    %15 = arith.addf %11, %14 : vector<64x1xf32>
    %16 = math.rsqrt %15 : vector<64x1xf32>
    %17 = vector.broadcast %16 : vector<64x1xf32> to vector<64x128xf32>
    %18 = arith.mulf %13, %17 : vector<64x128xf32>
    %c0_5 = arith.constant 0 : index
    %c0_6 = arith.constant 0 : index
    %19 = vector.load %arg4[%c0_5, %c0_6] : memref<1x128xf32, #tpu.memory_space<vmem>>, vector<1x128xf32>
    %20 = vector.broadcast %19 : vector<1x128xf32> to vector<64x128xf32>
    %21 = arith.mulf %18, %20 : vector<64x128xf32>
    %c0_7 = arith.constant 0 : index
    %c0_8 = arith.constant 0 : index
    %22 = vector.load %arg5[%c0_7, %c0_8] : memref<1x128xf32, #tpu.memory_space<vmem>>, vector<1x128xf32>
    %23 = vector.broadcast %22 : vector<1x128xf32> to vector<64x128xf32>
    %24 = arith.addf %21, %23 : vector<64x128xf32>
    %25 = arith.truncf %24 : vector<64x128xf32> to vector<64x128xbf16>
    %c0_9 = arith.constant 0 : index
    %c0_10 = arith.constant 0 : index
    %26 = vector.load %arg3[%c0_9, %c0_10] : memref<128x512xbf16, #tpu.memory_space<vmem>>, vector<128x512xbf16>
    %cst_11 = arith.constant dense<0.000000e+00> : vector<64x512xf32>
    %27 = tpu.matmul %25, %26, %cst_11 {dimension_numbers = #tpu.dot_dimension_numbers<[1], [0], [0], [1], [0, 0, 1, 1], [], []>} : vector<64x128xbf16>, vector<128x512xbf16>, vector<64x512xf32> -> vector<64x512xf32>
    %c0_12 = arith.constant 0 : index
    %c0_13 = arith.constant 0 : index
    %28 = vector.load %arg6[%c0_12, %c0_13] : memref<1x512xf32, #tpu.memory_space<vmem>>, vector<1x512xf32>
    %29 = vector.broadcast %28 : vector<1x512xf32> to vector<64x512xf32>
    %30 = arith.addf %27, %29 : vector<64x512xf32>
    %cst_14 = arith.constant 5.000000e-01 : f32
    %31 = vector.broadcast %cst_14 : f32 to vector<64x512xf32>
    %32 = arith.mulf %31, %30 : vector<64x512xf32>
    %cst_15 = arith.constant 4.471500e-02 : f32
    %33 = vector.broadcast %cst_15 : f32 to vector<64x512xf32>
    %34 = arith.mulf %33, %30 : vector<64x512xf32>
    %35 = arith.mulf %34, %30 : vector<64x512xf32>
    %36 = arith.mulf %35, %30 : vector<64x512xf32>
    %37 = arith.addf %30, %36 : vector<64x512xf32>
    %cst_16 = arith.constant 0.797884583 : f32
    %38 = vector.broadcast %cst_16 : f32 to vector<64x512xf32>
    %39 = arith.mulf %38, %37 : vector<64x512xf32>
    %40 = math.tanh %39 : vector<64x512xf32>
    %cst_17 = arith.constant 1.000000e+00 : f32
    %41 = vector.broadcast %cst_17 : f32 to vector<64x512xf32>
    %42 = arith.addf %41, %40 : vector<64x512xf32>
    %43 = arith.mulf %32, %42 : vector<64x512xf32>
    %44 = arith.truncf %43 : vector<64x512xf32> to vector<64x512xbf16>
    %c0_18 = arith.constant 0 : index
    %c0_19 = arith.constant 0 : index
    %45 = vector.load %arg7[%c0_18, %c0_19] : memref<64x512xbf16, #tpu.memory_space<vmem>>, vector<64x512xbf16>
    tpu.vector_store %arg7[%c0_18, %c0_19], %44 {strides = array<i32>} : memref<64x512xbf16, #tpu.memory_space<vmem>>, vector<64x512xbf16>,
    return
  }
  func.func @transform_0(%arg0: i32, %arg1: i32) -> (i32, i32) {
    %c0_i32 = arith.constant 0 : i32
    %c0_i32_0 = arith.constant 0 : i32
    return %arg0, %c0_i32 : i32, i32
  }
  func.func @transform_1(%arg0: i32, %arg1: i32) -> (i32, i32) {
    %c0_i32 = arith.constant 0 : i32
    %c0_i32_0 = arith.constant 0 : i32
    return %c0_i32, %arg1 : i32, i32
  }
  func.func @transform_2(%arg0: i32, %arg1: i32) -> (i32, i32) {
    %c0_i32 = arith.constant 0 : i32
    %c0_i32_0 = arith.constant 0 : i32
    %c0_i32_1 = arith.constant 0 : i32
    return %c0_i32, %c0_i32_0 : i32, i32
  }
  func.func @transform_3(%arg0: i32, %arg1: i32) -> (i32, i32) {
    %c0_i32 = arith.constant 0 : i32
    %c0_i32_0 = arith.constant 0 : i32
    %c0_i32_1 = arith.constant 0 : i32
    return %c0_i32, %c0_i32_0 : i32, i32
  }
  func.func @transform_4(%arg0: i32, %arg1: i32) -> (i32, i32) {
    %c0_i32 = arith.constant 0 : i32
    %c0_i32_0 = arith.constant 0 : i32
    return %c0_i32, %arg1 : i32, i32
  }
  func.func @transform_5(%arg0: i32, %arg1: i32) -> (i32, i32) {
    %c0_i32 = arith.constant 0 : i32
    return %arg0, %arg1 : i32, i32
  }
}

module attributes {stable_mosaic.version = 11 : i64} {
  func.func @_linear_kernel(%arg0: i32, %arg1: i32, %arg2: memref<64x128xf32, #tpu.memory_space<vmem>>, %arg3: memref<128x384xbf16, #tpu.memory_space<vmem>>, %arg4: memref<1x128xf32, #tpu.memory_space<vmem>>, %arg5: memref<1x128xf32, #tpu.memory_space<vmem>>, %arg6: memref<1x384xf32, #tpu.memory_space<vmem>>, %arg7: memref<64x384xbf16, #tpu.memory_space<vmem>>) attributes {dimension_semantics = [#tpu.dimension_semantics<parallel>, #tpu.dimension_semantics<parallel>], iteration_bounds = array<i64: 1, 1>, scalar_prefetch = 0 : i64, scratch_operands = 0 : i64, tpu.core_type = #tpu.core_type<tc>, window_params = [{transform_indices = @transform_0, window_bounds = array<i64: 64, 128>}, {transform_indices = @transform_1, window_bounds = array<i64: 128, 384>}, {pipeline_mode = #tpu.pipeline_mode<synchronous>, transform_indices = @transform_2, window_bounds = array<i64: 1, 128>}, {pipeline_mode = #tpu.pipeline_mode<synchronous>, transform_indices = @transform_3, window_bounds = array<i64: 1, 128>}, {transform_indices = @transform_4, window_bounds = array<i64: 1, 384>}, {transform_indices = @transform_5, window_bounds = array<i64: 64, 384>}]} {
    %c0 = arith.constant 0 : index
    %c0_0 = arith.constant 0 : index
    %0 = vector.load %arg2[%c0, %c0_0] : memref<64x128xf32, #tpu.memory_space<vmem>>, vector<64x128xf32>
    %cst = arith.constant dense<0.000000e+00> : vector<64xf32>
    %1 = vector.multi_reduction <add>, %0, %cst [1] : vector<64x128xf32> to vector<64xf32>
    %2 = vector.shape_cast %1 : vector<64xf32> to vector<64x1xf32>
    %cst_1 = arith.constant 1.280000e+02 : f32
    %3 = vector.broadcast %cst_1 : f32 to vector<64x1xf32>
    %4 = arith.divf %2, %3 : vector<64x1xf32>
    %5 = vector.broadcast %4 : vector<64x1xf32> to vector<64x128xf32>
    %6 = arith.subf %0, %5 : vector<64x128xf32>
    %7 = arith.mulf %6, %6 : vector<64x128xf32>
    %cst_2 = arith.constant dense<0.000000e+00> : vector<64xf32>
    %8 = vector.multi_reduction <add>, %7, %cst_2 [1] : vector<64x128xf32> to vector<64xf32>
    %9 = vector.shape_cast %8 : vector<64xf32> to vector<64x1xf32>
    %cst_3 = arith.constant 1.280000e+02 : f32
    %10 = vector.broadcast %cst_3 : f32 to vector<64x1xf32>
    %11 = arith.divf %9, %10 : vector<64x1xf32>
    %12 = vector.broadcast %4 : vector<64x1xf32> to vector<64x128xf32>
    %13 = arith.subf %0, %12 : vector<64x128xf32>
    %cst_4 = arith.constant 9.99999974E-6 : f32
    %14 = vector.broadcast %cst_4 : f32 to vector<64x1xf32>
    %15 = arith.addf %11, %14 : vector<64x1xf32>
    %16 = math.rsqrt %15 : vector<64x1xf32>
    %17 = vector.broadcast %16 : vector<64x1xf32> to vector<64x128xf32>
    %18 = arith.mulf %13, %17 : vector<64x128xf32>
    %c0_5 = arith.constant 0 : index
    %c0_6 = arith.constant 0 : index
    %19 = vector.load %arg4[%c0_5, %c0_6] : memref<1x128xf32, #tpu.memory_space<vmem>>, vector<1x128xf32>
    %20 = vector.broadcast %19 : vector<1x128xf32> to vector<64x128xf32>
    %21 = arith.mulf %18, %20 : vector<64x128xf32>
    %c0_7 = arith.constant 0 : index
    %c0_8 = arith.constant 0 : index
    %22 = vector.load %arg5[%c0_7, %c0_8] : memref<1x128xf32, #tpu.memory_space<vmem>>, vector<1x128xf32>
    %23 = vector.broadcast %22 : vector<1x128xf32> to vector<64x128xf32>
    %24 = arith.addf %21, %23 : vector<64x128xf32>
    %25 = arith.truncf %24 : vector<64x128xf32> to vector<64x128xbf16>
    %c0_9 = arith.constant 0 : index
    %c0_10 = arith.constant 0 : index
    %26 = vector.load %arg3[%c0_9, %c0_10] : memref<128x384xbf16, #tpu.memory_space<vmem>>, vector<128x384xbf16>
    %cst_11 = arith.constant dense<0.000000e+00> : vector<64x384xf32>
    %27 = tpu.matmul %25, %26, %cst_11 {dimension_numbers = #tpu.dot_dimension_numbers<[1], [0], [0], [1], [0, 0, 1, 1], [], []>} : vector<64x128xbf16>, vector<128x384xbf16>, vector<64x384xf32> -> vector<64x384xf32>
    %c0_12 = arith.constant 0 : index
    %c0_13 = arith.constant 0 : index
    %28 = vector.load %arg6[%c0_12, %c0_13] : memref<1x384xf32, #tpu.memory_space<vmem>>, vector<1x384xf32>
    %29 = vector.broadcast %28 : vector<1x384xf32> to vector<64x384xf32>
    %30 = arith.addf %27, %29 : vector<64x384xf32>
    %31 = arith.truncf %30 : vector<64x384xf32> to vector<64x384xbf16>
    %c0_14 = arith.constant 0 : index
    %c0_15 = arith.constant 0 : index
    %32 = vector.load %arg7[%c0_14, %c0_15] : memref<64x384xbf16, #tpu.memory_space<vmem>>, vector<64x384xbf16>
    tpu.vector_store %arg7[%c0_14, %c0_15], %31 {strides = array<i32>} : memref<64x384xbf16, #tpu.memory_space<vmem>>, vector<64x384xbf16>,
    return
  }
  func.func @transform_0(%arg0: i32, %arg1: i32) -> (i32, i32) {
    %c0_i32 = arith.constant 0 : i32
    %c0_i32_0 = arith.constant 0 : i32
    return %arg0, %c0_i32 : i32, i32
  }
  func.func @transform_1(%arg0: i32, %arg1: i32) -> (i32, i32) {
    %c0_i32 = arith.constant 0 : i32
    %c0_i32_0 = arith.constant 0 : i32
    return %c0_i32, %arg1 : i32, i32
  }
  func.func @transform_2(%arg0: i32, %arg1: i32) -> (i32, i32) {
    %c0_i32 = arith.constant 0 : i32
    %c0_i32_0 = arith.constant 0 : i32
    %c0_i32_1 = arith.constant 0 : i32
    return %c0_i32, %c0_i32_0 : i32, i32
  }
  func.func @transform_3(%arg0: i32, %arg1: i32) -> (i32, i32) {
    %c0_i32 = arith.constant 0 : i32
    %c0_i32_0 = arith.constant 0 : i32
    %c0_i32_1 = arith.constant 0 : i32
    return %c0_i32, %c0_i32_0 : i32, i32
  }
  func.func @transform_4(%arg0: i32, %arg1: i32) -> (i32, i32) {
    %c0_i32 = arith.constant 0 : i32
    %c0_i32_0 = arith.constant 0 : i32
    return %c0_i32, %arg1 : i32, i32
  }
  func.func @transform_5(%arg0: i32, %arg1: i32) -> (i32, i32) {
    %c0_i32 = arith.constant 0 : i32
    return %arg0, %arg1 : i32, i32
  }
}

module attributes {stable_mosaic.version = 11 : i64} {
  func.func @_linear_kernel(%arg0: i32, %arg1: i32, %arg2: memref<64x512xbf16, #tpu.memory_space<vmem>>, %arg3: memref<512x128xbf16, #tpu.memory_space<vmem>>, %arg4: memref<1x128xf32, #tpu.memory_space<vmem>>, %arg5: memref<64x128xf32, #tpu.memory_space<vmem>>, %arg6: memref<64x128xf32, #tpu.memory_space<vmem>>) attributes {dimension_semantics = [#tpu.dimension_semantics<parallel>, #tpu.dimension_semantics<parallel>], iteration_bounds = array<i64: 1, 1>, scalar_prefetch = 0 : i64, scratch_operands = 0 : i64, tpu.core_type = #tpu.core_type<tc>, window_params = [{transform_indices = @transform_0, window_bounds = array<i64: 64, 512>}, {transform_indices = @transform_1, window_bounds = array<i64: 512, 128>}, {transform_indices = @transform_2, window_bounds = array<i64: 1, 128>}, {transform_indices = @transform_3, window_bounds = array<i64: 64, 128>}, {transform_indices = @transform_4, window_bounds = array<i64: 64, 128>}]} {
    %c0 = arith.constant 0 : index
    %c0_0 = arith.constant 0 : index
    %0 = vector.load %arg2[%c0, %c0_0] : memref<64x512xbf16, #tpu.memory_space<vmem>>, vector<64x512xbf16>
    %c0_1 = arith.constant 0 : index
    %c0_2 = arith.constant 0 : index
    %1 = vector.load %arg3[%c0_1, %c0_2] : memref<512x128xbf16, #tpu.memory_space<vmem>>, vector<512x128xbf16>
    %cst = arith.constant dense<0.000000e+00> : vector<64x128xf32>
    %2 = tpu.matmul %0, %1, %cst {dimension_numbers = #tpu.dot_dimension_numbers<[1], [0], [0], [1], [0, 0, 1, 1], [], []>} : vector<64x512xbf16>, vector<512x128xbf16>, vector<64x128xf32> -> vector<64x128xf32>
    %c0_3 = arith.constant 0 : index
    %c0_4 = arith.constant 0 : index
    %3 = vector.load %arg4[%c0_3, %c0_4] : memref<1x128xf32, #tpu.memory_space<vmem>>, vector<1x128xf32>
    %4 = vector.broadcast %3 : vector<1x128xf32> to vector<64x128xf32>
    %5 = arith.addf %2, %4 : vector<64x128xf32>
    %c0_5 = arith.constant 0 : index
    %c0_6 = arith.constant 0 : index
    %6 = vector.load %arg5[%c0_5, %c0_6] : memref<64x128xf32, #tpu.memory_space<vmem>>, vector<64x128xf32>
    %7 = arith.addf %5, %6 : vector<64x128xf32>
    %c0_7 = arith.constant 0 : index
    %c0_8 = arith.constant 0 : index
    %8 = vector.load %arg6[%c0_7, %c0_8] : memref<64x128xf32, #tpu.memory_space<vmem>>, vector<64x128xf32>
    tpu.vector_store %arg6[%c0_7, %c0_8], %7 {strides = array<i32>} : memref<64x128xf32, #tpu.memory_space<vmem>>, vector<64x128xf32>,
    return
  }
  func.func @transform_0(%arg0: i32, %arg1: i32) -> (i32, i32) {
    %c0_i32 = arith.constant 0 : i32
    %c0_i32_0 = arith.constant 0 : i32
    return %arg0, %c0_i32 : i32, i32
  }
  func.func @transform_1(%arg0: i32, %arg1: i32) -> (i32, i32) {
    %c0_i32 = arith.constant 0 : i32
    %c0_i32_0 = arith.constant 0 : i32
    return %c0_i32, %arg1 : i32, i32
  }
  func.func @transform_2(%arg0: i32, %arg1: i32) -> (i32, i32) {
    %c0_i32 = arith.constant 0 : i32
    %c0_i32_0 = arith.constant 0 : i32
    return %c0_i32, %arg1 : i32, i32
  }
  func.func @transform_3(%arg0: i32, %arg1: i32) -> (i32, i32) {
    %c0_i32 = arith.constant 0 : i32
    return %arg0, %arg1 : i32, i32
  }
  func.func @transform_4(%arg0: i32, %arg1: i32) -> (i32, i32) {
    %c0_i32 = arith.constant 0 : i32
    return %arg0, %arg1 : i32, i32
  }
}

module attributes {stable_mosaic.version = 11 : i64} {
  func.func @_linear_kernel(%arg0: i32, %arg1: i32, %arg2: memref<64x128xf32, #tpu.memory_space<vmem>>, %arg3: memref<256x128xbf16, #tpu.memory_space<vmem>>, %arg4: memref<1x128xf32, #tpu.memory_space<vmem>>, %arg5: memref<1x128xf32, #tpu.memory_space<vmem>>, %arg6: memref<64x256xf32, #tpu.memory_space<vmem>>) attributes {dimension_semantics = [#tpu.dimension_semantics<parallel>, #tpu.dimension_semantics<parallel>], iteration_bounds = array<i64: 1, 1>, scalar_prefetch = 0 : i64, scratch_operands = 0 : i64, tpu.core_type = #tpu.core_type<tc>, window_params = [{transform_indices = @transform_0, window_bounds = array<i64: 64, 128>}, {transform_indices = @transform_1, window_bounds = array<i64: 256, 128>}, {pipeline_mode = #tpu.pipeline_mode<synchronous>, transform_indices = @transform_2, window_bounds = array<i64: 1, 128>}, {pipeline_mode = #tpu.pipeline_mode<synchronous>, transform_indices = @transform_3, window_bounds = array<i64: 1, 128>}, {transform_indices = @transform_4, window_bounds = array<i64: 64, 256>}]} {
    %c0 = arith.constant 0 : index
    %c0_0 = arith.constant 0 : index
    %0 = vector.load %arg2[%c0, %c0_0] : memref<64x128xf32, #tpu.memory_space<vmem>>, vector<64x128xf32>
    %cst = arith.constant dense<0.000000e+00> : vector<64xf32>
    %1 = vector.multi_reduction <add>, %0, %cst [1] : vector<64x128xf32> to vector<64xf32>
    %2 = vector.shape_cast %1 : vector<64xf32> to vector<64x1xf32>
    %cst_1 = arith.constant 1.280000e+02 : f32
    %3 = vector.broadcast %cst_1 : f32 to vector<64x1xf32>
    %4 = arith.divf %2, %3 : vector<64x1xf32>
    %5 = vector.broadcast %4 : vector<64x1xf32> to vector<64x128xf32>
    %6 = arith.subf %0, %5 : vector<64x128xf32>
    %7 = arith.mulf %6, %6 : vector<64x128xf32>
    %cst_2 = arith.constant dense<0.000000e+00> : vector<64xf32>
    %8 = vector.multi_reduction <add>, %7, %cst_2 [1] : vector<64x128xf32> to vector<64xf32>
    %9 = vector.shape_cast %8 : vector<64xf32> to vector<64x1xf32>
    %cst_3 = arith.constant 1.280000e+02 : f32
    %10 = vector.broadcast %cst_3 : f32 to vector<64x1xf32>
    %11 = arith.divf %9, %10 : vector<64x1xf32>
    %12 = vector.broadcast %4 : vector<64x1xf32> to vector<64x128xf32>
    %13 = arith.subf %0, %12 : vector<64x128xf32>
    %cst_4 = arith.constant 9.99999974E-6 : f32
    %14 = vector.broadcast %cst_4 : f32 to vector<64x1xf32>
    %15 = arith.addf %11, %14 : vector<64x1xf32>
    %16 = math.rsqrt %15 : vector<64x1xf32>
    %17 = vector.broadcast %16 : vector<64x1xf32> to vector<64x128xf32>
    %18 = arith.mulf %13, %17 : vector<64x128xf32>
    %c0_5 = arith.constant 0 : index
    %c0_6 = arith.constant 0 : index
    %19 = vector.load %arg4[%c0_5, %c0_6] : memref<1x128xf32, #tpu.memory_space<vmem>>, vector<1x128xf32>
    %20 = vector.broadcast %19 : vector<1x128xf32> to vector<64x128xf32>
    %21 = arith.mulf %18, %20 : vector<64x128xf32>
    %c0_7 = arith.constant 0 : index
    %c0_8 = arith.constant 0 : index
    %22 = vector.load %arg5[%c0_7, %c0_8] : memref<1x128xf32, #tpu.memory_space<vmem>>, vector<1x128xf32>
    %23 = vector.broadcast %22 : vector<1x128xf32> to vector<64x128xf32>
    %24 = arith.addf %21, %23 : vector<64x128xf32>
    %25 = arith.truncf %24 : vector<64x128xf32> to vector<64x128xbf16>
    %c0_9 = arith.constant 0 : index
    %c0_10 = arith.constant 0 : index
    %26 = vector.load %arg3[%c0_9, %c0_10] : memref<256x128xbf16, #tpu.memory_space<vmem>>, vector<256x128xbf16>
    %cst_11 = arith.constant dense<0.000000e+00> : vector<64x256xf32>
    %27 = tpu.matmul %25, %26, %cst_11 {dimension_numbers = #tpu.dot_dimension_numbers<[1], [1], [0], [0], [0, 0, 1, 0], [], []>} : vector<64x128xbf16>, vector<256x128xbf16>, vector<64x256xf32> -> vector<64x256xf32>
    %c0_12 = arith.constant 0 : index
    %c0_13 = arith.constant 0 : index
    %28 = vector.load %arg6[%c0_12, %c0_13] : memref<64x256xf32, #tpu.memory_space<vmem>>, vector<64x256xf32>
    tpu.vector_store %arg6[%c0_12, %c0_13], %27 {strides = array<i32>} : memref<64x256xf32, #tpu.memory_space<vmem>>, vector<64x256xf32>,
    return
  }
  func.func @transform_0(%arg0: i32, %arg1: i32) -> (i32, i32) {
    %c0_i32 = arith.constant 0 : i32
    %c0_i32_0 = arith.constant 0 : i32
    return %arg0, %c0_i32 : i32, i32
  }
  func.func @transform_1(%arg0: i32, %arg1: i32) -> (i32, i32) {
    %c0_i32 = arith.constant 0 : i32
    %c0_i32_0 = arith.constant 0 : i32
    return %arg1, %c0_i32 : i32, i32
  }
  func.func @transform_2(%arg0: i32, %arg1: i32) -> (i32, i32) {
    %c0_i32 = arith.constant 0 : i32
    %c0_i32_0 = arith.constant 0 : i32
    %c0_i32_1 = arith.constant 0 : i32
    return %c0_i32, %c0_i32_0 : i32, i32
  }
  func.func @transform_3(%arg0: i32, %arg1: i32) -> (i32, i32) {
    %c0_i32 = arith.constant 0 : i32
    %c0_i32_0 = arith.constant 0 : i32
    %c0_i32_1 = arith.constant 0 : i32
    return %c0_i32, %c0_i32_0 : i32, i32
  }
  func.func @transform_4(%arg0: i32, %arg1: i32) -> (i32, i32) {
    %c0_i32 = arith.constant 0 : i32
    return %arg0, %arg1 : i32, i32
  }
}

</mosaic_0001>

<llo_original>
// kernel: gpt_forward.13
$region0: #{gpt_forward.13}
  #allocation0 [shape = 'u32[]', space=smem, size = 0x4, offset = 0x4, fixed_abs, tag = 'smem constant byte address 0x4 - core index']
  #allocation1 [shape = 'u32[72,128]{1,0:T(1,128)}', space=vmem, size = 0x9000, scoped, tag = 'internal scratch']
  %s0 = inlined_call_operand.vmem [shape: bf16[64,128], index: 0, kind: input, shape index: {}]
  %s1 = inlined_call_operand.vmem [shape: bf16[128,128], index: 1, kind: input, shape index: {}]
  %s2 = inlined_call_operand.vmem [shape: f32[1,128], index: 2, kind: input, shape index: {}]
  %s3 = inlined_call_operand.vmem [shape: f32[64,128], index: 3, kind: input, shape index: {}]
  %s4 = inlined_call_operand.vmem [shape: f32[64,128], index: 4, kind: output, shape index: {}]
  %s5 = sld [smem:[#allocation0]]
  $region26: #{gpt_forward.13} parent=0
    _
  %s7 = ssub.s32 1, %s5
  %s8 = scalar_select 0, %s7, %s5
  // Predicated region
  $region2: #{gpt_forward.13} parent=0 // pred_check
    _
  $region3: #{gpt_forward.13} parent=0 // pred_check_branch
    %10 = sbr.rel (0) target = $region5
  $region4: #{gpt_forward.13} parent=0 // pred_region
    _
  $region5: #{gpt_forward.13} parent=0 // pred_fallthru
    _
  // Predicated region
  $region6: #{gpt_forward.13} parent=0 // pred_check
    _
  $region7: #{gpt_forward.13} parent=0 // pred_check_branch
    %12 = sbr.rel (0) target = $region9
  $region8: #{gpt_forward.13} parent=0 // pred_region
    _
  $region9: #{gpt_forward.13} parent=0 // pred_fallthru
    _
  // Predicated region
  $region10: #{gpt_forward.13} parent=0 // pred_check
    _
  $region11: #{gpt_forward.13} parent=0 // pred_check_branch
    %14 = sbr.rel (0) target = $region13
  $region12: #{gpt_forward.13} parent=0 // pred_region
    _
  $region13: #{gpt_forward.13} parent=0 // pred_fallthru
    _
  // Predicated region
  $region14: #{gpt_forward.13} parent=0 // pred_check
    _
  $region15: #{gpt_forward.13} parent=0 // pred_check_branch
    %16 = sbr.rel (0) target = $region17
  $region16: #{gpt_forward.13} parent=0 // pred_region
    _
  $region17: #{gpt_forward.13} parent=0 // pred_fallthru
    _
  %v17 = vld [vmem:[%s0] sm:$0xf]
  %v18 = vld [vmem:[%s0 + $0x4] sm:$0xf]
  %v19 = vld [vmem:[%s0 + $0x8] sm:$0xf]
  %v20 = vld [vmem:[%s0 + $0xc] sm:$0xf]
  %v21 = vld [vmem:[%s0 + $0x10] sm:$0xf]
  %v22 = vld [vmem:[%s0 + $0x14] sm:$0xf]
  %v23 = vld [vmem:[%s0 + $0x18] sm:$0xf]
  %v24 = vld [vmem:[%s0 + $0x1c] sm:$0xf]
  %v25 = vld [vmem:[%s1] sm:$0xf]
  %v26 = vld [vmem:[%s1 + $0x4] sm:$0xf]
  %v27 = vld [vmem:[%s1 + $0x8] sm:$0xf]
  %v28 = vld [vmem:[%s1 + $0xc] sm:$0xf]
  %v29 = vld [vmem:[%s1 + $0x10] sm:$0xf]
  %v30 = vld [vmem:[%s1 + $0x14] sm:$0xf]
  %v31 = vld [vmem:[%s1 + $0x18] sm:$0xf]
  %v32 = vld [vmem:[%s1 + $0x1c] sm:$0xf]
  %v33 = vld [vmem:[%s1 + $0x20] sm:$0xf]
  %v34 = vld [vmem:[%s1 + $0x24] sm:$0xf]
  %v35 = vld [vmem:[%s1 + $0x28] sm:$0xf]
  %v36 = vld [vmem:[%s1 + $0x2c] sm:$0xf]
  %v37 = vld [vmem:[%s1 + $0x30] sm:$0xf]
  %v38 = vld [vmem:[%s1 + $0x34] sm:$0xf]
  %v39 = vld [vmem:[%s1 + $0x38] sm:$0xf]
  %v40 = vld [vmem:[%s1 + $0x3c] sm:$0xf]
  %v41 = vld [vmem:[%s2] sm:$0x1]
  %v43 = vperm.slane %v41, 0
  %v53 = vunpack.c.l.b16 %v17
  %v54 = vunpack.c.l.b16 %v18
  %v55 = vunpack.c.l.b16 %v19
  %v56 = vunpack.c.l.b16 %v20
  %v57 = vunpack.c.l.b16 %v21
  %v58 = vunpack.c.l.b16 %v22
  %v59 = vunpack.c.l.b16 %v23
  %v60 = vunpack.c.l.b16 %v24
  %v61 = vpack.c.b16 %v54, %v53
  %v62 = vpack.c.b16 %v56, %v55
  %v63 = vpack.c.b16 %v58, %v57
  %v64 = vpack.c.b16 %v60, %v59
  %v85 = vunpack.c.l.b16 %v25
  %v86 = vunpack.c.l.b16 %v26
  %v87 = vunpack.c.l.b16 %v27
  %v88 = vunpack.c.l.b16 %v28
  %v89 = vunpack.c.l.b16 %v29
  %v90 = vunpack.c.l.b16 %v30
  %v91 = vunpack.c.l.b16 %v31
  %v92 = vunpack.c.l.b16 %v32
  %v93 = vunpack.c.l.b16 %v33
  %v94 = vunpack.c.l.b16 %v34
  %v95 = vunpack.c.l.b16 %v35
  %v96 = vunpack.c.l.b16 %v36
  %v97 = vunpack.c.l.b16 %v37
  %v98 = vunpack.c.l.b16 %v38
  %v99 = vunpack.c.l.b16 %v39
  %v100 = vunpack.c.l.b16 %v40
  %v101 = vpack.c.b16 %v86, %v85
  %v102 = vpack.c.b16 %v88, %v87
  %v103 = vpack.c.b16 %v90, %v89
  %v104 = vpack.c.b16 %v92, %v91
  %v105 = vpack.c.b16 %v94, %v93
  %v106 = vpack.c.b16 %v96, %v95
  %v107 = vpack.c.b16 %v98, %v97
  %v108 = vpack.c.b16 %v100, %v99
  %117 = vmatpush.bf16.msra.mxu0 %v108
  %118 = vmatpush.bf16.msra.mxu0 %v107
  %119 = vmatpush.bf16.msra.mxu0 %v106
  %120 = vmatpush.bf16.msra.mxu0 %v105
  %121 = vmatpush.bf16.msra.mxu0 %v104
  %122 = vmatpush.bf16.msra.mxu0 %v103
  %123 = vmatpush.bf16.msra.mxu0 %v102
  %124 = vmatpush.bf16.msra.mxu0 %v101
  %125 = vmatmul.bf16.gmra.mxu0 %v61
  %v126 = vpop.f32.mrf.mxu0
  %v127 = vadd.f32 %v43, %v126
  %v128 = vpop.f32.mrf.mxu0
  %v129 = vadd.f32 %v43, %v128
  %130 = vmatmul.bf16.gmra.mxu0 %v62
  %v131 = vpop.f32.mrf.mxu0
  %v132 = vadd.f32 %v43, %v131
  %v133 = vpop.f32.mrf.mxu0
  %v134 = vadd.f32 %v43, %v133
  %135 = vmatmul.bf16.gmra.mxu0 %v63
  %v136 = vpop.f32.mrf.mxu0
  %v137 = vadd.f32 %v43, %v136
  %v138 = vpop.f32.mrf.mxu0
  %v139 = vadd.f32 %v43, %v138
  %140 = vmatmul.bf16.gmra.mxu0 %v64
  %v141 = vpop.f32.mrf.mxu0
  %v142 = vadd.f32 %v43, %v141
  %v143 = vpop.f32.mrf.mxu0
  %v144 = vadd.f32 %v43, %v143
  %145 = vdwg.mxu0
  %v146 = vld [vmem:[%s3] sm:$0xff]
  %v147 = vld [vmem:[%s3 + $0x8] sm:$0xff]
  %v148 = vld [vmem:[%s3 + $0x10] sm:$0xff]
  %v149 = vld [vmem:[%s3 + $0x18] sm:$0xff]
  %v150 = vld [vmem:[%s3 + $0x20] sm:$0xff]
  %v151 = vld [vmem:[%s3 + $0x28] sm:$0xff]
  %v152 = vld [vmem:[%s3 + $0x30] sm:$0xff]
  %v153 = vld [vmem:[%s3 + $0x38] sm:$0xff]
  %v154 = vadd.f32 %v127, %v146
  %v155 = vadd.f32 %v129, %v147
  %v156 = vadd.f32 %v132, %v148
  %v157 = vadd.f32 %v134, %v149
  %v158 = vadd.f32 %v137, %v150
  %v159 = vadd.f32 %v139, %v151
  %v160 = vadd.f32 %v142, %v152
  %v161 = vadd.f32 %v144, %v153
  %162 = vst [vmem:[%s4] sm:$0xff] %v154
  %163 = vst [vmem:[%s4 + $0x8] sm:$0xff] %v155
  %164 = vst [vmem:[%s4 + $0x10] sm:$0xff] %v156
  %165 = vst [vmem:[%s4 + $0x18] sm:$0xff] %v157
  %166 = vst [vmem:[%s4 + $0x20] sm:$0xff] %v158
  %167 = vst [vmem:[%s4 + $0x28] sm:$0xff] %v159
  %168 = vst [vmem:[%s4 + $0x30] sm:$0xff] %v160
  %169 = vst [vmem:[%s4 + $0x38] sm:$0xff] %v161
  // Predicated region
  $region18: #{gpt_forward.13} parent=0 // pred_check
    _
  $region19: #{gpt_forward.13} parent=0 // pred_check_branch
    %171 = sbr.rel (0) target = $region21
  $region20: #{gpt_forward.13} parent=0 // pred_region
    _
  $region21: #{gpt_forward.13} parent=0 // pred_fallthru
    _
  // Predicated region
  $region22: #{gpt_forward.13} parent=0 // pred_check
    _
  $region23: #{gpt_forward.13} parent=0 // pred_check_branch
    %173 = sbr.rel (0) target = $region25
  $region24: #{gpt_forward.13} parent=0 // pred_region
    _
  $region25: #{gpt_forward.13} parent=0 // pred_fallthru
    _

// kernel: gpt_forward.12
$region0: #{gpt_forward.12}
  #allocation0 [shape = 'u32[]', space=smem, size = 0x4, offset = 0x4, fixed_abs, tag = 'smem constant byte address 0x4 - core index']
  #allocation1 [shape = 'u32[72,128]{1,0:T(1,128)}', space=vmem, size = 0x9000, scoped, tag = 'internal scratch']
  %s0 = inlined_call_operand.vmem [shape: bf16[2,32,384], index: 0, kind: input, shape index: {}, may-alias: {0,1,2}]
  %s1 = inlined_call_operand.vmem [shape: bf16[2,32,384], index: 1, kind: input, shape index: {}, may-alias: {0,1,2}]
  %s2 = inlined_call_operand.vmem [shape: bf16[2,32,384], index: 2, kind: input, shape index: {}, may-alias: {0,1,2}]
  %s3 = inlined_call_operand.vmem [shape: bf16[2,32,128], index: 3, kind: output, shape index: {}]
  %s4 = sld [smem:[#allocation0]]
  $region168: #{gpt_forward.12} parent=0
    _
  %s6 = ssub.s32 1, %s4
  %s7 = scalar_select 0, %s6, %s4
  $region1: #{gpt_forward.12} parent=0
    #allocation2 [shape = 'u8[16384]{0}', space=vmem, size = 0x4000, scoped, tag = 'input window, operand 0']
    #allocation3 [shape = 'u8[16384]{0}', space=vmem, size = 0x4000, scoped, tag = 'input window, operand 1']
    #allocation4 [shape = 'u8[16384]{0}', space=vmem, size = 0x4000, scoped, tag = 'input window, operand 2']
    loop: start=0, step=1, limit=4
    $region2: #{gpt_forward.12} parent=1 // loop_pre_header
      _
    $region3: #{gpt_forward.12} parent=1 // loop_header
      %s9 = sphi 0, %s13
      %p10 = scmp.ge.s32.totalorder %s9, 4
      %s16 = sphi 0, %s28
      %s17 = sphi 0, %s24
      %s18 = sphi 0, %s16
      %s19 = sphi 0, %s17
      %s20 = sphi 0, %s18
      %s21 = sphi 0, %s19
      %s33 = sphi 0, %s35
      %s36 = sphi 0, %s33
      %s37 = sphi 0, %s36
      %s53 = sphi 0, %s37
      %s63 = sphi 0, %s65
      %s66 = sphi 0, %s63
      %s67 = sphi 0, %s66
      %s83 = sphi 0, %s67
      %s93 = sphi 0, %s95
      %s96 = sphi 0, %s93
      %s97 = sphi 0, %s96
      %s113 = sphi 0, %s97
      %s121 = sphi 0, %s123
      %s124 = sphi 0, %s121
      %s125 = sphi 0, %s124
      %s141 = sphi 0, %s125
    $region4: #{gpt_forward.12} parent=1 // loop_header_branch
      %12 = sbr.rel (%p10) target = $region8
    $region5: #{gpt_forward.12} parent=1 // loop_body
      %s14 = ssub.s32 %s9, 1
      %s15 = ssub.s32 %s9, 2
      %s22 = sadd.s32 1, %s17
      %p23 = scmp.ge.s32.totalorder %s22, 1
      %s24 = scalar_select %p23, 0, %s22
      %s25 = sadd.s32 1, %s16
      %s26 = scalar_select %p23, %s25, %s16
      %p27 = scmp.ge.s32.totalorder %s26, 2
      %s28 = scalar_select %p27, 0, %s26
      %s29 = ssub.s32 %s16, %s28
      %s30 = ssub.s32 %s17, %s24
      %s31 = sor.u32 %s29, %s30
      %p32 = scmp.eq.s32.totalorder %s31, 0
      %s34 = sadd.s32 %s33, 1
      %s35 = scalar_select %p32, %s33, %s34
      %p38 = pneg %p32
      %p39 = scmp.eq.s32.totalorder %s9, 1
      %p40 = por %p38, %p39
      %p41 = scmp.ne.s32.totalorder %s33, %s36
      %p42 = scmp.eq.s32.totalorder %s9, 0
      %p43 = por %p41, %p42
      %p44 = scmp.ne.s32.totalorder %s33, %s36
      %p45 = scmp.eq.s32.totalorder %s14, 1
      %p46 = por %p44, %p45
      %p47 = scmp.ne.s32.totalorder %s36, %s37
      %p48 = scmp.eq.s32.totalorder %s14, 0
      %p49 = por %p47, %p48
      %p50 = scmp.ne.s32.totalorder %s36, %s37
      %p51 = scmp.eq.s32.totalorder %s15, 1
      %p52 = por %p50, %p51
      %p54 = scmp.ne.s32.totalorder %s37, %s53
      %p55 = scmp.eq.s32.totalorder %s15, 0
      %p56 = por %p54, %p55
      %s57 = sadd.s32 %s17, 1
      %s58 = sadd.s32 %s24, 1
      %s59 = ssub.s32 %s16, %s28
      %s60 = ssub.s32 %s57, %s58
      %s61 = sor.u32 %s59, %s60
      %p62 = scmp.eq.s32.totalorder %s61, 0
      %s64 = sadd.s32 %s63, 1
      %s65 = scalar_select %p62, %s63, %s64
      %p68 = pneg %p62
      %p69 = scmp.eq.s32.totalorder %s9, 1
      %p70 = por %p68, %p69
      %p71 = scmp.ne.s32.totalorder %s63, %s66
      %p72 = scmp.eq.s32.totalorder %s9, 0
      %p73 = por %p71, %p72
      %p74 = scmp.ne.s32.totalorder %s63, %s66
      %p75 = scmp.eq.s32.totalorder %s14, 1
      %p76 = por %p74, %p75
      %p77 = scmp.ne.s32.totalorder %s66, %s67
      %p78 = scmp.eq.s32.totalorder %s14, 0
      %p79 = por %p77, %p78
      %p80 = scmp.ne.s32.totalorder %s66, %s67
      %p81 = scmp.eq.s32.totalorder %s15, 1
      %p82 = por %p80, %p81
      %p84 = scmp.ne.s32.totalorder %s67, %s83
      %p85 = scmp.eq.s32.totalorder %s15, 0
      %p86 = por %p84, %p85
      %s87 = sadd.s32 %s17, 2
      %s88 = sadd.s32 %s24, 2
      %s89 = ssub.s32 %s16, %s28
      %s90 = ssub.s32 %s87, %s88
      %s91 = sor.u32 %s89, %s90
      %p92 = scmp.eq.s32.totalorder %s91, 0
      %s94 = sadd.s32 %s93, 1
      %s95 = scalar_select %p92, %s93, %s94
      %p98 = pneg %p92
      %p99 = scmp.eq.s32.totalorder %s9, 1
      %p100 = por %p98, %p99
      %p101 = scmp.ne.s32.totalorder %s93, %s96
      %p102 = scmp.eq.s32.totalorder %s9, 0
      %p103 = por %p101, %p102
      %p104 = scmp.ne.s32.totalorder %s93, %s96
      %p105 = scmp.eq.s32.totalorder %s14, 1
      %p106 = por %p104, %p105
      %p107 = scmp.ne.s32.totalorder %s96, %s97
      %p108 = scmp.eq.s32.totalorder %s14, 0
      %p109 = por %p107, %p108
      %p110 = scmp.ne.s32.totalorder %s96, %s97
      %p111 = scmp.eq.s32.totalorder %s15, 1
      %p112 = por %p110, %p111
      %p114 = scmp.ne.s32.totalorder %s97, %s113
      %p115 = scmp.eq.s32.totalorder %s15, 0
      %p116 = por %p114, %p115
      %s117 = ssub.s32 %s16, %s28
      %s118 = ssub.s32 %s17, %s24
      %s119 = sor.u32 %s117, %s118
      %p120 = scmp.eq.s32.totalorder %s119, 0
      %s122 = sadd.s32 %s121, 1
      %s123 = scalar_select %p120, %s121, %s122
      %p126 = pneg %p120
      %p127 = scmp.eq.s32.totalorder %s9, 1
      %p128 = por %p126, %p127
      %p129 = scmp.ne.s32.totalorder %s121, %s124
      %p130 = scmp.eq.s32.totalorder %s9, 0
      %p131 = por %p129, %p130
      %p132 = scmp.ne.s32.totalorder %s121, %s124
      %p133 = scmp.eq.s32.totalorder %s14, 1
      %p134 = por %p132, %p133
      %p135 = scmp.ne.s32.totalorder %s124, %s125
      %p136 = scmp.eq.s32.totalorder %s14, 0
      %p137 = por %p135, %p136
      %p138 = scmp.ne.s32.totalorder %s124, %s125
      %p139 = scmp.eq.s32.totalorder %s15, 1
      %p140 = por %p138, %p139
      %p142 = scmp.ne.s32.totalorder %s125, %s141
      %p143 = scmp.eq.s32.totalorder %s15, 0
      %p144 = por %p142, %p143
      %p145 = scmp.le.s32.totalorder 1, %s9
      %p146 = scmp.lt.s32.totalorder %s9, 3
      %p147 = pnand %p145, %p146
      %p148 = pneg %p147
      // Predicated region
      $region9: #{gpt_forward.12} parent=5 // pred_check
        _
      $region10: #{gpt_forward.12} parent=5 // pred_check_branch
        %150 = sbr.rel (%p147) target = $region12
      $region11: #{gpt_forward.12} parent=5 // pred_region
        %s151 = ssub.s32 %s9, 1
      $region12: #{gpt_forward.12} parent=5 // pred_fallthru
        _
      %p152 = scmp.lt.s32.totalorder %s9, 2
      // Predicated region
      $region13: #{gpt_forward.12} parent=5 // pred_check
        %p153 = pneg %p152
      $region14: #{gpt_forward.12} parent=5 // pred_check_branch
        %155 = sbr.rel (%p153) target = $region16
      $region15: #{gpt_forward.12} parent=5 // pred_region
        // Predicated region
        $region17: #{gpt_forward.12} parent=15 // pred_check
          %p156 = pneg %p43
        $region18: #{gpt_forward.12} parent=15 // pred_check_branch
          %158 = sbr.rel (%p156) target = $region20
        $region19: #{gpt_forward.12} parent=15 // pred_region
          %s159 = sand.u32 %s33, 1
          %s160 = sand.u32 %s33, 1
          %s161 = smul.addr %s160, 16
          %s162 = scalar_lea.vmem [#allocation2], %s161
          %s163 = smul.addr %s16, 12
          %s164 = sadd.s32 %s17, %s163
          %s165 = smul.addr %s164, 4
          %s166 = scalar_lea.vmem %s0, %s165
          // Predicated region
          $region21: #{gpt_forward.12} parent=19 // pred_check
            _
          $region22: #{gpt_forward.12} parent=19 // pred_check_branch
            %168 = sbr.rel (0) target = $region24
          $region23: #{gpt_forward.12} parent=19 // pred_region
            // Predicated region
            $region25: #{gpt_forward.12} parent=23 // pred_check
              _
            $region26: #{gpt_forward.12} parent=23 // pred_check_branch
              %170 = sbr.rel target = $region28
            $region27: #{gpt_forward.12} parent=23 // pred_region
              // Predicated region
              $region40: #{gpt_forward.12} parent=27 // pred_check
                _
              $region41: #{gpt_forward.12} parent=27 // pred_check_branch
                %192 = sbr.rel (0) target = $region43
              $region42: #{gpt_forward.12} parent=27 // pred_region
                loop: start=0, step=1, limit=1
                $region44: #{gpt_forward.12} parent=42 // loop_pre_header
                  _
                $region45: #{gpt_forward.12} parent=42 // loop_header
                  %s194 = sphi 0, %s198
                  %p195 = scmp.ge.s32.totalorder %s194, 1
                  %s199 = sphi %s166, %s166
                  %s200 = sphi %s162, %s162
                $region46: #{gpt_forward.12} parent=42 // loop_header_branch
                  %197 = sbr.rel (%p195) target = $region50
                $region47: #{gpt_forward.12} parent=42 // loop_body
                  _
                $region48: #{gpt_forward.12} parent=42 // loop_footer
                  %s198 = sadd.s32 1, %s194
                $region49: #{gpt_forward.12} parent=42 // loop_footer_branch
                  %193 = sbr.rel target = $region45
                $region50: #{gpt_forward.12} parent=42 // loop_exit
                  _
                %s202 = ssub.s32 16, 1
                loop: start=0, step=1, limit=1
                $region51: #{gpt_forward.12} parent=42 // loop_pre_header
                  _
                $region52: #{gpt_forward.12} parent=42 // loop_header
                  %s204 = sphi 0, %s208
                  %p205 = scmp.ge.s32.totalorder %s204, 1
                  %s209 = sphi %s166, %s166
                  %s210 = sphi %s162, %s162
                $region53: #{gpt_forward.12} parent=42 // loop_header_branch
                  %207 = sbr.rel (%p205) target = $region57
                $region54: #{gpt_forward.12} parent=42 // loop_body
                  %v211 = vld [vmem:[%s209] sm:%s202]
                  %212 = vst [vmem:[%s210] sm:%s202] %v211
                  %v213 = vld [vmem:[%s209 + $0xc] sm:%s202]
                  %214 = vst [vmem:[%s210 + $0x4] sm:%s202] %v213
                  %v215 = vld [vmem:[%s209 + $0x18] sm:%s202]
                  %216 = vst [vmem:[%s210 + $0x8] sm:%s202] %v215
                  %v217 = vld [vmem:[%s209 + $0x24] sm:%s202]
                  %218 = vst [vmem:[%s210 + $0xc] sm:%s202] %v217
                $region55: #{gpt_forward.12} parent=42 // loop_footer
                  %s208 = sadd.s32 1, %s204
                $region56: #{gpt_forward.12} parent=42 // loop_footer_branch
                  %203 = sbr.rel target = $region52
                $region57: #{gpt_forward.12} parent=42 // loop_exit
                  _
              $region43: #{gpt_forward.12} parent=27 // pred_fallthru
                _
            $region28: #{gpt_forward.12} parent=23 // pred_fallthru
              _
            // Predicated region
            $region29: #{gpt_forward.12} parent=23 // pred_check
              _
            $region30: #{gpt_forward.12} parent=23 // pred_check_branch
              %172 = sbr.rel (0) target = $region32
            $region31: #{gpt_forward.12} parent=23 // pred_region
              %s174 = ssub.s32 16, 1
              loop: start=0, step=1, limit=1
              $region33: #{gpt_forward.12} parent=31 // loop_pre_header
                _
              $region34: #{gpt_forward.12} parent=31 // loop_header
                %s176 = sphi 0, %s180
                %p177 = scmp.ge.s32.totalorder %s176, 1
                %s181 = sphi %s166, %s166
                %s182 = sphi %s162, %s162
              $region35: #{gpt_forward.12} parent=31 // loop_header_branch
                %179 = sbr.rel (%p177) target = $region39
              $region36: #{gpt_forward.12} parent=31 // loop_body
                %v183 = vld [vmem:[%s181] sm:%s174]
                %184 = vst [vmem:[%s182] sm:%s174] %v183
                %v185 = vld [vmem:[%s181 + $0xc] sm:%s174]
                %186 = vst [vmem:[%s182 + $0x4] sm:%s174] %v185
                %v187 = vld [vmem:[%s181 + $0x18] sm:%s174]
                %188 = vst [vmem:[%s182 + $0x8] sm:%s174] %v187
                %v189 = vld [vmem:[%s181 + $0x24] sm:%s174]
                %190 = vst [vmem:[%s182 + $0xc] sm:%s174] %v189
              $region37: #{gpt_forward.12} parent=31 // loop_footer
                %s180 = sadd.s32 1, %s176
              $region38: #{gpt_forward.12} parent=31 // loop_footer_branch
                %175 = sbr.rel target = $region34
              $region39: #{gpt_forward.12} parent=31 // loop_exit
                _
            $region32: #{gpt_forward.12} parent=23 // pred_fallthru
              _
          $region24: #{gpt_forward.12} parent=19 // pred_fallthru
            _
          %219 = vnop
        $region20: #{gpt_forward.12} parent=15 // pred_fallthru
          _
        // Predicated region
        $region58: #{gpt_forward.12} parent=15 // pred_check
          %p220 = pneg %p73
        $region59: #{gpt_forward.12} parent=15 // pred_check_branch
          %222 = sbr.rel (%p220) target = $region61
        $region60: #{gpt_forward.12} parent=15 // pred_region
          %s223 = sand.u32 %s63, 1
          %s224 = sand.u32 %s63, 1
          %s225 = smul.addr %s224, 16
          %s226 = scalar_lea.vmem [#allocation3], %s225
          %s227 = sadd.s32 %s17, 1
          %s228 = smul.addr %s16, 12
          %s229 = sadd.s32 %s227, %s228
          %s230 = smul.addr %s229, 4
          %s231 = scalar_lea.vmem %s1, %s230
          // Predicated region
          $region62: #{gpt_forward.12} parent=60 // pred_check
            _
          $region63: #{gpt_forward.12} parent=60 // pred_check_branch
            %233 = sbr.rel (0) target = $region65
          $region64: #{gpt_forward.12} parent=60 // pred_region
            // Predicated region
            $region66: #{gpt_forward.12} parent=64 // pred_check
              _
            $region67: #{gpt_forward.12} parent=64 // pred_check_branch
              %235 = sbr.rel target = $region69
            $region68: #{gpt_forward.12} parent=64 // pred_region
              // Predicated region
              $region81: #{gpt_forward.12} parent=68 // pred_check
                _
              $region82: #{gpt_forward.12} parent=68 // pred_check_branch
                %257 = sbr.rel (0) target = $region84
              $region83: #{gpt_forward.12} parent=68 // pred_region
                loop: start=0, step=1, limit=1
                $region85: #{gpt_forward.12} parent=83 // loop_pre_header
                  _
                $region86: #{gpt_forward.12} parent=83 // loop_header
                  %s259 = sphi 0, %s263
                  %p260 = scmp.ge.s32.totalorder %s259, 1
                  %s264 = sphi %s231, %s231
                  %s265 = sphi %s226, %s226
                $region87: #{gpt_forward.12} parent=83 // loop_header_branch
                  %262 = sbr.rel (%p260) target = $region91
                $region88: #{gpt_forward.12} parent=83 // loop_body
                  _
                $region89: #{gpt_forward.12} parent=83 // loop_footer
                  %s263 = sadd.s32 1, %s259
                $region90: #{gpt_forward.12} parent=83 // loop_footer_branch
                  %258 = sbr.rel target = $region86
                $region91: #{gpt_forward.12} parent=83 // loop_exit
                  _
                %s267 = ssub.s32 16, 1
                loop: start=0, step=1, limit=1
                $region92: #{gpt_forward.12} parent=83 // loop_pre_header
                  _
                $region93: #{gpt_forward.12} parent=83 // loop_header
                  %s269 = sphi 0, %s273
                  %p270 = scmp.ge.s32.totalorder %s269, 1
                  %s274 = sphi %s231, %s231
                  %s275 = sphi %s226, %s226
                $region94: #{gpt_forward.12} parent=83 // loop_header_branch
                  %272 = sbr.rel (%p270) target = $region98
                $region95: #{gpt_forward.12} parent=83 // loop_body
                  %v276 = vld [vmem:[%s274] sm:%s267]
                  %277 = vst [vmem:[%s275] sm:%s267] %v276
                  %v278 = vld [vmem:[%s274 + $0xc] sm:%s267]
                  %279 = vst [vmem:[%s275 + $0x4] sm:%s267] %v278
                  %v280 = vld [vmem:[%s274 + $0x18] sm:%s267]
                  %281 = vst [vmem:[%s275 + $0x8] sm:%s267] %v280
                  %v282 = vld [vmem:[%s274 + $0x24] sm:%s267]
                  %283 = vst [vmem:[%s275 + $0xc] sm:%s267] %v282
                $region96: #{gpt_forward.12} parent=83 // loop_footer
                  %s273 = sadd.s32 1, %s269
                $region97: #{gpt_forward.12} parent=83 // loop_footer_branch
                  %268 = sbr.rel target = $region93
                $region98: #{gpt_forward.12} parent=83 // loop_exit
                  _
              $region84: #{gpt_forward.12} parent=68 // pred_fallthru
                _
            $region69: #{gpt_forward.12} parent=64 // pred_fallthru
              _
            // Predicated region
            $region70: #{gpt_forward.12} parent=64 // pred_check
              _
            $region71: #{gpt_forward.12} parent=64 // pred_check_branch
              %237 = sbr.rel (0) target = $region73
            $region72: #{gpt_forward.12} parent=64 // pred_region
              %s239 = ssub.s32 16, 1
              loop: start=0, step=1, limit=1
              $region74: #{gpt_forward.12} parent=72 // loop_pre_header
                _
              $region75: #{gpt_forward.12} parent=72 // loop_header
                %s241 = sphi 0, %s245
                %p242 = scmp.ge.s32.totalorder %s241, 1
                %s246 = sphi %s231, %s231
                %s247 = sphi %s226, %s226
              $region76: #{gpt_forward.12} parent=72 // loop_header_branch
                %244 = sbr.rel (%p242) target = $region80
              $region77: #{gpt_forward.12} parent=72 // loop_body
                %v248 = vld [vmem:[%s246] sm:%s239]
                %249 = vst [vmem:[%s247] sm:%s239] %v248
                %v250 = vld [vmem:[%s246 + $0xc] sm:%s239]
                %251 = vst [vmem:[%s247 + $0x4] sm:%s239] %v250
                %v252 = vld [vmem:[%s246 + $0x18] sm:%s239]
                %253 = vst [vmem:[%s247 + $0x8] sm:%s239] %v252
                %v254 = vld [vmem:[%s246 + $0x24] sm:%s239]
                %255 = vst [vmem:[%s247 + $0xc] sm:%s239] %v254
              $region78: #{gpt_forward.12} parent=72 // loop_footer
                %s245 = sadd.s32 1, %s241
              $region79: #{gpt_forward.12} parent=72 // loop_footer_branch
                %240 = sbr.rel target = $region75
              $region80: #{gpt_forward.12} parent=72 // loop_exit
                _
            $region73: #{gpt_forward.12} parent=64 // pred_fallthru
              _
          $region65: #{gpt_forward.12} parent=60 // pred_fallthru
            _
          %284 = vnop
        $region61: #{gpt_forward.12} parent=15 // pred_fallthru
          _
        // Predicated region
        $region99: #{gpt_forward.12} parent=15 // pred_check
          %p285 = pneg %p103
        $region100: #{gpt_forward.12} parent=15 // pred_check_branch
          %287 = sbr.rel (%p285) target = $region102
        $region101: #{gpt_forward.12} parent=15 // pred_region
          %s288 = sand.u32 %s93, 1
          %s289 = sand.u32 %s93, 1
          %s290 = smul.addr %s289, 16
          %s291 = scalar_lea.vmem [#allocation4], %s290
          %s292 = sadd.s32 %s17, 2
          %s293 = smul.addr %s16, 12
          %s294 = sadd.s32 %s292, %s293
          %s295 = smul.addr %s294, 4
          %s296 = scalar_lea.vmem %s2, %s295
          // Predicated region
          $region103: #{gpt_forward.12} parent=101 // pred_check
            _
          $region104: #{gpt_forward.12} parent=101 // pred_check_branch
            %298 = sbr.rel (0) target = $region106
          $region105: #{gpt_forward.12} parent=101 // pred_region
            // Predicated region
            $region107: #{gpt_forward.12} parent=105 // pred_check
              _
            $region108: #{gpt_forward.12} parent=105 // pred_check_branch
              %300 = sbr.rel target = $region110
            $region109: #{gpt_forward.12} parent=105 // pred_region
              // Predicated region
              $region122: #{gpt_forward.12} parent=109 // pred_check
                _
              $region123: #{gpt_forward.12} parent=109 // pred_check_branch
                %322 = sbr.rel (0) target = $region125
              $region124: #{gpt_forward.12} parent=109 // pred_region
                loop: start=0, step=1, limit=1
                $region126: #{gpt_forward.12} parent=124 // loop_pre_header
                  _
                $region127: #{gpt_forward.12} parent=124 // loop_header
                  %s324 = sphi 0, %s328
                  %p325 = scmp.ge.s32.totalorder %s324, 1
                  %s329 = sphi %s296, %s296
                  %s330 = sphi %s291, %s291
                $region128: #{gpt_forward.12} parent=124 // loop_header_branch
                  %327 = sbr.rel (%p325) target = $region132
                $region129: #{gpt_forward.12} parent=124 // loop_body
                  _
                $region130: #{gpt_forward.12} parent=124 // loop_footer
                  %s328 = sadd.s32 1, %s324
                $region131: #{gpt_forward.12} parent=124 // loop_footer_branch
                  %323 = sbr.rel target = $region127
                $region132: #{gpt_forward.12} parent=124 // loop_exit
                  _
                %s332 = ssub.s32 16, 1
                loop: start=0, step=1, limit=1
                $region133: #{gpt_forward.12} parent=124 // loop_pre_header
                  _
                $region134: #{gpt_forward.12} parent=124 // loop_header
                  %s334 = sphi 0, %s338
                  %p335 = scmp.ge.s32.totalorder %s334, 1
                  %s339 = sphi %s296, %s296
                  %s340 = sphi %s291, %s291
                $region135: #{gpt_forward.12} parent=124 // loop_header_branch
                  %337 = sbr.rel (%p335) target = $region139
                $region136: #{gpt_forward.12} parent=124 // loop_body
                  %v341 = vld [vmem:[%s339] sm:%s332]
                  %342 = vst [vmem:[%s340] sm:%s332] %v341
                  %v343 = vld [vmem:[%s339 + $0xc] sm:%s332]
                  %344 = vst [vmem:[%s340 + $0x4] sm:%s332] %v343
                  %v345 = vld [vmem:[%s339 + $0x18] sm:%s332]
                  %346 = vst [vmem:[%s340 + $0x8] sm:%s332] %v345
                  %v347 = vld [vmem:[%s339 + $0x24] sm:%s332]
                  %348 = vst [vmem:[%s340 + $0xc] sm:%s332] %v347
                $region137: #{gpt_forward.12} parent=124 // loop_footer
                  %s338 = sadd.s32 1, %s334
                $region138: #{gpt_forward.12} parent=124 // loop_footer_branch
                  %333 = sbr.rel target = $region134
                $region139: #{gpt_forward.12} parent=124 // loop_exit
                  _
              $region125: #{gpt_forward.12} parent=109 // pred_fallthru
                _
            $region110: #{gpt_forward.12} parent=105 // pred_fallthru
              _
            // Predicated region
            $region111: #{gpt_forward.12} parent=105 // pred_check
              _
            $region112: #{gpt_forward.12} parent=105 // pred_check_branch
              %302 = sbr.rel (0) target = $region114
            $region113: #{gpt_forward.12} parent=105 // pred_region
              %s304 = ssub.s32 16, 1
              loop: start=0, step=1, limit=1
              $region115: #{gpt_forward.12} parent=113 // loop_pre_header
                _
              $region116: #{gpt_forward.12} parent=113 // loop_header
                %s306 = sphi 0, %s310
                %p307 = scmp.ge.s32.totalorder %s306, 1
                %s311 = sphi %s296, %s296
                %s312 = sphi %s291, %s291
              $region117: #{gpt_forward.12} parent=113 // loop_header_branch
                %309 = sbr.rel (%p307) target = $region121
              $region118: #{gpt_forward.12} parent=113 // loop_body
                %v313 = vld [vmem:[%s311] sm:%s304]
                %314 = vst [vmem:[%s312] sm:%s304] %v313
                %v315 = vld [vmem:[%s311 + $0xc] sm:%s304]
                %316 = vst [vmem:[%s312 + $0x4] sm:%s304] %v315
                %v317 = vld [vmem:[%s311 + $0x18] sm:%s304]
                %318 = vst [vmem:[%s312 + $0x8] sm:%s304] %v317
                %v319 = vld [vmem:[%s311 + $0x24] sm:%s304]
                %320 = vst [vmem:[%s312 + $0xc] sm:%s304] %v319
              $region119: #{gpt_forward.12} parent=113 // loop_footer
                %s310 = sadd.s32 1, %s306
              $region120: #{gpt_forward.12} parent=113 // loop_footer_branch
                %305 = sbr.rel target = $region116
              $region121: #{gpt_forward.12} parent=113 // loop_exit
                _
            $region114: #{gpt_forward.12} parent=105 // pred_fallthru
              _
          $region106: #{gpt_forward.12} parent=101 // pred_fallthru
            _
          %349 = vnop
        $region102: #{gpt_forward.12} parent=15 // pred_fallthru
          _
      $region16: #{gpt_forward.12} parent=5 // pred_fallthru
        _
      %p350 = scmp.le.s32.totalorder 1, %s9
      %p351 = scmp.lt.s32.totalorder %s9, 3
      %p352 = pnand %p350, %p351
      %p353 = pneg %p352
      // Predicated region
      $region140: #{gpt_forward.12} parent=5 // pred_check
        _
      $region141: #{gpt_forward.12} parent=5 // pred_check_branch
        %355 = sbr.rel (%p352) target = $region143
      $region142: #{gpt_forward.12} parent=5 // pred_region
        %s356 = ssub.s32 %s9, 1
        %s357 = sand.u32 %s36, 1
        %s358 = sand.u32 %s36, 1
        %s359 = smul.addr %s358, 16
        %s360 = scalar_lea.vmem [#allocation2], %s359
        // Predicated region
        $region144: #{gpt_forward.12} parent=142 // pred_check
          %p361 = pneg %p49
        $region145: #{gpt_forward.12} parent=142 // pred_check_branch
          %363 = sbr.rel (%p361) target = $region147
        $region146: #{gpt_forward.12} parent=142 // pred_region
          _
        $region147: #{gpt_forward.12} parent=142 // pred_fallthru
          _
        %s364 = sand.u32 %s66, 1
        %s365 = sand.u32 %s66, 1
        %s366 = smul.addr %s365, 16
        %s367 = scalar_lea.vmem [#allocation3], %s366
        // Predicated region
        $region148: #{gpt_forward.12} parent=142 // pred_check
          %p368 = pneg %p79
        $region149: #{gpt_forward.12} parent=142 // pred_check_branch
          %370 = sbr.rel (%p368) target = $region151
        $region150: #{gpt_forward.12} parent=142 // pred_region
          _
        $region151: #{gpt_forward.12} parent=142 // pred_fallthru
          _
        %s371 = sand.u32 %s96, 1
        %s372 = sand.u32 %s96, 1
        %s373 = smul.addr %s372, 16
        %s374 = scalar_lea.vmem [#allocation4], %s373
        // Predicated region
        $region152: #{gpt_forward.12} parent=142 // pred_check
          %p375 = pneg %p109
        $region153: #{gpt_forward.12} parent=142 // pred_check_branch
          %377 = sbr.rel (%p375) target = $region155
        $region154: #{gpt_forward.12} parent=142 // pred_region
          _
        $region155: #{gpt_forward.12} parent=142 // pred_fallthru
          _
        %s378 = sand.u32 %s36, 1
        %s379 = sand.u32 %s36, 1
        %s380 = smul.addr %s379, 16
        %s381 = scalar_lea.vmem [#allocation2], %s380
        %p382 = pneg %p49
        %p383 = pneg %p46
        %s384 = sand.u32 %s66, 1
        %s385 = sand.u32 %s66, 1
        %s386 = smul.addr %s385, 16
        %s387 = scalar_lea.vmem [#allocation3], %s386
        %p388 = pneg %p79
        %p389 = pneg %p76
        %s390 = sand.u32 %s96, 1
        %s391 = sand.u32 %s96, 1
        %s392 = smul.addr %s391, 16
        %s393 = scalar_lea.vmem [#allocation4], %s392
        %p394 = pneg %p109
        %p395 = pneg %p106
        %p396 = pneg %p137
        %p397 = pneg %p134
        %p398 = scmp.lt.s32.totalorder %s18, 1
        %s399 = scalar_select %p398, %s18, 1
        %p400 = scmp.lt.s32.totalorder %s19, 0
        %s401 = scalar_select %p400, %s19, 0
        %s402 = smul.addr %s399, 4
        %s403 = sadd.s32 %s401, %s402
        %s404 = smul.addr %s403, 4
        %s405 = scalar_lea.vmem %s3, %s404
        %s406 = sadd.s32 %s19, 1
        %s407 = sadd.s32 %s19, 2
        %p408 = scmp.lt.s32.totalorder %s18, 1
        %s409 = scalar_select %p408, %s18, 1
        %p410 = scmp.lt.s32.totalorder %s19, 0
        %s411 = scalar_select %p410, %s19, 0
        %s412 = smul.addr %s409, 4
        %s413 = sadd.s32 %s411, %s412
        %s414 = smul.addr %s413, 4
        %s415 = scalar_lea.vmem %s3, %s414
        %v417 = vld [vmem:[%s360] sm:$0xf]
        %v418 = vld [vmem:[%s360 + $0x4] sm:$0xf]
        %v419 = vld [vmem:[%s360 + $0x8] sm:$0xf]
        %v420 = vld [vmem:[%s360 + $0xc] sm:$0xf]
        %v421 = vld [vmem:[%s367] sm:$0xf]
        %v422 = vld [vmem:[%s367 + $0x4] sm:$0xf]
        %v423 = vld [vmem:[%s367 + $0x8] sm:$0xf]
        %v424 = vld [vmem:[%s367 + $0xc] sm:$0xf]
        %v425 = vld [vmem:[%s374] sm:$0xf]
        %v426 = vld [vmem:[%s374 + $0x4] sm:$0xf]
        %v427 = vld [vmem:[%s374 + $0x8] sm:$0xf]
        %v428 = vld [vmem:[%s374 + $0xc] sm:$0xf]
        %v429 = vlaneseq
        %v430 = vshrl.u32 %v429, 7
        %v431 = vadd.s32 %v430, 8
        %v432 = vadd.s32 %v430, 16
        %v433 = vadd.s32 %v430, 24
        %v434 = vlaneseq
        %v435 = vand.u32 %v434, 127
        %vm436 = vcmp.le.s32.totalorder %v435, %v430
        %vm437 = vcmp.le.s32.totalorder %v435, %v431
        %vm438 = vcmp.le.s32.totalorder %v435, %v432
        %vm439 = vcmp.le.s32.totalorder %v435, %v433
        %v444 = vunpack.c.l.b16 %v417
        %v445 = vunpack.c.l.b16 %v418
        %v446 = vunpack.c.l.b16 %v419
        %v447 = vunpack.c.l.b16 %v420
        %v448 = vpack.c.b16 %v445, %v444
        %v449 = vpack.c.b16 %v447, %v446
        %v454 = vunpack.c.l.b16 %v421
        %v455 = vunpack.c.l.b16 %v422
        %v456 = vunpack.c.l.b16 %v423
        %v457 = vunpack.c.l.b16 %v424
        %v458 = vpack.c.b16 %v455, %v454
        %v459 = vpack.c.b16 %v457, %v456
        %vm460 = vcmask 261120
        %v462 = vsel %vm460, %v448, 0
        %v465 = vsel %vm460, %v449, 0
        %v468 = vsel %vm460, %v458, 0
        %v471 = vsel %vm460, %v459, 0
        %473 = vmatpush.bf16.xpose.msra.mxu0 0
        %474 = vmatpush.bf16.xpose.msra.mxu0 0
        %475 = vmatpush.bf16.xpose.msra.mxu0 0
        %476 = vmatpush.bf16.xpose.msra.mxu0 0
        %477 = vmatpush.bf16.xpose.msra.mxu0 0
        %478 = vmatpush.bf16.xpose.msra.mxu0 0
        %479 = vmatpush.bf16.xpose.msra.mxu0 %v471
        %480 = vmatpush.bf16.xpose.msra.mxu0 %v468
        %481 = vmatmul.bf16.gmra.mxu0 %v462
        %v482 = vpop.f32.mrf.mxu0
        %v483 = vadd.f32 0.0, %v482
        %v484 = vpop.f32.mrf.mxu0
        %v485 = vadd.f32 0.0, %v484
        %486 = vmatmul.bf16.gmra.mxu0 %v465
        %v487 = vpop.f32.mrf.mxu0
        %v488 = vadd.f32 0.0, %v487
        %v489 = vpop.f32.mrf.mxu0
        %v490 = vadd.f32 0.0, %v489
        %491 = vdwg.mxu0
        %v492 = vmul.f32 %v483, 0.17677669
        %v493 = vmul.f32 %v485, 0.17677669
        %v494 = vmul.f32 %v488, 0.17677669
        %v495 = vmul.f32 %v490, 0.17677669
        %v496 = vsel %vm436, %v492, -inf
        %v497 = vsel %vm437, %v493, -inf
        %v498 = vsel %vm438, %v494, -inf
        %v499 = vsel %vm439, %v495, -inf
        %v500 = vsel %vm460, %v496, -inf
        %501 = vmax.xlane.f32.xlu0 %v500
        %v502 = vpop.xlane.xlu0 %501
        %v503 = vsel %vm460, %v497, -inf
        %504 = vmax.xlane.f32.xlu0 %v503
        %v505 = vpop.xlane.xlu0 %504
        %v506 = vsel %vm460, %v498, -inf
        %507 = vmax.xlane.f32.xlu0 %v506
        %v508 = vpop.xlane.xlu0 %507
        %v509 = vsel %vm460, %v499, -inf
        %510 = vmax.xlane.f32.xlu0 %v509
        %v511 = vpop.xlane.xlu0 %510
        %v512 = vsub.f32 %v496, %v502
        %v513 = vsub.f32 %v497, %v505
        %v514 = vsub.f32 %v498, %v508
        %v515 = vsub.f32 %v499, %v511
        %v516 = vmul.f32 %v512, 1.442695
        %v517 = vpow.pop %v516
        %v518 = vmul.f32 %v513, 1.442695
        %v519 = vpow.pop %v518
        %v520 = vmul.f32 %v514, 1.442695
        %v521 = vpow.pop %v520
        %v522 = vmul.f32 %v515, 1.442695
        %v523 = vpow.pop %v522
        %v524 = vsel %vm460, %v517, 0.0
        %525 = vadd.xlane.f32.xlu0 %v524
        %v526 = vpop.xlane.xlu0 %525
        %v527 = vsel %vm460, %v519, 0.0
        %528 = vadd.xlane.f32.xlu0 %v527
        %v529 = vpop.xlane.xlu0 %528
        %v530 = vsel %vm460, %v521, 0.0
        %531 = vadd.xlane.f32.xlu0 %v530
        %v532 = vpop.xlane.xlu0 %531
        %v533 = vsel %vm460, %v523, 0.0
        %534 = vadd.xlane.f32.xlu0 %v533
        %v535 = vpop.xlane.xlu0 %534
        %v536 = vrcp.pop %v526
        %v537 = vrcp.pop %v529
        %v538 = vrcp.pop %v532
        %v539 = vrcp.pop %v535
        %v540 = vmul.f32 %v517, %v536
        %v541 = vmul.f32 %v519, %v537
        %v542 = vmul.f32 %v521, %v538
        %v543 = vmul.f32 %v523, %v539
        %v544 = vpack.c.bf16 %v541, %v540
        %v545 = vpack.c.bf16 %v543, %v542
        %v550 = vunpack.c.l.b16 %v425
        %v551 = vunpack.c.l.b16 %v426
        %v552 = vunpack.c.l.b16 %v427
        %v553 = vunpack.c.l.b16 %v428
        %v554 = vpack.c.b16 %v551, %v550
        %v555 = vpack.c.b16 %v553, %v552
        %v559 = vsel %vm460, %v544, 0
        %v562 = vsel %vm460, %v545, 0
        %564 = vmatpush.bf16.msra.mxu0 0
        %565 = vmatpush.bf16.msra.mxu0 0
        %566 = vmatpush.bf16.msra.mxu0 0
        %567 = vmatpush.bf16.msra.mxu0 0
        %568 = vmatpush.bf16.msra.mxu0 0
        %569 = vmatpush.bf16.msra.mxu0 0
        %570 = vmatpush.bf16.msra.mxu0 %v555
        %571 = vmatpush.bf16.msra.mxu0 %v554
        %572 = vmatmul.bf16.gmra.mxu0 %v559
        %v573 = vpop.f32.mrf.mxu0
        %v574 = vadd.f32 0.0, %v573
        %v575 = vpop.f32.mrf.mxu0
        %v576 = vadd.f32 0.0, %v575
        %577 = vmatmul.bf16.gmra.mxu0 %v562
        %v578 = vpop.f32.mrf.mxu0
        %v579 = vadd.f32 0.0, %v578
        %v580 = vpop.f32.mrf.mxu0
        %v581 = vadd.f32 0.0, %v580
        %582 = vdwg.mxu0
        %583 = vrot.lane.b32.xlu0 %v448, 96
        %v584 = vpop.permute.xlu0 %583
        %585 = vrot.lane.b32.xlu0 %v449, 96
        %v586 = vpop.permute.xlu0 %585
        %587 = vrot.lane.b32.xlu0 %v458, 96
        %v588 = vpop.permute.xlu0 %587
        %589 = vrot.lane.b32.xlu0 %v459, 96
        %v590 = vpop.permute.xlu0 %589
        %v592 = vsel %vm460, %v584, 0
        %v595 = vsel %vm460, %v586, 0
        %v598 = vsel %vm460, %v588, 0
        %v601 = vsel %vm460, %v590, 0
        %603 = vmatpush.bf16.xpose.msra.mxu0 0
        %604 = vmatpush.bf16.xpose.msra.mxu0 0
        %605 = vmatpush.bf16.xpose.msra.mxu0 0
        %606 = vmatpush.bf16.xpose.msra.mxu0 0
        %607 = vmatpush.bf16.xpose.msra.mxu0 0
        %608 = vmatpush.bf16.xpose.msra.mxu0 0
        %609 = vmatpush.bf16.xpose.msra.mxu0 %v601
        %610 = vmatpush.bf16.xpose.msra.mxu0 %v598
        %611 = vmatmul.bf16.gmra.mxu0 %v592
        %v612 = vpop.f32.mrf.mxu0
        %v613 = vadd.f32 0.0, %v612
        %v614 = vpop.f32.mrf.mxu0
        %v615 = vadd.f32 0.0, %v614
        %616 = vmatmul.bf16.gmra.mxu0 %v595
        %v617 = vpop.f32.mrf.mxu0
        %v618 = vadd.f32 0.0, %v617
        %v619 = vpop.f32.mrf.mxu0
        %v620 = vadd.f32 0.0, %v619
        %621 = vdwg.mxu0
        %v622 = vmul.f32 %v613, 0.17677669
        %v623 = vmul.f32 %v615, 0.17677669
        %v624 = vmul.f32 %v618, 0.17677669
        %v625 = vmul.f32 %v620, 0.17677669
        %v626 = vsel %vm436, %v622, -inf
        %v627 = vsel %vm437, %v623, -inf
        %v628 = vsel %vm438, %v624, -inf
        %v629 = vsel %vm439, %v625, -inf
        %v630 = vsel %vm460, %v626, -inf
        %631 = vmax.xlane.f32.xlu0 %v630
        %v632 = vpop.xlane.xlu0 %631
        %v633 = vsel %vm460, %v627, -inf
        %634 = vmax.xlane.f32.xlu0 %v633
        %v635 = vpop.xlane.xlu0 %634
        %v636 = vsel %vm460, %v628, -inf
        %637 = vmax.xlane.f32.xlu0 %v636
        %v638 = vpop.xlane.xlu0 %637
        %v639 = vsel %vm460, %v629, -inf
        %640 = vmax.xlane.f32.xlu0 %v639
        %v641 = vpop.xlane.xlu0 %640
        %v642 = vsub.f32 %v626, %v632
        %v643 = vsub.f32 %v627, %v635
        %v644 = vsub.f32 %v628, %v638
        %v645 = vsub.f32 %v629, %v641
        %v646 = vmul.f32 %v642, 1.442695
        %v647 = vpow.pop %v646
        %v648 = vmul.f32 %v643, 1.442695
        %v649 = vpow.pop %v648
        %v650 = vmul.f32 %v644, 1.442695
        %v651 = vpow.pop %v650
        %v652 = vmul.f32 %v645, 1.442695
        %v653 = vpow.pop %v652
        %v654 = vsel %vm460, %v647, 0.0
        %655 = vadd.xlane.f32.xlu0 %v654
        %v656 = vpop.xlane.xlu0 %655
        %v657 = vsel %vm460, %v649, 0.0
        %658 = vadd.xlane.f32.xlu0 %v657
        %v659 = vpop.xlane.xlu0 %658
        %v660 = vsel %vm460, %v651, 0.0
        %661 = vadd.xlane.f32.xlu0 %v660
        %v662 = vpop.xlane.xlu0 %661
        %v663 = vsel %vm460, %v653, 0.0
        %664 = vadd.xlane.f32.xlu0 %v663
        %v665 = vpop.xlane.xlu0 %664
        %v666 = vrcp.pop %v656
        %v667 = vrcp.pop %v659
        %v668 = vrcp.pop %v662
        %v669 = vrcp.pop %v665
        %v670 = vmul.f32 %v647, %v666
        %v671 = vmul.f32 %v649, %v667
        %v672 = vmul.f32 %v651, %v668
        %v673 = vmul.f32 %v653, %v669
        %v674 = vpack.c.bf16 %v671, %v670
        %v675 = vpack.c.bf16 %v673, %v672
        %676 = vrot.lane.b32.xlu0 %v554, 96
        %v677 = vpop.permute.xlu0 %676
        %678 = vrot.lane.b32.xlu0 %v555, 96
        %v679 = vpop.permute.xlu0 %678
        %v683 = vsel %vm460, %v674, 0
        %v686 = vsel %vm460, %v675, 0
        %688 = vmatpush.bf16.msra.mxu0 0
        %689 = vmatpush.bf16.msra.mxu0 0
        %690 = vmatpush.bf16.msra.mxu0 0
        %691 = vmatpush.bf16.msra.mxu0 0
        %692 = vmatpush.bf16.msra.mxu0 0
        %693 = vmatpush.bf16.msra.mxu0 0
        %694 = vmatpush.bf16.msra.mxu0 %v679
        %695 = vmatpush.bf16.msra.mxu0 %v677
        %696 = vmatmul.bf16.gmra.mxu0 %v683
        %v697 = vpop.f32.mrf.mxu0
        %v698 = vadd.f32 0.0, %v697
        %v699 = vpop.f32.mrf.mxu0
        %v700 = vadd.f32 0.0, %v699
        %701 = vmatmul.bf16.gmra.mxu0 %v686
        %v702 = vpop.f32.mrf.mxu0
        %v703 = vadd.f32 0.0, %v702
        %v704 = vpop.f32.mrf.mxu0
        %v705 = vadd.f32 0.0, %v704
        %706 = vdwg.mxu0
        %707 = vrot.lane.b32.xlu0 %v448, 64
        %v708 = vpop.permute.xlu0 %707
        %709 = vrot.lane.b32.xlu0 %v449, 64
        %v710 = vpop.permute.xlu0 %709
        %711 = vrot.lane.b32.xlu0 %v458, 64
        %v712 = vpop.permute.xlu0 %711
        %713 = vrot.lane.b32.xlu0 %v459, 64
        %v714 = vpop.permute.xlu0 %713
        %v716 = vsel %vm460, %v708, 0
        %v719 = vsel %vm460, %v710, 0
        %v722 = vsel %vm460, %v712, 0
        %v725 = vsel %vm460, %v714, 0
        %727 = vmatpush.bf16.xpose.msra.mxu0 0
        %728 = vmatpush.bf16.xpose.msra.mxu0 0
        %729 = vmatpush.bf16.xpose.msra.mxu0 0
        %730 = vmatpush.bf16.xpose.msra.mxu0 0
        %731 = vmatpush.bf16.xpose.msra.mxu0 0
        %732 = vmatpush.bf16.xpose.msra.mxu0 0
        %733 = vmatpush.bf16.xpose.msra.mxu0 %v725
        %734 = vmatpush.bf16.xpose.msra.mxu0 %v722
        %735 = vmatmul.bf16.gmra.mxu0 %v716
        %v736 = vpop.f32.mrf.mxu0
        %v737 = vadd.f32 0.0, %v736
        %v738 = vpop.f32.mrf.mxu0
        %v739 = vadd.f32 0.0, %v738
        %740 = vmatmul.bf16.gmra.mxu0 %v719
        %v741 = vpop.f32.mrf.mxu0
        %v742 = vadd.f32 0.0, %v741
        %v743 = vpop.f32.mrf.mxu0
        %v744 = vadd.f32 0.0, %v743
        %745 = vdwg.mxu0
        %v746 = vmul.f32 %v737, 0.17677669
        %v747 = vmul.f32 %v739, 0.17677669
        %v748 = vmul.f32 %v742, 0.17677669
        %v749 = vmul.f32 %v744, 0.17677669
        %v750 = vsel %vm436, %v746, -inf
        %v751 = vsel %vm437, %v747, -inf
        %v752 = vsel %vm438, %v748, -inf
        %v753 = vsel %vm439, %v749, -inf
        %v754 = vsel %vm460, %v750, -inf
        %755 = vmax.xlane.f32.xlu0 %v754
        %v756 = vpop.xlane.xlu0 %755
        %v757 = vsel %vm460, %v751, -inf
        %758 = vmax.xlane.f32.xlu0 %v757
        %v759 = vpop.xlane.xlu0 %758
        %v760 = vsel %vm460, %v752, -inf
        %761 = vmax.xlane.f32.xlu0 %v760
        %v762 = vpop.xlane.xlu0 %761
        %v763 = vsel %vm460, %v753, -inf
        %764 = vmax.xlane.f32.xlu0 %v763
        %v765 = vpop.xlane.xlu0 %764
        %v766 = vsub.f32 %v750, %v756
        %v767 = vsub.f32 %v751, %v759
        %v768 = vsub.f32 %v752, %v762
        %v769 = vsub.f32 %v753, %v765
        %v770 = vmul.f32 %v766, 1.442695
        %v771 = vpow.pop %v770
        %v772 = vmul.f32 %v767, 1.442695
        %v773 = vpow.pop %v772
        %v774 = vmul.f32 %v768, 1.442695
        %v775 = vpow.pop %v774
        %v776 = vmul.f32 %v769, 1.442695
        %v777 = vpow.pop %v776
        %v778 = vsel %vm460, %v771, 0.0
        %779 = vadd.xlane.f32.xlu0 %v778
        %v780 = vpop.xlane.xlu0 %779
        %v781 = vsel %vm460, %v773, 0.0
        %782 = vadd.xlane.f32.xlu0 %v781
        %v783 = vpop.xlane.xlu0 %782
        %v784 = vsel %vm460, %v775, 0.0
        %785 = vadd.xlane.f32.xlu0 %v784
        %v786 = vpop.xlane.xlu0 %785
        %v787 = vsel %vm460, %v777, 0.0
        %788 = vadd.xlane.f32.xlu0 %v787
        %v789 = vpop.xlane.xlu0 %788
        %v790 = vrcp.pop %v780
        %v791 = vrcp.pop %v783
        %v792 = vrcp.pop %v786
        %v793 = vrcp.pop %v789
        %v794 = vmul.f32 %v771, %v790
        %v795 = vmul.f32 %v773, %v791
        %v796 = vmul.f32 %v775, %v792
        %v797 = vmul.f32 %v777, %v793
        %v798 = vpack.c.bf16 %v795, %v794
        %v799 = vpack.c.bf16 %v797, %v796
        %800 = vrot.lane.b32.xlu0 %v554, 64
        %v801 = vpop.permute.xlu0 %800
        %802 = vrot.lane.b32.xlu0 %v555, 64
        %v803 = vpop.permute.xlu0 %802
        %v807 = vsel %vm460, %v798, 0
        %v810 = vsel %vm460, %v799, 0
        %812 = vmatpush.bf16.msra.mxu0 0
        %813 = vmatpush.bf16.msra.mxu0 0
        %814 = vmatpush.bf16.msra.mxu0 0
        %815 = vmatpush.bf16.msra.mxu0 0
        %816 = vmatpush.bf16.msra.mxu0 0
        %817 = vmatpush.bf16.msra.mxu0 0
        %818 = vmatpush.bf16.msra.mxu0 %v803
        %819 = vmatpush.bf16.msra.mxu0 %v801
        %820 = vmatmul.bf16.gmra.mxu0 %v807
        %v821 = vpop.f32.mrf.mxu0
        %v822 = vadd.f32 0.0, %v821
        %v823 = vpop.f32.mrf.mxu0
        %v824 = vadd.f32 0.0, %v823
        %825 = vmatmul.bf16.gmra.mxu0 %v810
        %v826 = vpop.f32.mrf.mxu0
        %v827 = vadd.f32 0.0, %v826
        %v828 = vpop.f32.mrf.mxu0
        %v829 = vadd.f32 0.0, %v828
        %830 = vdwg.mxu0
        %831 = vrot.lane.b32.xlu0 %v448, 32
        %v832 = vpop.permute.xlu0 %831
        %833 = vrot.lane.b32.xlu0 %v449, 32
        %v834 = vpop.permute.xlu0 %833
        %835 = vrot.lane.b32.xlu0 %v458, 32
        %v836 = vpop.permute.xlu0 %835
        %837 = vrot.lane.b32.xlu0 %v459, 32
        %v838 = vpop.permute.xlu0 %837
        %v840 = vsel %vm460, %v832, 0
        %v843 = vsel %vm460, %v834, 0
        %v846 = vsel %vm460, %v836, 0
        %v849 = vsel %vm460, %v838, 0
        %851 = vmatpush.bf16.xpose.msra.mxu0 0
        %852 = vmatpush.bf16.xpose.msra.mxu0 0
        %853 = vmatpush.bf16.xpose.msra.mxu0 0
        %854 = vmatpush.bf16.xpose.msra.mxu0 0
        %855 = vmatpush.bf16.xpose.msra.mxu0 0
        %856 = vmatpush.bf16.xpose.msra.mxu0 0
        %857 = vmatpush.bf16.xpose.msra.mxu0 %v849
        %858 = vmatpush.bf16.xpose.msra.mxu0 %v846
        %859 = vmatmul.bf16.gmra.mxu0 %v840
        %v860 = vpop.f32.mrf.mxu0
        %v861 = vadd.f32 0.0, %v860
        %v862 = vpop.f32.mrf.mxu0
        %v863 = vadd.f32 0.0, %v862
        %864 = vmatmul.bf16.gmra.mxu0 %v843
        %v865 = vpop.f32.mrf.mxu0
        %v866 = vadd.f32 0.0, %v865
        %v867 = vpop.f32.mrf.mxu0
        %v868 = vadd.f32 0.0, %v867
        %869 = vdwg.mxu0
        %v870 = vmul.f32 %v861, 0.17677669
        %v871 = vmul.f32 %v863, 0.17677669
        %v872 = vmul.f32 %v866, 0.17677669
        %v873 = vmul.f32 %v868, 0.17677669
        %v874 = vsel %vm436, %v870, -inf
        %v875 = vsel %vm437, %v871, -inf
        %v876 = vsel %vm438, %v872, -inf
        %v877 = vsel %vm439, %v873, -inf
        %v878 = vsel %vm460, %v874, -inf
        %879 = vmax.xlane.f32.xlu0 %v878
        %v880 = vpop.xlane.xlu0 %879
        %v881 = vsel %vm460, %v875, -inf
        %882 = vmax.xlane.f32.xlu0 %v881
        %v883 = vpop.xlane.xlu0 %882
        %v884 = vsel %vm460, %v876, -inf
        %885 = vmax.xlane.f32.xlu0 %v884
        %v886 = vpop.xlane.xlu0 %885
        %v887 = vsel %vm460, %v877, -inf
        %888 = vmax.xlane.f32.xlu0 %v887
        %v889 = vpop.xlane.xlu0 %888
        %v890 = vsub.f32 %v874, %v880
        %v891 = vsub.f32 %v875, %v883
        %v892 = vsub.f32 %v876, %v886
        %v893 = vsub.f32 %v877, %v889
        %v894 = vmul.f32 %v890, 1.442695
        %v895 = vpow.pop %v894
        %v896 = vmul.f32 %v891, 1.442695
        %v897 = vpow.pop %v896
        %v898 = vmul.f32 %v892, 1.442695
        %v899 = vpow.pop %v898
        %v900 = vmul.f32 %v893, 1.442695
        %v901 = vpow.pop %v900
        %v902 = vsel %vm460, %v895, 0.0
        %903 = vadd.xlane.f32.xlu0 %v902
        %v904 = vpop.xlane.xlu0 %903
        %v905 = vsel %vm460, %v897, 0.0
        %906 = vadd.xlane.f32.xlu0 %v905
        %v907 = vpop.xlane.xlu0 %906
        %v908 = vsel %vm460, %v899, 0.0
        %909 = vadd.xlane.f32.xlu0 %v908
        %v910 = vpop.xlane.xlu0 %909
        %v911 = vsel %vm460, %v901, 0.0
        %912 = vadd.xlane.f32.xlu0 %v911
        %v913 = vpop.xlane.xlu0 %912
        %v914 = vrcp.pop %v904
        %v915 = vrcp.pop %v907
        %v916 = vrcp.pop %v910
        %v917 = vrcp.pop %v913
        %v918 = vmul.f32 %v895, %v914
        %v919 = vmul.f32 %v897, %v915
        %v920 = vmul.f32 %v899, %v916
        %v921 = vmul.f32 %v901, %v917
        %v922 = vpack.c.bf16 %v919, %v918
        %v923 = vpack.c.bf16 %v921, %v920
        %924 = vrot.lane.b32.xlu0 %v554, 32
        %v925 = vpop.permute.xlu0 %924
        %926 = vrot.lane.b32.xlu0 %v555, 32
        %v927 = vpop.permute.xlu0 %926
        %v931 = vsel %vm460, %v922, 0
        %v934 = vsel %vm460, %v923, 0
        %936 = vmatpush.bf16.msra.mxu0 0
        %937 = vmatpush.bf16.msra.mxu0 0
        %938 = vmatpush.bf16.msra.mxu0 0
        %939 = vmatpush.bf16.msra.mxu0 0
        %940 = vmatpush.bf16.msra.mxu0 0
        %941 = vmatpush.bf16.msra.mxu0 0
        %942 = vmatpush.bf16.msra.mxu0 %v927
        %943 = vmatpush.bf16.msra.mxu0 %v925
        %944 = vmatmul.bf16.gmra.mxu0 %v931
        %v945 = vpop.f32.mrf.mxu0
        %v946 = vadd.f32 0.0, %v945
        %v947 = vpop.f32.mrf.mxu0
        %v948 = vadd.f32 0.0, %v947
        %949 = vmatmul.bf16.gmra.mxu0 %v934
        %v950 = vpop.f32.mrf.mxu0
        %v951 = vadd.f32 0.0, %v950
        %v952 = vpop.f32.mrf.mxu0
        %v953 = vadd.f32 0.0, %v952
        %954 = vdwg.mxu0
        %959 = vrot.lane.b32.xlu0 %v698, 32
        %v960 = vpop.permute.xlu0 %959
        %961 = vrot.lane.b32.xlu0 %v700, 32
        %v962 = vpop.permute.xlu0 %961
        %963 = vrot.lane.b32.xlu0 %v703, 32
        %v964 = vpop.permute.xlu0 %963
        %965 = vrot.lane.b32.xlu0 %v705, 32
        %v966 = vpop.permute.xlu0 %965
        %975 = vrot.lane.b32.xlu0 %v822, 64
        %v976 = vpop.permute.xlu0 %975
        %977 = vrot.lane.b32.xlu0 %v824, 64
        %v978 = vpop.permute.xlu0 %977
        %979 = vrot.lane.b32.xlu0 %v827, 64
        %v980 = vpop.permute.xlu0 %979
        %981 = vrot.lane.b32.xlu0 %v829, 64
        %v982 = vpop.permute.xlu0 %981
        %991 = vrot.lane.b32.xlu0 %v946, 96
        %v992 = vpop.permute.xlu0 %991
        %993 = vrot.lane.b32.xlu0 %v948, 96
        %v994 = vpop.permute.xlu0 %993
        %995 = vrot.lane.b32.xlu0 %v951, 96
        %v996 = vpop.permute.xlu0 %995
        %997 = vrot.lane.b32.xlu0 %v953, 96
        %v998 = vpop.permute.xlu0 %997
        %v1003 = vsel %vm460, %v574, %v960
        %v1004 = vsel %vm460, %v576, %v962
        %v1005 = vsel %vm460, %v579, %v964
        %v1006 = vsel %vm460, %v581, %v966
        %vm1007 = vcmask 523264
        %v1008 = vsel %vm1007, %v1003, %v976
        %v1009 = vsel %vm1007, %v1004, %v978
        %v1010 = vsel %vm1007, %v1005, %v980
        %v1011 = vsel %vm1007, %v1006, %v982
        %vm1012 = vcmask 785408
        %v1013 = vsel %vm1012, %v1008, %v992
        %v1014 = vsel %vm1012, %v1009, %v994
        %v1015 = vsel %vm1012, %v1010, %v996
        %v1016 = vsel %vm1012, %v1011, %v998
        %v1017 = vpack.c.bf16 %v1013, %v1013
        %v1018 = vpack.c.bf16 %v1014, %v1014
        %v1019 = vpack.c.bf16 %v1015, %v1015
        %v1020 = vpack.c.bf16 %v1016, %v1016
        %1021 = vst [vmem:[%s415] sm:$0xf] %v1017
        %1022 = vst [vmem:[%s415 + $0x4] sm:$0xf] %v1018
        %1023 = vst [vmem:[%s415 + $0x8] sm:$0xf] %v1019
        %1024 = vst [vmem:[%s415 + $0xc] sm:$0xf] %v1020
        %p1025 = scmp.lt.s32.totalorder %s18, 1
        %s1026 = scalar_select %p1025, %s18, 1
        %p1027 = scmp.lt.s32.totalorder %s19, 0
        %s1028 = scalar_select %p1027, %s19, 0
        %s1029 = smul.addr %s1026, 4
        %s1030 = sadd.s32 %s1028, %s1029
        %s1031 = smul.addr %s1030, 4
        %s1032 = scalar_lea.vmem %s3, %s1031
        // Predicated region
        $region156: #{gpt_forward.12} parent=142 // pred_check
          %p1033 = pneg %p134
        $region157: #{gpt_forward.12} parent=142 // pred_check_branch
          %1035 = sbr.rel (%p1033) target = $region159
        $region158: #{gpt_forward.12} parent=142 // pred_region
          _
        $region159: #{gpt_forward.12} parent=142 // pred_fallthru
          _
      $region143: #{gpt_forward.12} parent=5 // pred_fallthru
        _
      %p1036 = scmp.le.s32.totalorder 2, %s9
      // Predicated region
      $region160: #{gpt_forward.12} parent=5 // pred_check
        %p1037 = pneg %p1036
      $region161: #{gpt_forward.12} parent=5 // pred_check_branch
        %1039 = sbr.rel (%p1037) target = $region163
      $region162: #{gpt_forward.12} parent=5 // pred_region
        %s1040 = ssub.s32 %s9, 2
        // Predicated region
        $region164: #{gpt_forward.12} parent=162 // pred_check
          %p1041 = pneg %p140
        $region165: #{gpt_forward.12} parent=162 // pred_check_branch
          %1043 = sbr.rel (%p1041) target = $region167
        $region166: #{gpt_forward.12} parent=162 // pred_region
          %p1044 = scmp.lt.s32.totalorder %s20, 1
          %s1045 = scalar_select %p1044, %s20, 1
          %p1046 = scmp.lt.s32.totalorder %s21, 0
          %s1047 = scalar_select %p1046, %s21, 0
          %s1048 = smul.addr %s1045, 4
          %s1049 = sadd.s32 %s1047, %s1048
          %s1050 = smul.addr %s1049, 4
          %s1051 = scalar_lea.vmem %s3, %s1050
        $region167: #{gpt_forward.12} parent=162 // pred_fallthru
          _
      $region163: #{gpt_forward.12} parent=5 // pred_fallthru
        _
    $region6: #{gpt_forward.12} parent=1 // loop_footer
      %s13 = sadd.s32 1, %s9
    $region7: #{gpt_forward.12} parent=1 // loop_footer_branch
      %8 = sbr.rel target = $region3
    $region8: #{gpt_forward.12} parent=1 // loop_exit
      _

// kernel: gpt_forward.14
$region0: #{gpt_forward.14}
  #allocation0 [shape = 'u32[]', space=smem, size = 0x4, offset = 0x4, fixed_abs, tag = 'smem constant byte address 0x4 - core index']
  #allocation1 [shape = 'u32[72,128]{1,0:T(1,128)}', space=vmem, size = 0x9000, scoped, tag = 'internal scratch']
  %s0 = inlined_call_operand.vmem [shape: f32[64,128], index: 0, kind: input, shape index: {}]
  %s1 = inlined_call_operand.vmem [shape: bf16[128,512], index: 1, kind: input, shape index: {}]
  %s2 = inlined_call_operand.vmem [shape: f32[1,128], index: 2, kind: input, shape index: {}]
  %s3 = inlined_call_operand.vmem [shape: f32[1,128], index: 3, kind: input, shape index: {}]
  %s4 = inlined_call_operand.vmem [shape: f32[1,512], index: 4, kind: input, shape index: {}]
  %s5 = inlined_call_operand.vmem [shape: bf16[64,512], index: 5, kind: output, shape index: {}]
  %s6 = sld [smem:[#allocation0]]
  $region30: #{gpt_forward.14} parent=0
    _
  %s8 = ssub.s32 1, %s6
  %s9 = scalar_select 0, %s8, %s6
  // Predicated region
  $region2: #{gpt_forward.14} parent=0 // pred_check
    _
  $region3: #{gpt_forward.14} parent=0 // pred_check_branch
    %11 = sbr.rel (0) target = $region5
  $region4: #{gpt_forward.14} parent=0 // pred_region
    _
  $region5: #{gpt_forward.14} parent=0 // pred_fallthru
    _
  // Predicated region
  $region6: #{gpt_forward.14} parent=0 // pred_check
    _
  $region7: #{gpt_forward.14} parent=0 // pred_check_branch
    %13 = sbr.rel (0) target = $region9
  $region8: #{gpt_forward.14} parent=0 // pred_region
    _
  $region9: #{gpt_forward.14} parent=0 // pred_fallthru
    _
  // Predicated region
  $region10: #{gpt_forward.14} parent=0 // pred_check
    _
  $region11: #{gpt_forward.14} parent=0 // pred_check_branch
    %15 = sbr.rel (0) target = $region13
  $region12: #{gpt_forward.14} parent=0 // pred_region
    _
  $region13: #{gpt_forward.14} parent=0 // pred_fallthru
    _
  // Predicated region
  $region14: #{gpt_forward.14} parent=0 // pred_check
    _
  $region15: #{gpt_forward.14} parent=0 // pred_check_branch
    %17 = sbr.rel (0) target = $region17
  $region16: #{gpt_forward.14} parent=0 // pred_region
    _
  $region17: #{gpt_forward.14} parent=0 // pred_fallthru
    _
  // Predicated region
  $region18: #{gpt_forward.14} parent=0 // pred_check
    _
  $region19: #{gpt_forward.14} parent=0 // pred_check_branch
    %19 = sbr.rel (0) target = $region21
  $region20: #{gpt_forward.14} parent=0 // pred_region
    _
  $region21: #{gpt_forward.14} parent=0 // pred_fallthru
    _
  %v20 = vld [vmem:[%s0] sm:$0xff]
  %v21 = vld [vmem:[%s0 + $0x8] sm:$0xff]
  %v22 = vld [vmem:[%s0 + $0x10] sm:$0xff]
  %v23 = vld [vmem:[%s0 + $0x18] sm:$0xff]
  %v24 = vld [vmem:[%s0 + $0x20] sm:$0xff]
  %v25 = vld [vmem:[%s0 + $0x28] sm:$0xff]
  %v26 = vld [vmem:[%s0 + $0x30] sm:$0xff]
  %v27 = vld [vmem:[%s0 + $0x38] sm:$0xff]
  %28 = vadd.xlane.f32.xlu0 %v20
  %v29 = vpop.xlane.xlu0 %28
  %30 = vadd.xlane.f32.xlu0 %v21
  %v31 = vpop.xlane.xlu0 %30
  %32 = vadd.xlane.f32.xlu0 %v22
  %v33 = vpop.xlane.xlu0 %32
  %34 = vadd.xlane.f32.xlu0 %v23
  %v35 = vpop.xlane.xlu0 %34
  %36 = vadd.xlane.f32.xlu0 %v24
  %v37 = vpop.xlane.xlu0 %36
  %38 = vadd.xlane.f32.xlu0 %v25
  %v39 = vpop.xlane.xlu0 %38
  %40 = vadd.xlane.f32.xlu0 %v26
  %v41 = vpop.xlane.xlu0 %40
  %42 = vadd.xlane.f32.xlu0 %v27
  %v43 = vpop.xlane.xlu0 %42
  %v44 = vrcp.pop 128.0
  %v45 = vmul.f32 128.0, %v44
  %v46 = vsub.f32 1.0, %v45
  %v47 = vmul.f32 %v44, %v46
  %v48 = vadd.f32 %v44, %v47
  %vm49 = vweird.f32 %v44
  %v50 = vsel %vm49, %v44, %v48
  %v51 = vmul.f32 %v29, %v50
  %v52 = vmul.f32 %v31, %v50
  %v53 = vmul.f32 %v33, %v50
  %v54 = vmul.f32 %v35, %v50
  %v55 = vmul.f32 %v37, %v50
  %v56 = vmul.f32 %v39, %v50
  %v57 = vmul.f32 %v41, %v50
  %v58 = vmul.f32 %v43, %v50
  %v59 = vsub.f32 %v20, %v51
  %v60 = vsub.f32 %v21, %v52
  %v61 = vsub.f32 %v22, %v53
  %v62 = vsub.f32 %v23, %v54
  %v63 = vsub.f32 %v24, %v55
  %v64 = vsub.f32 %v25, %v56
  %v65 = vsub.f32 %v26, %v57
  %v66 = vsub.f32 %v27, %v58
  %v67 = vmul.f32 %v59, %v59
  %v68 = vmul.f32 %v60, %v60
  %v69 = vmul.f32 %v61, %v61
  %v70 = vmul.f32 %v62, %v62
  %v71 = vmul.f32 %v63, %v63
  %v72 = vmul.f32 %v64, %v64
  %v73 = vmul.f32 %v65, %v65
  %v74 = vmul.f32 %v66, %v66
  %75 = vadd.xlane.f32.xlu0 %v67
  %v76 = vpop.xlane.xlu0 %75
  %77 = vadd.xlane.f32.xlu0 %v68
  %v78 = vpop.xlane.xlu0 %77
  %79 = vadd.xlane.f32.xlu0 %v69
  %v80 = vpop.xlane.xlu0 %79
  %81 = vadd.xlane.f32.xlu0 %v70
  %v82 = vpop.xlane.xlu0 %81
  %83 = vadd.xlane.f32.xlu0 %v71
  %v84 = vpop.xlane.xlu0 %83
  %85 = vadd.xlane.f32.xlu0 %v72
  %v86 = vpop.xlane.xlu0 %85
  %87 = vadd.xlane.f32.xlu0 %v73
  %v88 = vpop.xlane.xlu0 %87
  %89 = vadd.xlane.f32.xlu0 %v74
  %v90 = vpop.xlane.xlu0 %89
  %v91 = vmul.f32 %v76, %v50
  %v92 = vmul.f32 %v78, %v50
  %v93 = vmul.f32 %v80, %v50
  %v94 = vmul.f32 %v82, %v50
  %v95 = vmul.f32 %v84, %v50
  %v96 = vmul.f32 %v86, %v50
  %v97 = vmul.f32 %v88, %v50
  %v98 = vmul.f32 %v90, %v50
  %v99 = vadd.f32 %v91, 1e-05
  %v100 = vadd.f32 %v92, 1e-05
  %v101 = vadd.f32 %v93, 1e-05
  %v102 = vadd.f32 %v94, 1e-05
  %v103 = vadd.f32 %v95, 1e-05
  %v104 = vadd.f32 %v96, 1e-05
  %v105 = vadd.f32 %v97, 1e-05
  %v106 = vadd.f32 %v98, 1e-05
  %v107 = vrsqrt.pop %v99
  %v108 = vmul.f32 %v107, %v99
  %v109 = vmul.f32 %v108, %v107
  %v110 = vmul.f32 0.5, %v109
  %v111 = vsub.f32 1.5, %v110
  %v112 = vmul.f32 %v107, %v111
  %vm113 = vweird.f32 %v99
  %vm114 = vweird.f32 %v107
  %vm115 = vmor %vm113, %vm114
  %v116 = vsel %vm115, %v107, %v112
  %v117 = vrsqrt.pop %v100
  %v118 = vmul.f32 %v117, %v100
  %v119 = vmul.f32 %v118, %v117
  %v120 = vmul.f32 0.5, %v119
  %v121 = vsub.f32 1.5, %v120
  %v122 = vmul.f32 %v117, %v121
  %vm123 = vweird.f32 %v100
  %vm124 = vweird.f32 %v117
  %vm125 = vmor %vm123, %vm124
  %v126 = vsel %vm125, %v117, %v122
  %v127 = vrsqrt.pop %v101
  %v128 = vmul.f32 %v127, %v101
  %v129 = vmul.f32 %v128, %v127
  %v130 = vmul.f32 0.5, %v129
  %v131 = vsub.f32 1.5, %v130
  %v132 = vmul.f32 %v127, %v131
  %vm133 = vweird.f32 %v101
  %vm134 = vweird.f32 %v127
  %vm135 = vmor %vm133, %vm134
  %v136 = vsel %vm135, %v127, %v132
  %v137 = vrsqrt.pop %v102
  %v138 = vmul.f32 %v137, %v102
  %v139 = vmul.f32 %v138, %v137
  %v140 = vmul.f32 0.5, %v139
  %v141 = vsub.f32 1.5, %v140
  %v142 = vmul.f32 %v137, %v141
  %vm143 = vweird.f32 %v102
  %vm144 = vweird.f32 %v137
  %vm145 = vmor %vm143, %vm144
  %v146 = vsel %vm145, %v137, %v142
  %v147 = vrsqrt.pop %v103
  %v148 = vmul.f32 %v147, %v103
  %v149 = vmul.f32 %v148, %v147
  %v150 = vmul.f32 0.5, %v149
  %v151 = vsub.f32 1.5, %v150
  %v152 = vmul.f32 %v147, %v151
  %vm153 = vweird.f32 %v103
  %vm154 = vweird.f32 %v147
  %vm155 = vmor %vm153, %vm154
  %v156 = vsel %vm155, %v147, %v152
  %v157 = vrsqrt.pop %v104
  %v158 = vmul.f32 %v157, %v104
  %v159 = vmul.f32 %v158, %v157
  %v160 = vmul.f32 0.5, %v159
  %v161 = vsub.f32 1.5, %v160
  %v162 = vmul.f32 %v157, %v161
  %vm163 = vweird.f32 %v104
  %vm164 = vweird.f32 %v157
  %vm165 = vmor %vm163, %vm164
  %v166 = vsel %vm165, %v157, %v162
  %v167 = vrsqrt.pop %v105
  %v168 = vmul.f32 %v167, %v105
  %v169 = vmul.f32 %v168, %v167
  %v170 = vmul.f32 0.5, %v169
  %v171 = vsub.f32 1.5, %v170
  %v172 = vmul.f32 %v167, %v171
  %vm173 = vweird.f32 %v105
  %vm174 = vweird.f32 %v167
  %vm175 = vmor %vm173, %vm174
  %v176 = vsel %vm175, %v167, %v172
  %v177 = vrsqrt.pop %v106
  %v178 = vmul.f32 %v177, %v106
  %v179 = vmul.f32 %v178, %v177
  %v180 = vmul.f32 0.5, %v179
  %v181 = vsub.f32 1.5, %v180
  %v182 = vmul.f32 %v177, %v181
  %vm183 = vweird.f32 %v106
  %vm184 = vweird.f32 %v177
  %vm185 = vmor %vm183, %vm184
  %v186 = vsel %vm185, %v177, %v182
  %v187 = vmul.f32 %v59, %v116
  %v188 = vmul.f32 %v60, %v126
  %v189 = vmul.f32 %v61, %v136
  %v190 = vmul.f32 %v62, %v146
  %v191 = vmul.f32 %v63, %v156
  %v192 = vmul.f32 %v64, %v166
  %v193 = vmul.f32 %v65, %v176
  %v194 = vmul.f32 %v66, %v186
  %v195 = vld [vmem:[%s2] sm:$0x1]
  %v197 = vperm.slane %v195, 0
  %v199 = vmul.f32 %v187, %v197
  %v200 = vmul.f32 %v188, %v197
  %v201 = vmul.f32 %v189, %v197
  %v202 = vmul.f32 %v190, %v197
  %v203 = vmul.f32 %v191, %v197
  %v204 = vmul.f32 %v192, %v197
  %v205 = vmul.f32 %v193, %v197
  %v206 = vmul.f32 %v194, %v197
  %v207 = vld [vmem:[%s3] sm:$0x1]
  %v209 = vperm.slane %v207, 0
  %v211 = vadd.f32 %v199, %v209
  %v212 = vadd.f32 %v200, %v209
  %v213 = vadd.f32 %v201, %v209
  %v214 = vadd.f32 %v202, %v209
  %v215 = vadd.f32 %v203, %v209
  %v216 = vadd.f32 %v204, %v209
  %v217 = vadd.f32 %v205, %v209
  %v218 = vadd.f32 %v206, %v209
  %v219 = vpack.c.bf16 %v212, %v211
  %v220 = vpack.c.bf16 %v214, %v213
  %v221 = vpack.c.bf16 %v216, %v215
  %v222 = vpack.c.bf16 %v218, %v217
  %v223 = vld [vmem:[%s1] sm:$0xff]
  %v224 = vld [vmem:[%s1 + $0x8] sm:$0xff]
  %v225 = vld [vmem:[%s1 + $0x10] sm:$0xff]
  %v226 = vld [vmem:[%s1 + $0x18] sm:$0xff]
  %v227 = vld [vmem:[%s1 + $0x20] sm:$0xff]
  %v228 = vld [vmem:[%s1 + $0x28] sm:$0xff]
  %v229 = vld [vmem:[%s1 + $0x30] sm:$0xff]
  %v230 = vld [vmem:[%s1 + $0x38] sm:$0xff]
  %v231 = vld [vmem:[%s1 + $0x40] sm:$0xff]
  %v232 = vld [vmem:[%s1 + $0x48] sm:$0xff]
  %v233 = vld [vmem:[%s1 + $0x50] sm:$0xff]
  %v234 = vld [vmem:[%s1 + $0x58] sm:$0xff]
  %v235 = vld [vmem:[%s1 + $0x60] sm:$0xff]
  %v236 = vld [vmem:[%s1 + $0x68] sm:$0xff]
  %v237 = vld [vmem:[%s1 + $0x70] sm:$0xff]
  %v238 = vld [vmem:[%s1 + $0x78] sm:$0xff]
  %v239 = vld [vmem:[%s1 + $0x80] sm:$0xff]
  %v240 = vld [vmem:[%s1 + $0x88] sm:$0xff]
  %v241 = vld [vmem:[%s1 + $0x90] sm:$0xff]
  %v242 = vld [vmem:[%s1 + $0x98] sm:$0xff]
  %v243 = vld [vmem:[%s1 + $0xa0] sm:$0xff]
  %v244 = vld [vmem:[%s1 + $0xa8] sm:$0xff]
  %v245 = vld [vmem:[%s1 + $0xb0] sm:$0xff]
  %v246 = vld [vmem:[%s1 + $0xb8] sm:$0xff]
  %v247 = vld [vmem:[%s1 + $0xc0] sm:$0xff]
  %v248 = vld [vmem:[%s1 + $0xc8] sm:$0xff]
  %v249 = vld [vmem:[%s1 + $0xd0] sm:$0xff]
  %v250 = vld [vmem:[%s1 + $0xd8] sm:$0xff]
  %v251 = vld [vmem:[%s1 + $0xe0] sm:$0xff]
  %v252 = vld [vmem:[%s1 + $0xe8] sm:$0xff]
  %v253 = vld [vmem:[%s1 + $0xf0] sm:$0xff]
  %v254 = vld [vmem:[%s1 + $0xf8] sm:$0xff]
  %v255 = vld [vmem:[%s4] sm:$0xf]
  %v257 = vperm.slane %v255, 0
  %v258 = vperm.slane %v255, 1
  %v259 = vperm.slane %v255, 2
  %v260 = vperm.slane %v255, 3
  %v297 = vunpack.c.l.b16 %v223
  %v298 = vunpack.c.h.b16 %v223
  %v299 = vunpack.c.l.b16 %v224
  %v300 = vunpack.c.h.b16 %v224
  %v301 = vunpack.c.l.b16 %v225
  %v302 = vunpack.c.h.b16 %v225
  %v303 = vunpack.c.l.b16 %v226
  %v304 = vunpack.c.h.b16 %v226
  %v305 = vunpack.c.l.b16 %v227
  %v306 = vunpack.c.h.b16 %v227
  %v307 = vunpack.c.l.b16 %v228
  %v308 = vunpack.c.h.b16 %v228
  %v309 = vunpack.c.l.b16 %v229
  %v310 = vunpack.c.h.b16 %v229
  %v311 = vunpack.c.l.b16 %v230
  %v312 = vunpack.c.h.b16 %v230
  %v313 = vunpack.c.l.b16 %v231
  %v314 = vunpack.c.h.b16 %v231
  %v315 = vunpack.c.l.b16 %v232
  %v316 = vunpack.c.h.b16 %v232
  %v317 = vunpack.c.l.b16 %v233
  %v318 = vunpack.c.h.b16 %v233
  %v319 = vunpack.c.l.b16 %v234
  %v320 = vunpack.c.h.b16 %v234
  %v321 = vunpack.c.l.b16 %v235
  %v322 = vunpack.c.h.b16 %v235
  %v323 = vunpack.c.l.b16 %v236
  %v324 = vunpack.c.h.b16 %v236
  %v325 = vunpack.c.l.b16 %v237
  %v326 = vunpack.c.h.b16 %v237
  %v327 = vunpack.c.l.b16 %v238
  %v328 = vunpack.c.h.b16 %v238
  %v329 = vunpack.c.l.b16 %v239
  %v330 = vunpack.c.h.b16 %v239
  %v331 = vunpack.c.l.b16 %v240
  %v332 = vunpack.c.h.b16 %v240
  %v333 = vunpack.c.l.b16 %v241
  %v334 = vunpack.c.h.b16 %v241
  %v335 = vunpack.c.l.b16 %v242
  %v336 = vunpack.c.h.b16 %v242
  %v337 = vunpack.c.l.b16 %v243
  %v338 = vunpack.c.h.b16 %v243
  %v339 = vunpack.c.l.b16 %v244
  %v340 = vunpack.c.h.b16 %v244
  %v341 = vunpack.c.l.b16 %v245
  %v342 = vunpack.c.h.b16 %v245
  %v343 = vunpack.c.l.b16 %v246
  %v344 = vunpack.c.h.b16 %v246
  %v345 = vunpack.c.l.b16 %v247
  %v346 = vunpack.c.h.b16 %v247
  %v347 = vunpack.c.l.b16 %v248
  %v348 = vunpack.c.h.b16 %v248
  %v349 = vunpack.c.l.b16 %v249
  %v350 = vunpack.c.h.b16 %v249
  %v351 = vunpack.c.l.b16 %v250
  %v352 = vunpack.c.h.b16 %v250
  %v353 = vunpack.c.l.b16 %v251
  %v354 = vunpack.c.h.b16 %v251
  %v355 = vunpack.c.l.b16 %v252
  %v356 = vunpack.c.h.b16 %v252
  %v357 = vunpack.c.l.b16 %v253
  %v358 = vunpack.c.h.b16 %v253
  %v359 = vunpack.c.l.b16 %v254
  %v360 = vunpack.c.h.b16 %v254
  %v361 = vpack.c.b16 %v301, %v297
  %v362 = vpack.c.b16 %v302, %v298
  %v363 = vpack.c.b16 %v303, %v299
  %v364 = vpack.c.b16 %v304, %v300
  %v365 = vpack.c.b16 %v309, %v305
  %v366 = vpack.c.b16 %v310, %v306
  %v367 = vpack.c.b16 %v311, %v307
  %v368 = vpack.c.b16 %v312, %v308
  %v369 = vpack.c.b16 %v317, %v313
  %v370 = vpack.c.b16 %v318, %v314
  %v371 = vpack.c.b16 %v319, %v315
  %v372 = vpack.c.b16 %v320, %v316
  %v373 = vpack.c.b16 %v325, %v321
  %v374 = vpack.c.b16 %v326, %v322
  %v375 = vpack.c.b16 %v327, %v323
  %v376 = vpack.c.b16 %v328, %v324
  %v377 = vpack.c.b16 %v333, %v329
  %v378 = vpack.c.b16 %v334, %v330
  %v379 = vpack.c.b16 %v335, %v331
  %v380 = vpack.c.b16 %v336, %v332
  %v381 = vpack.c.b16 %v341, %v337
  %v382 = vpack.c.b16 %v342, %v338
  %v383 = vpack.c.b16 %v343, %v339
  %v384 = vpack.c.b16 %v344, %v340
  %v385 = vpack.c.b16 %v349, %v345
  %v386 = vpack.c.b16 %v350, %v346
  %v387 = vpack.c.b16 %v351, %v347
  %v388 = vpack.c.b16 %v352, %v348
  %v389 = vpack.c.b16 %v357, %v353
  %v390 = vpack.c.b16 %v358, %v354
  %v391 = vpack.c.b16 %v359, %v355
  %v392 = vpack.c.b16 %v360, %v356
  %425 = vmatpush.bf16.msra.mxu0 %v389
  %426 = vmatpush.bf16.msra.mxu0 %v385
  %427 = vmatpush.bf16.msra.mxu0 %v381
  %428 = vmatpush.bf16.msra.mxu0 %v377
  %429 = vmatpush.bf16.msra.mxu0 %v373
  %430 = vmatpush.bf16.msra.mxu0 %v369
  %431 = vmatpush.bf16.msra.mxu0 %v365
  %432 = vmatpush.bf16.msra.mxu0 %v361
  %433 = vmatmul.bf16.gmra.mxu0 %v219
  %v434 = vpop.f32.mrf.mxu0
  %v435 = vadd.f32 %v257, %v434
  %v436 = vpop.f32.mrf.mxu0
  %v437 = vadd.f32 %v257, %v436
  %438 = vmatmul.bf16.gmra.mxu0 %v220
  %v439 = vpop.f32.mrf.mxu0
  %v440 = vadd.f32 %v257, %v439
  %v441 = vpop.f32.mrf.mxu0
  %v442 = vadd.f32 %v257, %v441
  %443 = vmatmul.bf16.gmra.mxu0 %v221
  %v444 = vpop.f32.mrf.mxu0
  %v445 = vadd.f32 %v257, %v444
  %v446 = vpop.f32.mrf.mxu0
  %v447 = vadd.f32 %v257, %v446
  %448 = vmatmul.bf16.gmra.mxu0 %v222
  %v449 = vpop.f32.mrf.mxu0
  %v450 = vadd.f32 %v257, %v449
  %v451 = vpop.f32.mrf.mxu0
  %v452 = vadd.f32 %v257, %v451
  %453 = vdwg.mxu0
  %454 = vmatpush.bf16.msra.mxu0 %v390
  %455 = vmatpush.bf16.msra.mxu0 %v386
  %456 = vmatpush.bf16.msra.mxu0 %v382
  %457 = vmatpush.bf16.msra.mxu0 %v378
  %458 = vmatpush.bf16.msra.mxu0 %v374
  %459 = vmatpush.bf16.msra.mxu0 %v370
  %460 = vmatpush.bf16.msra.mxu0 %v366
  %461 = vmatpush.bf16.msra.mxu0 %v362
  %462 = vmatmul.bf16.gmra.mxu0 %v219
  %v463 = vpop.f32.mrf.mxu0
  %v464 = vadd.f32 %v258, %v463
  %v465 = vpop.f32.mrf.mxu0
  %v466 = vadd.f32 %v258, %v465
  %467 = vmatmul.bf16.gmra.mxu0 %v220
  %v468 = vpop.f32.mrf.mxu0
  %v469 = vadd.f32 %v258, %v468
  %v470 = vpop.f32.mrf.mxu0
  %v471 = vadd.f32 %v258, %v470
  %472 = vmatmul.bf16.gmra.mxu0 %v221
  %v473 = vpop.f32.mrf.mxu0
  %v474 = vadd.f32 %v258, %v473
  %v475 = vpop.f32.mrf.mxu0
  %v476 = vadd.f32 %v258, %v475
  %477 = vmatmul.bf16.gmra.mxu0 %v222
  %v478 = vpop.f32.mrf.mxu0
  %v479 = vadd.f32 %v258, %v478
  %v480 = vpop.f32.mrf.mxu0
  %v481 = vadd.f32 %v258, %v480
  %482 = vdwg.mxu0
  %483 = vmatpush.bf16.msra.mxu0 %v391
  %484 = vmatpush.bf16.msra.mxu0 %v387
  %485 = vmatpush.bf16.msra.mxu0 %v383
  %486 = vmatpush.bf16.msra.mxu0 %v379
  %487 = vmatpush.bf16.msra.mxu0 %v375
  %488 = vmatpush.bf16.msra.mxu0 %v371
  %489 = vmatpush.bf16.msra.mxu0 %v367
  %490 = vmatpush.bf16.msra.mxu0 %v363
  %491 = vmatmul.bf16.gmra.mxu0 %v219
  %v492 = vpop.f32.mrf.mxu0
  %v493 = vadd.f32 %v259, %v492
  %v494 = vpop.f32.mrf.mxu0
  %v495 = vadd.f32 %v259, %v494
  %496 = vmatmul.bf16.gmra.mxu0 %v220
  %v497 = vpop.f32.mrf.mxu0
  %v498 = vadd.f32 %v259, %v497
  %v499 = vpop.f32.mrf.mxu0
  %v500 = vadd.f32 %v259, %v499
  %501 = vmatmul.bf16.gmra.mxu0 %v221
  %v502 = vpop.f32.mrf.mxu0
  %v503 = vadd.f32 %v259, %v502
  %v504 = vpop.f32.mrf.mxu0
  %v505 = vadd.f32 %v259, %v504
  %506 = vmatmul.bf16.gmra.mxu0 %v222
  %v507 = vpop.f32.mrf.mxu0
  %v508 = vadd.f32 %v259, %v507
  %v509 = vpop.f32.mrf.mxu0
  %v510 = vadd.f32 %v259, %v509
  %511 = vdwg.mxu0
  %512 = vmatpush.bf16.msra.mxu0 %v392
  %513 = vmatpush.bf16.msra.mxu0 %v388
  %514 = vmatpush.bf16.msra.mxu0 %v384
  %515 = vmatpush.bf16.msra.mxu0 %v380
  %516 = vmatpush.bf16.msra.mxu0 %v376
  %517 = vmatpush.bf16.msra.mxu0 %v372
  %518 = vmatpush.bf16.msra.mxu0 %v368
  %519 = vmatpush.bf16.msra.mxu0 %v364
  %520 = vmatmul.bf16.gmra.mxu0 %v219
  %v521 = vpop.f32.mrf.mxu0
  %v522 = vadd.f32 %v260, %v521
  %v523 = vpop.f32.mrf.mxu0
  %v524 = vadd.f32 %v260, %v523
  %525 = vmatmul.bf16.gmra.mxu0 %v220
  %v526 = vpop.f32.mrf.mxu0
  %v527 = vadd.f32 %v260, %v526
  %v528 = vpop.f32.mrf.mxu0
  %v529 = vadd.f32 %v260, %v528
  %530 = vmatmul.bf16.gmra.mxu0 %v221
  %v531 = vpop.f32.mrf.mxu0
  %v532 = vadd.f32 %v260, %v531
  %v533 = vpop.f32.mrf.mxu0
  %v534 = vadd.f32 %v260, %v533
  %535 = vmatmul.bf16.gmra.mxu0 %v222
  %v536 = vpop.f32.mrf.mxu0
  %v537 = vadd.f32 %v260, %v536
  %v538 = vpop.f32.mrf.mxu0
  %v539 = vadd.f32 %v260, %v538
  %540 = vdwg.mxu0
  %v541 = vmul.f32 %v435, 0.5
  %v542 = vmul.f32 %v464, 0.5
  %v543 = vmul.f32 %v493, 0.5
  %v544 = vmul.f32 %v522, 0.5
  %v545 = vmul.f32 %v437, 0.5
  %v546 = vmul.f32 %v466, 0.5
  %v547 = vmul.f32 %v495, 0.5
  %v548 = vmul.f32 %v524, 0.5
  %v549 = vmul.f32 %v440, 0.5
  %v550 = vmul.f32 %v469, 0.5
  %v551 = vmul.f32 %v498, 0.5
  %v552 = vmul.f32 %v527, 0.5
  %v553 = vmul.f32 %v442, 0.5
  %v554 = vmul.f32 %v471, 0.5
  %v555 = vmul.f32 %v500, 0.5
  %v556 = vmul.f32 %v529, 0.5
  %v557 = vmul.f32 %v445, 0.5
  %v558 = vmul.f32 %v474, 0.5
  %v559 = vmul.f32 %v503, 0.5
  %v560 = vmul.f32 %v532, 0.5
  %v561 = vmul.f32 %v447, 0.5
  %v562 = vmul.f32 %v476, 0.5
  %v563 = vmul.f32 %v505, 0.5
  %v564 = vmul.f32 %v534, 0.5
  %v565 = vmul.f32 %v450, 0.5
  %v566 = vmul.f32 %v479, 0.5
  %v567 = vmul.f32 %v508, 0.5
  %v568 = vmul.f32 %v537, 0.5
  %v569 = vmul.f32 %v452, 0.5
  %v570 = vmul.f32 %v481, 0.5
  %v571 = vmul.f32 %v510, 0.5
  %v572 = vmul.f32 %v539, 0.5
  %v573 = vmul.f32 %v435, 0.044715
  %v574 = vmul.f32 %v464, 0.044715
  %v575 = vmul.f32 %v493, 0.044715
  %v576 = vmul.f32 %v522, 0.044715
  %v577 = vmul.f32 %v437, 0.044715
  %v578 = vmul.f32 %v466, 0.044715
  %v579 = vmul.f32 %v495, 0.044715
  %v580 = vmul.f32 %v524, 0.044715
  %v581 = vmul.f32 %v440, 0.044715
  %v582 = vmul.f32 %v469, 0.044715
  %v583 = vmul.f32 %v498, 0.044715
  %v584 = vmul.f32 %v527, 0.044715
  %v585 = vmul.f32 %v442, 0.044715
  %v586 = vmul.f32 %v471, 0.044715
  %v587 = vmul.f32 %v500, 0.044715
  %v588 = vmul.f32 %v529, 0.044715
  %v589 = vmul.f32 %v445, 0.044715
  %v590 = vmul.f32 %v474, 0.044715
  %v591 = vmul.f32 %v503, 0.044715
  %v592 = vmul.f32 %v532, 0.044715
  %v593 = vmul.f32 %v447, 0.044715
  %v594 = vmul.f32 %v476, 0.044715
  %v595 = vmul.f32 %v505, 0.044715
  %v596 = vmul.f32 %v534, 0.044715
  %v597 = vmul.f32 %v450, 0.044715
  %v598 = vmul.f32 %v479, 0.044715
  %v599 = vmul.f32 %v508, 0.044715
  %v600 = vmul.f32 %v537, 0.044715
  %v601 = vmul.f32 %v452, 0.044715
  %v602 = vmul.f32 %v481, 0.044715
  %v603 = vmul.f32 %v510, 0.044715
  %v604 = vmul.f32 %v539, 0.044715
  %v605 = vmul.f32 %v573, %v435
  %v606 = vmul.f32 %v574, %v464
  %v607 = vmul.f32 %v575, %v493
  %v608 = vmul.f32 %v576, %v522
  %v609 = vmul.f32 %v577, %v437
  %v610 = vmul.f32 %v578, %v466
  %v611 = vmul.f32 %v579, %v495
  %v612 = vmul.f32 %v580, %v524
  %v613 = vmul.f32 %v581, %v440
  %v614 = vmul.f32 %v582, %v469
  %v615 = vmul.f32 %v583, %v498
  %v616 = vmul.f32 %v584, %v527
  %v617 = vmul.f32 %v585, %v442
  %v618 = vmul.f32 %v586, %v471
  %v619 = vmul.f32 %v587, %v500
  %v620 = vmul.f32 %v588, %v529
  %v621 = vmul.f32 %v589, %v445
  %v622 = vmul.f32 %v590, %v474
  %v623 = vmul.f32 %v591, %v503
  %v624 = vmul.f32 %v592, %v532
  %v625 = vmul.f32 %v593, %v447
  %v626 = vmul.f32 %v594, %v476
  %v627 = vmul.f32 %v595, %v505
  %v628 = vmul.f32 %v596, %v534
  %v629 = vmul.f32 %v597, %v450
  %v630 = vmul.f32 %v598, %v479
  %v631 = vmul.f32 %v599, %v508
  %v632 = vmul.f32 %v600, %v537
  %v633 = vmul.f32 %v601, %v452
  %v634 = vmul.f32 %v602, %v481
  %v635 = vmul.f32 %v603, %v510
  %v636 = vmul.f32 %v604, %v539
  %v637 = vmul.f32 %v605, %v435
  %v638 = vmul.f32 %v606, %v464
  %v639 = vmul.f32 %v607, %v493
  %v640 = vmul.f32 %v608, %v522
  %v641 = vmul.f32 %v609, %v437
  %v642 = vmul.f32 %v610, %v466
  %v643 = vmul.f32 %v611, %v495
  %v644 = vmul.f32 %v612, %v524
  %v645 = vmul.f32 %v613, %v440
  %v646 = vmul.f32 %v614, %v469
  %v647 = vmul.f32 %v615, %v498
  %v648 = vmul.f32 %v616, %v527
  %v649 = vmul.f32 %v617, %v442
  %v650 = vmul.f32 %v618, %v471
  %v651 = vmul.f32 %v619, %v500
  %v652 = vmul.f32 %v620, %v529
  %v653 = vmul.f32 %v621, %v445
  %v654 = vmul.f32 %v622, %v474
  %v655 = vmul.f32 %v623, %v503
  %v656 = vmul.f32 %v624, %v532
  %v657 = vmul.f32 %v625, %v447
  %v658 = vmul.f32 %v626, %v476
  %v659 = vmul.f32 %v627, %v505
  %v660 = vmul.f32 %v628, %v534
  %v661 = vmul.f32 %v629, %v450
  %v662 = vmul.f32 %v630, %v479
  %v663 = vmul.f32 %v631, %v508
  %v664 = vmul.f32 %v632, %v537
  %v665 = vmul.f32 %v633, %v452
  %v666 = vmul.f32 %v634, %v481
  %v667 = vmul.f32 %v635, %v510
  %v668 = vmul.f32 %v636, %v539
  %v669 = vadd.f32 %v435, %v637
  %v670 = vadd.f32 %v464, %v638
  %v671 = vadd.f32 %v493, %v639
  %v672 = vadd.f32 %v522, %v640
  %v673 = vadd.f32 %v437, %v641
  %v674 = vadd.f32 %v466, %v642
  %v675 = vadd.f32 %v495, %v643
  %v676 = vadd.f32 %v524, %v644
  %v677 = vadd.f32 %v440, %v645
  %v678 = vadd.f32 %v469, %v646
  %v679 = vadd.f32 %v498, %v647
  %v680 = vadd.f32 %v527, %v648
  %v681 = vadd.f32 %v442, %v649
  %v682 = vadd.f32 %v471, %v650
  %v683 = vadd.f32 %v500, %v651
  %v684 = vadd.f32 %v529, %v652
  %v685 = vadd.f32 %v445, %v653
  %v686 = vadd.f32 %v474, %v654
  %v687 = vadd.f32 %v503, %v655
  %v688 = vadd.f32 %v532, %v656
  %v689 = vadd.f32 %v447, %v657
  %v690 = vadd.f32 %v476, %v658
  %v691 = vadd.f32 %v505, %v659
  %v692 = vadd.f32 %v534, %v660
  %v693 = vadd.f32 %v450, %v661
  %v694 = vadd.f32 %v479, %v662
  %v695 = vadd.f32 %v508, %v663
  %v696 = vadd.f32 %v537, %v664
  %v697 = vadd.f32 %v452, %v665
  %v698 = vadd.f32 %v481, %v666
  %v699 = vadd.f32 %v510, %v667
  %v700 = vadd.f32 %v539, %v668
  %v701 = vmul.f32 %v669, 0.7978846
  %v702 = vmul.f32 %v670, 0.7978846
  %v703 = vmul.f32 %v671, 0.7978846
  %v704 = vmul.f32 %v672, 0.7978846
  %v705 = vmul.f32 %v673, 0.7978846
  %v706 = vmul.f32 %v674, 0.7978846
  %v707 = vmul.f32 %v675, 0.7978846
  %v708 = vmul.f32 %v676, 0.7978846
  %v709 = vmul.f32 %v677, 0.7978846
  %v710 = vmul.f32 %v678, 0.7978846
  %v711 = vmul.f32 %v679, 0.7978846
  %v712 = vmul.f32 %v680, 0.7978846
  %v713 = vmul.f32 %v681, 0.7978846
  %v714 = vmul.f32 %v682, 0.7978846
  %v715 = vmul.f32 %v683, 0.7978846
  %v716 = vmul.f32 %v684, 0.7978846
  %v717 = vmul.f32 %v685, 0.7978846
  %v718 = vmul.f32 %v686, 0.7978846
  %v719 = vmul.f32 %v687, 0.7978846
  %v720 = vmul.f32 %v688, 0.7978846
  %v721 = vmul.f32 %v689, 0.7978846
  %v722 = vmul.f32 %v690, 0.7978846
  %v723 = vmul.f32 %v691, 0.7978846
  %v724 = vmul.f32 %v692, 0.7978846
  %v725 = vmul.f32 %v693, 0.7978846
  %v726 = vmul.f32 %v694, 0.7978846
  %v727 = vmul.f32 %v695, 0.7978846
  %v728 = vmul.f32 %v696, 0.7978846
  %v729 = vmul.f32 %v697, 0.7978846
  %v730 = vmul.f32 %v698, 0.7978846
  %v731 = vmul.f32 %v699, 0.7978846
  %v732 = vmul.f32 %v700, 0.7978846
  %v733 = vtanh.pop %v701
  %v734 = vtanh.pop %v702
  %v735 = vtanh.pop %v703
  %v736 = vtanh.pop %v704
  %v737 = vtanh.pop %v705
  %v738 = vtanh.pop %v706
  %v739 = vtanh.pop %v707
  %v740 = vtanh.pop %v708
  %v741 = vtanh.pop %v709
  %v742 = vtanh.pop %v710
  %v743 = vtanh.pop %v711
  %v744 = vtanh.pop %v712
  %v745 = vtanh.pop %v713
  %v746 = vtanh.pop %v714
  %v747 = vtanh.pop %v715
  %v748 = vtanh.pop %v716
  %v749 = vtanh.pop %v717
  %v750 = vtanh.pop %v718
  %v751 = vtanh.pop %v719
  %v752 = vtanh.pop %v720
  %v753 = vtanh.pop %v721
  %v754 = vtanh.pop %v722
  %v755 = vtanh.pop %v723
  %v756 = vtanh.pop %v724
  %v757 = vtanh.pop %v725
  %v758 = vtanh.pop %v726
  %v759 = vtanh.pop %v727
  %v760 = vtanh.pop %v728
  %v761 = vtanh.pop %v729
  %v762 = vtanh.pop %v730
  %v763 = vtanh.pop %v731
  %v764 = vtanh.pop %v732
  %v765 = vadd.f32 %v733, 1.0
  %v766 = vadd.f32 %v734, 1.0
  %v767 = vadd.f32 %v735, 1.0
  %v768 = vadd.f32 %v736, 1.0
  %v769 = vadd.f32 %v737, 1.0
  %v770 = vadd.f32 %v738, 1.0
  %v771 = vadd.f32 %v739, 1.0
  %v772 = vadd.f32 %v740, 1.0
  %v773 = vadd.f32 %v741, 1.0
  %v774 = vadd.f32 %v742, 1.0
  %v775 = vadd.f32 %v743, 1.0
  %v776 = vadd.f32 %v744, 1.0
  %v777 = vadd.f32 %v745, 1.0
  %v778 = vadd.f32 %v746, 1.0
  %v779 = vadd.f32 %v747, 1.0
  %v780 = vadd.f32 %v748, 1.0
  %v781 = vadd.f32 %v749, 1.0
  %v782 = vadd.f32 %v750, 1.0
  %v783 = vadd.f32 %v751, 1.0
  %v784 = vadd.f32 %v752, 1.0
  %v785 = vadd.f32 %v753, 1.0
  %v786 = vadd.f32 %v754, 1.0
  %v787 = vadd.f32 %v755, 1.0
  %v788 = vadd.f32 %v756, 1.0
  %v789 = vadd.f32 %v757, 1.0
  %v790 = vadd.f32 %v758, 1.0
  %v791 = vadd.f32 %v759, 1.0
  %v792 = vadd.f32 %v760, 1.0
  %v793 = vadd.f32 %v761, 1.0
  %v794 = vadd.f32 %v762, 1.0
  %v795 = vadd.f32 %v763, 1.0
  %v796 = vadd.f32 %v764, 1.0
  %v797 = vmul.f32 %v541, %v765
  %v798 = vmul.f32 %v542, %v766
  %v799 = vmul.f32 %v543, %v767
  %v800 = vmul.f32 %v544, %v768
  %v801 = vmul.f32 %v545, %v769
  %v802 = vmul.f32 %v546, %v770
  %v803 = vmul.f32 %v547, %v771
  %v804 = vmul.f32 %v548, %v772
  %v805 = vmul.f32 %v549, %v773
  %v806 = vmul.f32 %v550, %v774
  %v807 = vmul.f32 %v551, %v775
  %v808 = vmul.f32 %v552, %v776
  %v809 = vmul.f32 %v553, %v777
  %v810 = vmul.f32 %v554, %v778
  %v811 = vmul.f32 %v555, %v779
  %v812 = vmul.f32 %v556, %v780
  %v813 = vmul.f32 %v557, %v781
  %v814 = vmul.f32 %v558, %v782
  %v815 = vmul.f32 %v559, %v783
  %v816 = vmul.f32 %v560, %v784
  %v817 = vmul.f32 %v561, %v785
  %v818 = vmul.f32 %v562, %v786
  %v819 = vmul.f32 %v563, %v787
  %v820 = vmul.f32 %v564, %v788
  %v821 = vmul.f32 %v565, %v789
  %v822 = vmul.f32 %v566, %v790
  %v823 = vmul.f32 %v567, %v791
  %v824 = vmul.f32 %v568, %v792
  %v825 = vmul.f32 %v569, %v793
  %v826 = vmul.f32 %v570, %v794
  %v827 = vmul.f32 %v571, %v795
  %v828 = vmul.f32 %v572, %v796
  %v829 = vpack.c.bf16 %v798, %v797
  %v830 = vpack.c.bf16 %v800, %v799
  %v831 = vpack.c.bf16 %v802, %v801
  %v832 = vpack.c.bf16 %v804, %v803
  %v833 = vpack.c.bf16 %v806, %v805
  %v834 = vpack.c.bf16 %v808, %v807
  %v835 = vpack.c.bf16 %v810, %v809
  %v836 = vpack.c.bf16 %v812, %v811
  %v837 = vpack.c.bf16 %v814, %v813
  %v838 = vpack.c.bf16 %v816, %v815
  %v839 = vpack.c.bf16 %v818, %v817
  %v840 = vpack.c.bf16 %v820, %v819
  %v841 = vpack.c.bf16 %v822, %v821
  %v842 = vpack.c.bf16 %v824, %v823
  %v843 = vpack.c.bf16 %v826, %v825
  %v844 = vpack.c.bf16 %v828, %v827
  %845 = vst [vmem:[%s5] sm:$0xff] %v829
  %846 = vst [vmem:[%s5 + $0x8] sm:$0xff] %v830
  %847 = vst [vmem:[%s5 + $0x10] sm:$0xff] %v831
  %848 = vst [vmem:[%s5 + $0x18] sm:$0xff] %v832
  %849 = vst [vmem:[%s5 + $0x20] sm:$0xff] %v833
  %850 = vst [vmem:[%s5 + $0x28] sm:$0xff] %v834
  %851 = vst [vmem:[%s5 + $0x30] sm:$0xff] %v835
  %852 = vst [vmem:[%s5 + $0x38] sm:$0xff] %v836
  %853 = vst [vmem:[%s5 + $0x40] sm:$0xff] %v837
  %854 = vst [vmem:[%s5 + $0x48] sm:$0xff] %v838
  %855 = vst [vmem:[%s5 + $0x50] sm:$0xff] %v839
  %856 = vst [vmem:[%s5 + $0x58] sm:$0xff] %v840
  %857 = vst [vmem:[%s5 + $0x60] sm:$0xff] %v841
  %858 = vst [vmem:[%s5 + $0x68] sm:$0xff] %v842
  %859 = vst [vmem:[%s5 + $0x70] sm:$0xff] %v843
  %860 = vst [vmem:[%s5 + $0x78] sm:$0xff] %v844
  // Predicated region
  $region22: #{gpt_forward.14} parent=0 // pred_check
    _
  $region23: #{gpt_forward.14} parent=0 // pred_check_branch
    %862 = sbr.rel (0) target = $region25
  $region24: #{gpt_forward.14} parent=0 // pred_region
    _
  $region25: #{gpt_forward.14} parent=0 // pred_fallthru
    _
  // Predicated region
  $region26: #{gpt_forward.14} parent=0 // pred_check
    _
  $region27: #{gpt_forward.14} parent=0 // pred_check_branch
    %864 = sbr.rel (0) target = $region29
  $region28: #{gpt_forward.14} parent=0 // pred_region
    _
  $region29: #{gpt_forward.14} parent=0 // pred_fallthru
    _

// kernel: gpt_forward.11
$region0: #{gpt_forward.11}
  #allocation0 [shape = 'u32[]', space=smem, size = 0x4, offset = 0x4, fixed_abs, tag = 'smem constant byte address 0x4 - core index']
  #allocation1 [shape = 'u32[72,128]{1,0:T(1,128)}', space=vmem, size = 0x9000, scoped, tag = 'internal scratch']
  %s0 = inlined_call_operand.vmem [shape: f32[64,128], index: 0, kind: input, shape index: {}]
  %s1 = inlined_call_operand.vmem [shape: bf16[128,384], index: 1, kind: input, shape index: {}]
  %s2 = inlined_call_operand.vmem [shape: f32[1,128], index: 2, kind: input, shape index: {}]
  %s3 = inlined_call_operand.vmem [shape: f32[1,128], index: 3, kind: input, shape index: {}]
  %s4 = inlined_call_operand.vmem [shape: f32[1,384], index: 4, kind: input, shape index: {}]
  %s5 = inlined_call_operand.vmem [shape: bf16[64,384], index: 5, kind: output, shape index: {}]
  %s6 = sld [smem:[#allocation0]]
  $region30: #{gpt_forward.11} parent=0
    _
  %s8 = ssub.s32 1, %s6
  %s9 = scalar_select 0, %s8, %s6
  // Predicated region
  $region2: #{gpt_forward.11} parent=0 // pred_check
    _
  $region3: #{gpt_forward.11} parent=0 // pred_check_branch
    %11 = sbr.rel (0) target = $region5
  $region4: #{gpt_forward.11} parent=0 // pred_region
    _
  $region5: #{gpt_forward.11} parent=0 // pred_fallthru
    _
  // Predicated region
  $region6: #{gpt_forward.11} parent=0 // pred_check
    _
  $region7: #{gpt_forward.11} parent=0 // pred_check_branch
    %13 = sbr.rel (0) target = $region9
  $region8: #{gpt_forward.11} parent=0 // pred_region
    _
  $region9: #{gpt_forward.11} parent=0 // pred_fallthru
    _
  // Predicated region
  $region10: #{gpt_forward.11} parent=0 // pred_check
    _
  $region11: #{gpt_forward.11} parent=0 // pred_check_branch
    %15 = sbr.rel (0) target = $region13
  $region12: #{gpt_forward.11} parent=0 // pred_region
    _
  $region13: #{gpt_forward.11} parent=0 // pred_fallthru
    _
  // Predicated region
  $region14: #{gpt_forward.11} parent=0 // pred_check
    _
  $region15: #{gpt_forward.11} parent=0 // pred_check_branch
    %17 = sbr.rel (0) target = $region17
  $region16: #{gpt_forward.11} parent=0 // pred_region
    _
  $region17: #{gpt_forward.11} parent=0 // pred_fallthru
    _
  // Predicated region
  $region18: #{gpt_forward.11} parent=0 // pred_check
    _
  $region19: #{gpt_forward.11} parent=0 // pred_check_branch
    %19 = sbr.rel (0) target = $region21
  $region20: #{gpt_forward.11} parent=0 // pred_region
    _
  $region21: #{gpt_forward.11} parent=0 // pred_fallthru
    _
  %v20 = vld [vmem:[%s0] sm:$0xff]
  %v21 = vld [vmem:[%s0 + $0x8] sm:$0xff]
  %v22 = vld [vmem:[%s0 + $0x10] sm:$0xff]
  %v23 = vld [vmem:[%s0 + $0x18] sm:$0xff]
  %v24 = vld [vmem:[%s0 + $0x20] sm:$0xff]
  %v25 = vld [vmem:[%s0 + $0x28] sm:$0xff]
  %v26 = vld [vmem:[%s0 + $0x30] sm:$0xff]
  %v27 = vld [vmem:[%s0 + $0x38] sm:$0xff]
  %28 = vadd.xlane.f32.xlu0 %v20
  %v29 = vpop.xlane.xlu0 %28
  %30 = vadd.xlane.f32.xlu0 %v21
  %v31 = vpop.xlane.xlu0 %30
  %32 = vadd.xlane.f32.xlu0 %v22
  %v33 = vpop.xlane.xlu0 %32
  %34 = vadd.xlane.f32.xlu0 %v23
  %v35 = vpop.xlane.xlu0 %34
  %36 = vadd.xlane.f32.xlu0 %v24
  %v37 = vpop.xlane.xlu0 %36
  %38 = vadd.xlane.f32.xlu0 %v25
  %v39 = vpop.xlane.xlu0 %38
  %40 = vadd.xlane.f32.xlu0 %v26
  %v41 = vpop.xlane.xlu0 %40
  %42 = vadd.xlane.f32.xlu0 %v27
  %v43 = vpop.xlane.xlu0 %42
  %v44 = vrcp.pop 128.0
  %v45 = vmul.f32 128.0, %v44
  %v46 = vsub.f32 1.0, %v45
  %v47 = vmul.f32 %v44, %v46
  %v48 = vadd.f32 %v44, %v47
  %vm49 = vweird.f32 %v44
  %v50 = vsel %vm49, %v44, %v48
  %v51 = vmul.f32 %v29, %v50
  %v52 = vmul.f32 %v31, %v50
  %v53 = vmul.f32 %v33, %v50
  %v54 = vmul.f32 %v35, %v50
  %v55 = vmul.f32 %v37, %v50
  %v56 = vmul.f32 %v39, %v50
  %v57 = vmul.f32 %v41, %v50
  %v58 = vmul.f32 %v43, %v50
  %v59 = vsub.f32 %v20, %v51
  %v60 = vsub.f32 %v21, %v52
  %v61 = vsub.f32 %v22, %v53
  %v62 = vsub.f32 %v23, %v54
  %v63 = vsub.f32 %v24, %v55
  %v64 = vsub.f32 %v25, %v56
  %v65 = vsub.f32 %v26, %v57
  %v66 = vsub.f32 %v27, %v58
  %v67 = vmul.f32 %v59, %v59
  %v68 = vmul.f32 %v60, %v60
  %v69 = vmul.f32 %v61, %v61
  %v70 = vmul.f32 %v62, %v62
  %v71 = vmul.f32 %v63, %v63
  %v72 = vmul.f32 %v64, %v64
  %v73 = vmul.f32 %v65, %v65
  %v74 = vmul.f32 %v66, %v66
  %75 = vadd.xlane.f32.xlu0 %v67
  %v76 = vpop.xlane.xlu0 %75
  %77 = vadd.xlane.f32.xlu0 %v68
  %v78 = vpop.xlane.xlu0 %77
  %79 = vadd.xlane.f32.xlu0 %v69
  %v80 = vpop.xlane.xlu0 %79
  %81 = vadd.xlane.f32.xlu0 %v70
  %v82 = vpop.xlane.xlu0 %81
  %83 = vadd.xlane.f32.xlu0 %v71
  %v84 = vpop.xlane.xlu0 %83
  %85 = vadd.xlane.f32.xlu0 %v72
  %v86 = vpop.xlane.xlu0 %85
  %87 = vadd.xlane.f32.xlu0 %v73
  %v88 = vpop.xlane.xlu0 %87
  %89 = vadd.xlane.f32.xlu0 %v74
  %v90 = vpop.xlane.xlu0 %89
  %v91 = vmul.f32 %v76, %v50
  %v92 = vmul.f32 %v78, %v50
  %v93 = vmul.f32 %v80, %v50
  %v94 = vmul.f32 %v82, %v50
  %v95 = vmul.f32 %v84, %v50
  %v96 = vmul.f32 %v86, %v50
  %v97 = vmul.f32 %v88, %v50
  %v98 = vmul.f32 %v90, %v50
  %v99 = vadd.f32 %v91, 1e-05
  %v100 = vadd.f32 %v92, 1e-05
  %v101 = vadd.f32 %v93, 1e-05
  %v102 = vadd.f32 %v94, 1e-05
  %v103 = vadd.f32 %v95, 1e-05
  %v104 = vadd.f32 %v96, 1e-05
  %v105 = vadd.f32 %v97, 1e-05
  %v106 = vadd.f32 %v98, 1e-05
  %v107 = vrsqrt.pop %v99
  %v108 = vmul.f32 %v107, %v99
  %v109 = vmul.f32 %v108, %v107
  %v110 = vmul.f32 0.5, %v109
  %v111 = vsub.f32 1.5, %v110
  %v112 = vmul.f32 %v107, %v111
  %vm113 = vweird.f32 %v99
  %vm114 = vweird.f32 %v107
  %vm115 = vmor %vm113, %vm114
  %v116 = vsel %vm115, %v107, %v112
  %v117 = vrsqrt.pop %v100
  %v118 = vmul.f32 %v117, %v100
  %v119 = vmul.f32 %v118, %v117
  %v120 = vmul.f32 0.5, %v119
  %v121 = vsub.f32 1.5, %v120
  %v122 = vmul.f32 %v117, %v121
  %vm123 = vweird.f32 %v100
  %vm124 = vweird.f32 %v117
  %vm125 = vmor %vm123, %vm124
  %v126 = vsel %vm125, %v117, %v122
  %v127 = vrsqrt.pop %v101
  %v128 = vmul.f32 %v127, %v101
  %v129 = vmul.f32 %v128, %v127
  %v130 = vmul.f32 0.5, %v129
  %v131 = vsub.f32 1.5, %v130
  %v132 = vmul.f32 %v127, %v131
  %vm133 = vweird.f32 %v101
  %vm134 = vweird.f32 %v127
  %vm135 = vmor %vm133, %vm134
  %v136 = vsel %vm135, %v127, %v132
  %v137 = vrsqrt.pop %v102
  %v138 = vmul.f32 %v137, %v102
  %v139 = vmul.f32 %v138, %v137
  %v140 = vmul.f32 0.5, %v139
  %v141 = vsub.f32 1.5, %v140
  %v142 = vmul.f32 %v137, %v141
  %vm143 = vweird.f32 %v102
  %vm144 = vweird.f32 %v137
  %vm145 = vmor %vm143, %vm144
  %v146 = vsel %vm145, %v137, %v142
  %v147 = vrsqrt.pop %v103
  %v148 = vmul.f32 %v147, %v103
  %v149 = vmul.f32 %v148, %v147
  %v150 = vmul.f32 0.5, %v149
  %v151 = vsub.f32 1.5, %v150
  %v152 = vmul.f32 %v147, %v151
  %vm153 = vweird.f32 %v103
  %vm154 = vweird.f32 %v147
  %vm155 = vmor %vm153, %vm154
  %v156 = vsel %vm155, %v147, %v152
  %v157 = vrsqrt.pop %v104
  %v158 = vmul.f32 %v157, %v104
  %v159 = vmul.f32 %v158, %v157
  %v160 = vmul.f32 0.5, %v159
  %v161 = vsub.f32 1.5, %v160
  %v162 = vmul.f32 %v157, %v161
  %vm163 = vweird.f32 %v104
  %vm164 = vweird.f32 %v157
  %vm165 = vmor %vm163, %vm164
  %v166 = vsel %vm165, %v157, %v162
  %v167 = vrsqrt.pop %v105
  %v168 = vmul.f32 %v167, %v105
  %v169 = vmul.f32 %v168, %v167
  %v170 = vmul.f32 0.5, %v169
  %v171 = vsub.f32 1.5, %v170
  %v172 = vmul.f32 %v167, %v171
  %vm173 = vweird.f32 %v105
  %vm174 = vweird.f32 %v167
  %vm175 = vmor %vm173, %vm174
  %v176 = vsel %vm175, %v167, %v172
  %v177 = vrsqrt.pop %v106
  %v178 = vmul.f32 %v177, %v106
  %v179 = vmul.f32 %v178, %v177
  %v180 = vmul.f32 0.5, %v179
  %v181 = vsub.f32 1.5, %v180
  %v182 = vmul.f32 %v177, %v181
  %vm183 = vweird.f32 %v106
  %vm184 = vweird.f32 %v177
  %vm185 = vmor %vm183, %vm184
  %v186 = vsel %vm185, %v177, %v182
  %v187 = vmul.f32 %v59, %v116
  %v188 = vmul.f32 %v60, %v126
  %v189 = vmul.f32 %v61, %v136
  %v190 = vmul.f32 %v62, %v146
  %v191 = vmul.f32 %v63, %v156
  %v192 = vmul.f32 %v64, %v166
  %v193 = vmul.f32 %v65, %v176
  %v194 = vmul.f32 %v66, %v186
  %v195 = vld [vmem:[%s2] sm:$0x1]
  %v197 = vperm.slane %v195, 0
  %v199 = vmul.f32 %v187, %v197
  %v200 = vmul.f32 %v188, %v197
  %v201 = vmul.f32 %v189, %v197
  %v202 = vmul.f32 %v190, %v197
  %v203 = vmul.f32 %v191, %v197
  %v204 = vmul.f32 %v192, %v197
  %v205 = vmul.f32 %v193, %v197
  %v206 = vmul.f32 %v194, %v197
  %v207 = vld [vmem:[%s3] sm:$0x1]
  %v209 = vperm.slane %v207, 0
  %v211 = vadd.f32 %v199, %v209
  %v212 = vadd.f32 %v200, %v209
  %v213 = vadd.f32 %v201, %v209
  %v214 = vadd.f32 %v202, %v209
  %v215 = vadd.f32 %v203, %v209
  %v216 = vadd.f32 %v204, %v209
  %v217 = vadd.f32 %v205, %v209
  %v218 = vadd.f32 %v206, %v209
  %v219 = vpack.c.bf16 %v212, %v211
  %v220 = vpack.c.bf16 %v214, %v213
  %v221 = vpack.c.bf16 %v216, %v215
  %v222 = vpack.c.bf16 %v218, %v217
  %v223 = vld [vmem:[%s1] sm:$0xff]
  %v224 = vld [vmem:[%s1 + $0x8] sm:$0xf]
  %v225 = vld [vmem:[%s1 + $0xc] sm:$0xff]
  %v226 = vld [vmem:[%s1 + $0x14] sm:$0xf]
  %v227 = vld [vmem:[%s1 + $0x18] sm:$0xff]
  %v228 = vld [vmem:[%s1 + $0x20] sm:$0xf]
  %v229 = vld [vmem:[%s1 + $0x24] sm:$0xff]
  %v230 = vld [vmem:[%s1 + $0x2c] sm:$0xf]
  %v231 = vld [vmem:[%s1 + $0x30] sm:$0xff]
  %v232 = vld [vmem:[%s1 + $0x38] sm:$0xf]
  %v233 = vld [vmem:[%s1 + $0x3c] sm:$0xff]
  %v234 = vld [vmem:[%s1 + $0x44] sm:$0xf]
  %v235 = vld [vmem:[%s1 + $0x48] sm:$0xff]
  %v236 = vld [vmem:[%s1 + $0x50] sm:$0xf]
  %v237 = vld [vmem:[%s1 + $0x54] sm:$0xff]
  %v238 = vld [vmem:[%s1 + $0x5c] sm:$0xf]
  %v239 = vld [vmem:[%s1 + $0x60] sm:$0xff]
  %v240 = vld [vmem:[%s1 + $0x68] sm:$0xf]
  %v241 = vld [vmem:[%s1 + $0x6c] sm:$0xff]
  %v242 = vld [vmem:[%s1 + $0x74] sm:$0xf]
  %v243 = vld [vmem:[%s1 + $0x78] sm:$0xff]
  %v244 = vld [vmem:[%s1 + $0x80] sm:$0xf]
  %v245 = vld [vmem:[%s1 + $0x84] sm:$0xff]
  %v246 = vld [vmem:[%s1 + $0x8c] sm:$0xf]
  %v247 = vld [vmem:[%s1 + $0x90] sm:$0xff]
  %v248 = vld [vmem:[%s1 + $0x98] sm:$0xf]
  %v249 = vld [vmem:[%s1 + $0x9c] sm:$0xff]
  %v250 = vld [vmem:[%s1 + $0xa4] sm:$0xf]
  %v251 = vld [vmem:[%s1 + $0xa8] sm:$0xff]
  %v252 = vld [vmem:[%s1 + $0xb0] sm:$0xf]
  %v253 = vld [vmem:[%s1 + $0xb4] sm:$0xff]
  %v254 = vld [vmem:[%s1 + $0xbc] sm:$0xf]
  %v255 = vld [vmem:[%s4] sm:$0x7]
  %v257 = vperm.slane %v255, 0
  %v258 = vperm.slane %v255, 1
  %v259 = vperm.slane %v255, 2
  %v295 = vunpack.c.l.b16 %v223
  %v296 = vunpack.c.h.b16 %v223
  %v297 = vunpack.c.l.b16 %v224
  %v298 = vunpack.c.l.b16 %v225
  %v299 = vunpack.c.h.b16 %v225
  %v300 = vunpack.c.l.b16 %v226
  %v301 = vunpack.c.l.b16 %v227
  %v302 = vunpack.c.h.b16 %v227
  %v303 = vunpack.c.l.b16 %v228
  %v304 = vunpack.c.l.b16 %v229
  %v305 = vunpack.c.h.b16 %v229
  %v306 = vunpack.c.l.b16 %v230
  %v307 = vunpack.c.l.b16 %v231
  %v308 = vunpack.c.h.b16 %v231
  %v309 = vunpack.c.l.b16 %v232
  %v310 = vunpack.c.l.b16 %v233
  %v311 = vunpack.c.h.b16 %v233
  %v312 = vunpack.c.l.b16 %v234
  %v313 = vunpack.c.l.b16 %v235
  %v314 = vunpack.c.h.b16 %v235
  %v315 = vunpack.c.l.b16 %v236
  %v316 = vunpack.c.l.b16 %v237
  %v317 = vunpack.c.h.b16 %v237
  %v318 = vunpack.c.l.b16 %v238
  %v319 = vunpack.c.l.b16 %v239
  %v320 = vunpack.c.h.b16 %v239
  %v321 = vunpack.c.l.b16 %v240
  %v322 = vunpack.c.l.b16 %v241
  %v323 = vunpack.c.h.b16 %v241
  %v324 = vunpack.c.l.b16 %v242
  %v325 = vunpack.c.l.b16 %v243
  %v326 = vunpack.c.h.b16 %v243
  %v327 = vunpack.c.l.b16 %v244
  %v328 = vunpack.c.l.b16 %v245
  %v329 = vunpack.c.h.b16 %v245
  %v330 = vunpack.c.l.b16 %v246
  %v331 = vunpack.c.l.b16 %v247
  %v332 = vunpack.c.h.b16 %v247
  %v333 = vunpack.c.l.b16 %v248
  %v334 = vunpack.c.l.b16 %v249
  %v335 = vunpack.c.h.b16 %v249
  %v336 = vunpack.c.l.b16 %v250
  %v337 = vunpack.c.l.b16 %v251
  %v338 = vunpack.c.h.b16 %v251
  %v339 = vunpack.c.l.b16 %v252
  %v340 = vunpack.c.l.b16 %v253
  %v341 = vunpack.c.h.b16 %v253
  %v342 = vunpack.c.l.b16 %v254
  %v343 = vpack.c.b16 %v298, %v295
  %v344 = vpack.c.b16 %v299, %v296
  %v345 = vpack.c.b16 %v300, %v297
  %v346 = vpack.c.b16 %v304, %v301
  %v347 = vpack.c.b16 %v305, %v302
  %v348 = vpack.c.b16 %v306, %v303
  %v349 = vpack.c.b16 %v310, %v307
  %v350 = vpack.c.b16 %v311, %v308
  %v351 = vpack.c.b16 %v312, %v309
  %v352 = vpack.c.b16 %v316, %v313
  %v353 = vpack.c.b16 %v317, %v314
  %v354 = vpack.c.b16 %v318, %v315
  %v355 = vpack.c.b16 %v322, %v319
  %v356 = vpack.c.b16 %v323, %v320
  %v357 = vpack.c.b16 %v324, %v321
  %v358 = vpack.c.b16 %v328, %v325
  %v359 = vpack.c.b16 %v329, %v326
  %v360 = vpack.c.b16 %v330, %v327
  %v361 = vpack.c.b16 %v334, %v331
  %v362 = vpack.c.b16 %v335, %v332
  %v363 = vpack.c.b16 %v336, %v333
  %v364 = vpack.c.b16 %v340, %v337
  %v365 = vpack.c.b16 %v341, %v338
  %v366 = vpack.c.b16 %v342, %v339
  %391 = vmatpush.bf16.msra.mxu0 %v364
  %392 = vmatpush.bf16.msra.mxu0 %v361
  %393 = vmatpush.bf16.msra.mxu0 %v358
  %394 = vmatpush.bf16.msra.mxu0 %v355
  %395 = vmatpush.bf16.msra.mxu0 %v352
  %396 = vmatpush.bf16.msra.mxu0 %v349
  %397 = vmatpush.bf16.msra.mxu0 %v346
  %398 = vmatpush.bf16.msra.mxu0 %v343
  %399 = vmatmul.bf16.gmra.mxu0 %v219
  %v400 = vpop.f32.mrf.mxu0
  %v401 = vadd.f32 %v257, %v400
  %v402 = vpop.f32.mrf.mxu0
  %v403 = vadd.f32 %v257, %v402
  %404 = vmatmul.bf16.gmra.mxu0 %v220
  %v405 = vpop.f32.mrf.mxu0
  %v406 = vadd.f32 %v257, %v405
  %v407 = vpop.f32.mrf.mxu0
  %v408 = vadd.f32 %v257, %v407
  %409 = vmatmul.bf16.gmra.mxu0 %v221
  %v410 = vpop.f32.mrf.mxu0
  %v411 = vadd.f32 %v257, %v410
  %v412 = vpop.f32.mrf.mxu0
  %v413 = vadd.f32 %v257, %v412
  %414 = vmatmul.bf16.gmra.mxu0 %v222
  %v415 = vpop.f32.mrf.mxu0
  %v416 = vadd.f32 %v257, %v415
  %v417 = vpop.f32.mrf.mxu0
  %v418 = vadd.f32 %v257, %v417
  %419 = vdwg.mxu0
  %420 = vmatpush.bf16.msra.mxu0 %v365
  %421 = vmatpush.bf16.msra.mxu0 %v362
  %422 = vmatpush.bf16.msra.mxu0 %v359
  %423 = vmatpush.bf16.msra.mxu0 %v356
  %424 = vmatpush.bf16.msra.mxu0 %v353
  %425 = vmatpush.bf16.msra.mxu0 %v350
  %426 = vmatpush.bf16.msra.mxu0 %v347
  %427 = vmatpush.bf16.msra.mxu0 %v344
  %428 = vmatmul.bf16.gmra.mxu0 %v219
  %v429 = vpop.f32.mrf.mxu0
  %v430 = vadd.f32 %v258, %v429
  %v431 = vpop.f32.mrf.mxu0
  %v432 = vadd.f32 %v258, %v431
  %433 = vmatmul.bf16.gmra.mxu0 %v220
  %v434 = vpop.f32.mrf.mxu0
  %v435 = vadd.f32 %v258, %v434
  %v436 = vpop.f32.mrf.mxu0
  %v437 = vadd.f32 %v258, %v436
  %438 = vmatmul.bf16.gmra.mxu0 %v221
  %v439 = vpop.f32.mrf.mxu0
  %v440 = vadd.f32 %v258, %v439
  %v441 = vpop.f32.mrf.mxu0
  %v442 = vadd.f32 %v258, %v441
  %443 = vmatmul.bf16.gmra.mxu0 %v222
  %v444 = vpop.f32.mrf.mxu0
  %v445 = vadd.f32 %v258, %v444
  %v446 = vpop.f32.mrf.mxu0
  %v447 = vadd.f32 %v258, %v446
  %448 = vdwg.mxu0
  %449 = vmatpush.bf16.msra.mxu0 %v366
  %450 = vmatpush.bf16.msra.mxu0 %v363
  %451 = vmatpush.bf16.msra.mxu0 %v360
  %452 = vmatpush.bf16.msra.mxu0 %v357
  %453 = vmatpush.bf16.msra.mxu0 %v354
  %454 = vmatpush.bf16.msra.mxu0 %v351
  %455 = vmatpush.bf16.msra.mxu0 %v348
  %456 = vmatpush.bf16.msra.mxu0 %v345
  %457 = vmatmul.bf16.gmra.mxu0 %v219
  %v458 = vpop.f32.mrf.mxu0
  %v459 = vadd.f32 %v259, %v458
  %v460 = vpop.f32.mrf.mxu0
  %v461 = vadd.f32 %v259, %v460
  %462 = vmatmul.bf16.gmra.mxu0 %v220
  %v463 = vpop.f32.mrf.mxu0
  %v464 = vadd.f32 %v259, %v463
  %v465 = vpop.f32.mrf.mxu0
  %v466 = vadd.f32 %v259, %v465
  %467 = vmatmul.bf16.gmra.mxu0 %v221
  %v468 = vpop.f32.mrf.mxu0
  %v469 = vadd.f32 %v259, %v468
  %v470 = vpop.f32.mrf.mxu0
  %v471 = vadd.f32 %v259, %v470
  %472 = vmatmul.bf16.gmra.mxu0 %v222
  %v473 = vpop.f32.mrf.mxu0
  %v474 = vadd.f32 %v259, %v473
  %v475 = vpop.f32.mrf.mxu0
  %v476 = vadd.f32 %v259, %v475
  %477 = vdwg.mxu0
  %v478 = vpack.c.bf16 %v430, %v401
  %v479 = vpack.c.bf16 %v459, %v459
  %v480 = vpack.c.bf16 %v432, %v403
  %v481 = vpack.c.bf16 %v461, %v461
  %v482 = vpack.c.bf16 %v435, %v406
  %v483 = vpack.c.bf16 %v464, %v464
  %v484 = vpack.c.bf16 %v437, %v408
  %v485 = vpack.c.bf16 %v466, %v466
  %v486 = vpack.c.bf16 %v440, %v411
  %v487 = vpack.c.bf16 %v469, %v469
  %v488 = vpack.c.bf16 %v442, %v413
  %v489 = vpack.c.bf16 %v471, %v471
  %v490 = vpack.c.bf16 %v445, %v416
  %v491 = vpack.c.bf16 %v474, %v474
  %v492 = vpack.c.bf16 %v447, %v418
  %v493 = vpack.c.bf16 %v476, %v476
  %494 = vst [vmem:[%s5] sm:$0xff] %v478
  %495 = vst [vmem:[%s5 + $0x8] sm:$0xf] %v479
  %496 = vst [vmem:[%s5 + $0xc] sm:$0xff] %v480
  %497 = vst [vmem:[%s5 + $0x14] sm:$0xf] %v481
  %498 = vst [vmem:[%s5 + $0x18] sm:$0xff] %v482
  %499 = vst [vmem:[%s5 + $0x20] sm:$0xf] %v483
  %500 = vst [vmem:[%s5 + $0x24] sm:$0xff] %v484
  %501 = vst [vmem:[%s5 + $0x2c] sm:$0xf] %v485
  %502 = vst [vmem:[%s5 + $0x30] sm:$0xff] %v486
  %503 = vst [vmem:[%s5 + $0x38] sm:$0xf] %v487
  %504 = vst [vmem:[%s5 + $0x3c] sm:$0xff] %v488
  %505 = vst [vmem:[%s5 + $0x44] sm:$0xf] %v489
  %506 = vst [vmem:[%s5 + $0x48] sm:$0xff] %v490
  %507 = vst [vmem:[%s5 + $0x50] sm:$0xf] %v491
  %508 = vst [vmem:[%s5 + $0x54] sm:$0xff] %v492
  %509 = vst [vmem:[%s5 + $0x5c] sm:$0xf] %v493
  // Predicated region
  $region22: #{gpt_forward.11} parent=0 // pred_check
    _
  $region23: #{gpt_forward.11} parent=0 // pred_check_branch
    %511 = sbr.rel (0) target = $region25
  $region24: #{gpt_forward.11} parent=0 // pred_region
    _
  $region25: #{gpt_forward.11} parent=0 // pred_fallthru
    _
  // Predicated region
  $region26: #{gpt_forward.11} parent=0 // pred_check
    _
  $region27: #{gpt_forward.11} parent=0 // pred_check_branch
    %513 = sbr.rel (0) target = $region29
  $region28: #{gpt_forward.11} parent=0 // pred_region
    _
  $region29: #{gpt_forward.11} parent=0 // pred_fallthru
    _

// kernel: gpt_forward.15
$region0: #{gpt_forward.15}
  #allocation0 [shape = 'u32[]', space=smem, size = 0x4, offset = 0x4, fixed_abs, tag = 'smem constant byte address 0x4 - core index']
  #allocation1 [shape = 'u32[72,128]{1,0:T(1,128)}', space=vmem, size = 0x9000, scoped, tag = 'internal scratch']
  %s0 = inlined_call_operand.vmem [shape: bf16[64,512], index: 0, kind: input, shape index: {}]
  %s1 = inlined_call_operand.vmem [shape: bf16[512,128], index: 1, kind: input, shape index: {}]
  %s2 = inlined_call_operand.vmem [shape: f32[1,128], index: 2, kind: input, shape index: {}]
  %s3 = inlined_call_operand.vmem [shape: f32[64,128], index: 3, kind: input, shape index: {}]
  %s4 = inlined_call_operand.vmem [shape: f32[64,128], index: 4, kind: output, shape index: {}]
  %s5 = sld [smem:[#allocation0]]
  $region26: #{gpt_forward.15} parent=0
    _
  %s7 = ssub.s32 1, %s5
  %s8 = scalar_select 0, %s7, %s5
  // Predicated region
  $region2: #{gpt_forward.15} parent=0 // pred_check
    _
  $region3: #{gpt_forward.15} parent=0 // pred_check_branch
    %10 = sbr.rel (0) target = $region5
  $region4: #{gpt_forward.15} parent=0 // pred_region
    _
  $region5: #{gpt_forward.15} parent=0 // pred_fallthru
    _
  // Predicated region
  $region6: #{gpt_forward.15} parent=0 // pred_check
    _
  $region7: #{gpt_forward.15} parent=0 // pred_check_branch
    %12 = sbr.rel (0) target = $region9
  $region8: #{gpt_forward.15} parent=0 // pred_region
    _
  $region9: #{gpt_forward.15} parent=0 // pred_fallthru
    _
  // Predicated region
  $region10: #{gpt_forward.15} parent=0 // pred_check
    _
  $region11: #{gpt_forward.15} parent=0 // pred_check_branch
    %14 = sbr.rel (0) target = $region13
  $region12: #{gpt_forward.15} parent=0 // pred_region
    _
  $region13: #{gpt_forward.15} parent=0 // pred_fallthru
    _
  // Predicated region
  $region14: #{gpt_forward.15} parent=0 // pred_check
    _
  $region15: #{gpt_forward.15} parent=0 // pred_check_branch
    %16 = sbr.rel (0) target = $region17
  $region16: #{gpt_forward.15} parent=0 // pred_region
    _
  $region17: #{gpt_forward.15} parent=0 // pred_fallthru
    _
  %v17 = vld [vmem:[%s0] sm:$0xff]
  %v18 = vld [vmem:[%s0 + $0x8] sm:$0xff]
  %v19 = vld [vmem:[%s0 + $0x10] sm:$0xff]
  %v20 = vld [vmem:[%s0 + $0x18] sm:$0xff]
  %v21 = vld [vmem:[%s0 + $0x20] sm:$0xff]
  %v22 = vld [vmem:[%s0 + $0x28] sm:$0xff]
  %v23 = vld [vmem:[%s0 + $0x30] sm:$0xff]
  %v24 = vld [vmem:[%s0 + $0x38] sm:$0xff]
  %v25 = vld [vmem:[%s0 + $0x40] sm:$0xff]
  %v26 = vld [vmem:[%s0 + $0x48] sm:$0xff]
  %v27 = vld [vmem:[%s0 + $0x50] sm:$0xff]
  %v28 = vld [vmem:[%s0 + $0x58] sm:$0xff]
  %v29 = vld [vmem:[%s0 + $0x60] sm:$0xff]
  %v30 = vld [vmem:[%s0 + $0x68] sm:$0xff]
  %v31 = vld [vmem:[%s0 + $0x70] sm:$0xff]
  %v32 = vld [vmem:[%s0 + $0x78] sm:$0xff]
  %v33 = vld [vmem:[%s1] sm:$0xf]
  %v34 = vld [vmem:[%s1 + $0x4] sm:$0xf]
  %v35 = vld [vmem:[%s1 + $0x8] sm:$0xf]
  %v36 = vld [vmem:[%s1 + $0xc] sm:$0xf]
  %v37 = vld [vmem:[%s1 + $0x10] sm:$0xf]
  %v38 = vld [vmem:[%s1 + $0x14] sm:$0xf]
  %v39 = vld [vmem:[%s1 + $0x18] sm:$0xf]
  %v40 = vld [vmem:[%s1 + $0x1c] sm:$0xf]
  %v41 = vld [vmem:[%s1 + $0x20] sm:$0xf]
  %v42 = vld [vmem:[%s1 + $0x24] sm:$0xf]
  %v43 = vld [vmem:[%s1 + $0x28] sm:$0xf]
  %v44 = vld [vmem:[%s1 + $0x2c] sm:$0xf]
  %v45 = vld [vmem:[%s1 + $0x30] sm:$0xf]
  %v46 = vld [vmem:[%s1 + $0x34] sm:$0xf]
  %v47 = vld [vmem:[%s1 + $0x38] sm:$0xf]
  %v48 = vld [vmem:[%s1 + $0x3c] sm:$0xf]
  %v49 = vld [vmem:[%s1 + $0x40] sm:$0xf]
  %v50 = vld [vmem:[%s1 + $0x44] sm:$0xf]
  %v51 = vld [vmem:[%s1 + $0x48] sm:$0xf]
  %v52 = vld [vmem:[%s1 + $0x4c] sm:$0xf]
  %v53 = vld [vmem:[%s1 + $0x50] sm:$0xf]
  %v54 = vld [vmem:[%s1 + $0x54] sm:$0xf]
  %v55 = vld [vmem:[%s1 + $0x58] sm:$0xf]
  %v56 = vld [vmem:[%s1 + $0x5c] sm:$0xf]
  %v57 = vld [vmem:[%s1 + $0x60] sm:$0xf]
  %v58 = vld [vmem:[%s1 + $0x64] sm:$0xf]
  %v59 = vld [vmem:[%s1 + $0x68] sm:$0xf]
  %v60 = vld [vmem:[%s1 + $0x6c] sm:$0xf]
  %v61 = vld [vmem:[%s1 + $0x70] sm:$0xf]
  %v62 = vld [vmem:[%s1 + $0x74] sm:$0xf]
  %v63 = vld [vmem:[%s1 + $0x78] sm:$0xf]
  %v64 = vld [vmem:[%s1 + $0x7c] sm:$0xf]
  %v65 = vld [vmem:[%s1 + $0x80] sm:$0xf]
  %v66 = vld [vmem:[%s1 + $0x84] sm:$0xf]
  %v67 = vld [vmem:[%s1 + $0x88] sm:$0xf]
  %v68 = vld [vmem:[%s1 + $0x8c] sm:$0xf]
  %v69 = vld [vmem:[%s1 + $0x90] sm:$0xf]
  %v70 = vld [vmem:[%s1 + $0x94] sm:$0xf]
  %v71 = vld [vmem:[%s1 + $0x98] sm:$0xf]
  %v72 = vld [vmem:[%s1 + $0x9c] sm:$0xf]
  %v73 = vld [vmem:[%s1 + $0xa0] sm:$0xf]
  %v74 = vld [vmem:[%s1 + $0xa4] sm:$0xf]
  %v75 = vld [vmem:[%s1 + $0xa8] sm:$0xf]
  %v76 = vld [vmem:[%s1 + $0xac] sm:$0xf]
  %v77 = vld [vmem:[%s1 + $0xb0] sm:$0xf]
  %v78 = vld [vmem:[%s1 + $0xb4] sm:$0xf]
  %v79 = vld [vmem:[%s1 + $0xb8] sm:$0xf]
  %v80 = vld [vmem:[%s1 + $0xbc] sm:$0xf]
  %v81 = vld [vmem:[%s1 + $0xc0] sm:$0xf]
  %v82 = vld [vmem:[%s1 + $0xc4] sm:$0xf]
  %v83 = vld [vmem:[%s1 + $0xc8] sm:$0xf]
  %v84 = vld [vmem:[%s1 + $0xcc] sm:$0xf]
  %v85 = vld [vmem:[%s1 + $0xd0] sm:$0xf]
  %v86 = vld [vmem:[%s1 + $0xd4] sm:$0xf]
  %v87 = vld [vmem:[%s1 + $0xd8] sm:$0xf]
  %v88 = vld [vmem:[%s1 + $0xdc] sm:$0xf]
  %v89 = vld [vmem:[%s1 + $0xe0] sm:$0xf]
  %v90 = vld [vmem:[%s1 + $0xe4] sm:$0xf]
  %v91 = vld [vmem:[%s1 + $0xe8] sm:$0xf]
  %v92 = vld [vmem:[%s1 + $0xec] sm:$0xf]
  %v93 = vld [vmem:[%s1 + $0xf0] sm:$0xf]
  %v94 = vld [vmem:[%s1 + $0xf4] sm:$0xf]
  %v95 = vld [vmem:[%s1 + $0xf8] sm:$0xf]
  %v96 = vld [vmem:[%s1 + $0xfc] sm:$0xf]
  %v97 = vld [vmem:[%s2] sm:$0x1]
  %v99 = vperm.slane %v97, 0
  %v117 = vunpack.c.l.b16 %v17
  %v118 = vunpack.c.h.b16 %v17
  %v119 = vunpack.c.l.b16 %v18
  %v120 = vunpack.c.h.b16 %v18
  %v121 = vunpack.c.l.b16 %v19
  %v122 = vunpack.c.h.b16 %v19
  %v123 = vunpack.c.l.b16 %v20
  %v124 = vunpack.c.h.b16 %v20
  %v125 = vunpack.c.l.b16 %v21
  %v126 = vunpack.c.h.b16 %v21
  %v127 = vunpack.c.l.b16 %v22
  %v128 = vunpack.c.h.b16 %v22
  %v129 = vunpack.c.l.b16 %v23
  %v130 = vunpack.c.h.b16 %v23
  %v131 = vunpack.c.l.b16 %v24
  %v132 = vunpack.c.h.b16 %v24
  %v133 = vunpack.c.l.b16 %v25
  %v134 = vunpack.c.h.b16 %v25
  %v135 = vunpack.c.l.b16 %v26
  %v136 = vunpack.c.h.b16 %v26
  %v137 = vunpack.c.l.b16 %v27
  %v138 = vunpack.c.h.b16 %v27
  %v139 = vunpack.c.l.b16 %v28
  %v140 = vunpack.c.h.b16 %v28
  %v141 = vunpack.c.l.b16 %v29
  %v142 = vunpack.c.h.b16 %v29
  %v143 = vunpack.c.l.b16 %v30
  %v144 = vunpack.c.h.b16 %v30
  %v145 = vunpack.c.l.b16 %v31
  %v146 = vunpack.c.h.b16 %v31
  %v147 = vunpack.c.l.b16 %v32
  %v148 = vunpack.c.h.b16 %v32
  %v149 = vpack.c.b16 %v121, %v117
  %v150 = vpack.c.b16 %v122, %v118
  %v151 = vpack.c.b16 %v123, %v119
  %v152 = vpack.c.b16 %v124, %v120
  %v153 = vpack.c.b16 %v129, %v125
  %v154 = vpack.c.b16 %v130, %v126
  %v155 = vpack.c.b16 %v131, %v127
  %v156 = vpack.c.b16 %v132, %v128
  %v157 = vpack.c.b16 %v137, %v133
  %v158 = vpack.c.b16 %v138, %v134
  %v159 = vpack.c.b16 %v139, %v135
  %v160 = vpack.c.b16 %v140, %v136
  %v161 = vpack.c.b16 %v145, %v141
  %v162 = vpack.c.b16 %v146, %v142
  %v163 = vpack.c.b16 %v147, %v143
  %v164 = vpack.c.b16 %v148, %v144
  %v245 = vunpack.c.l.b16 %v33
  %v246 = vunpack.c.l.b16 %v34
  %v247 = vunpack.c.l.b16 %v35
  %v248 = vunpack.c.l.b16 %v36
  %v249 = vunpack.c.l.b16 %v37
  %v250 = vunpack.c.l.b16 %v38
  %v251 = vunpack.c.l.b16 %v39
  %v252 = vunpack.c.l.b16 %v40
  %v253 = vunpack.c.l.b16 %v41
  %v254 = vunpack.c.l.b16 %v42
  %v255 = vunpack.c.l.b16 %v43
  %v256 = vunpack.c.l.b16 %v44
  %v257 = vunpack.c.l.b16 %v45
  %v258 = vunpack.c.l.b16 %v46
  %v259 = vunpack.c.l.b16 %v47
  %v260 = vunpack.c.l.b16 %v48
  %v261 = vunpack.c.l.b16 %v49
  %v262 = vunpack.c.l.b16 %v50
  %v263 = vunpack.c.l.b16 %v51
  %v264 = vunpack.c.l.b16 %v52
  %v265 = vunpack.c.l.b16 %v53
  %v266 = vunpack.c.l.b16 %v54
  %v267 = vunpack.c.l.b16 %v55
  %v268 = vunpack.c.l.b16 %v56
  %v269 = vunpack.c.l.b16 %v57
  %v270 = vunpack.c.l.b16 %v58
  %v271 = vunpack.c.l.b16 %v59
  %v272 = vunpack.c.l.b16 %v60
  %v273 = vunpack.c.l.b16 %v61
  %v274 = vunpack.c.l.b16 %v62
  %v275 = vunpack.c.l.b16 %v63
  %v276 = vunpack.c.l.b16 %v64
  %v277 = vunpack.c.l.b16 %v65
  %v278 = vunpack.c.l.b16 %v66
  %v279 = vunpack.c.l.b16 %v67
  %v280 = vunpack.c.l.b16 %v68
  %v281 = vunpack.c.l.b16 %v69
  %v282 = vunpack.c.l.b16 %v70
  %v283 = vunpack.c.l.b16 %v71
  %v284 = vunpack.c.l.b16 %v72
  %v285 = vunpack.c.l.b16 %v73
  %v286 = vunpack.c.l.b16 %v74
  %v287 = vunpack.c.l.b16 %v75
  %v288 = vunpack.c.l.b16 %v76
  %v289 = vunpack.c.l.b16 %v77
  %v290 = vunpack.c.l.b16 %v78
  %v291 = vunpack.c.l.b16 %v79
  %v292 = vunpack.c.l.b16 %v80
  %v293 = vunpack.c.l.b16 %v81
  %v294 = vunpack.c.l.b16 %v82
  %v295 = vunpack.c.l.b16 %v83
  %v296 = vunpack.c.l.b16 %v84
  %v297 = vunpack.c.l.b16 %v85
  %v298 = vunpack.c.l.b16 %v86
  %v299 = vunpack.c.l.b16 %v87
  %v300 = vunpack.c.l.b16 %v88
  %v301 = vunpack.c.l.b16 %v89
  %v302 = vunpack.c.l.b16 %v90
  %v303 = vunpack.c.l.b16 %v91
  %v304 = vunpack.c.l.b16 %v92
  %v305 = vunpack.c.l.b16 %v93
  %v306 = vunpack.c.l.b16 %v94
  %v307 = vunpack.c.l.b16 %v95
  %v308 = vunpack.c.l.b16 %v96
  %v309 = vpack.c.b16 %v246, %v245
  %v310 = vpack.c.b16 %v248, %v247
  %v311 = vpack.c.b16 %v250, %v249
  %v312 = vpack.c.b16 %v252, %v251
  %v313 = vpack.c.b16 %v254, %v253
  %v314 = vpack.c.b16 %v256, %v255
  %v315 = vpack.c.b16 %v258, %v257
  %v316 = vpack.c.b16 %v260, %v259
  %v317 = vpack.c.b16 %v262, %v261
  %v318 = vpack.c.b16 %v264, %v263
  %v319 = vpack.c.b16 %v266, %v265
  %v320 = vpack.c.b16 %v268, %v267
  %v321 = vpack.c.b16 %v270, %v269
  %v322 = vpack.c.b16 %v272, %v271
  %v323 = vpack.c.b16 %v274, %v273
  %v324 = vpack.c.b16 %v276, %v275
  %v325 = vpack.c.b16 %v278, %v277
  %v326 = vpack.c.b16 %v280, %v279
  %v327 = vpack.c.b16 %v282, %v281
  %v328 = vpack.c.b16 %v284, %v283
  %v329 = vpack.c.b16 %v286, %v285
  %v330 = vpack.c.b16 %v288, %v287
  %v331 = vpack.c.b16 %v290, %v289
  %v332 = vpack.c.b16 %v292, %v291
  %v333 = vpack.c.b16 %v294, %v293
  %v334 = vpack.c.b16 %v296, %v295
  %v335 = vpack.c.b16 %v298, %v297
  %v336 = vpack.c.b16 %v300, %v299
  %v337 = vpack.c.b16 %v302, %v301
  %v338 = vpack.c.b16 %v304, %v303
  %v339 = vpack.c.b16 %v306, %v305
  %v340 = vpack.c.b16 %v308, %v307
  %373 = vmatpush.bf16.msra.mxu0 %v316
  %374 = vmatpush.bf16.msra.mxu0 %v315
  %375 = vmatpush.bf16.msra.mxu0 %v314
  %376 = vmatpush.bf16.msra.mxu0 %v313
  %377 = vmatpush.bf16.msra.mxu0 %v312
  %378 = vmatpush.bf16.msra.mxu0 %v311
  %379 = vmatpush.bf16.msra.mxu0 %v310
  %380 = vmatpush.bf16.msra.mxu0 %v309
  %381 = vmatmul.bf16.gmra.mxu0 %v149
  %v382 = vpop.f32.mrf.mxu0
  %v383 = vadd.f32 %v99, %v382
  %v384 = vpop.f32.mrf.mxu0
  %v385 = vadd.f32 %v99, %v384
  %386 = vmatmul.bf16.gmra.mxu0 %v153
  %v387 = vpop.f32.mrf.mxu0
  %v388 = vadd.f32 %v99, %v387
  %v389 = vpop.f32.mrf.mxu0
  %v390 = vadd.f32 %v99, %v389
  %391 = vmatmul.bf16.gmra.mxu0 %v157
  %v392 = vpop.f32.mrf.mxu0
  %v393 = vadd.f32 %v99, %v392
  %v394 = vpop.f32.mrf.mxu0
  %v395 = vadd.f32 %v99, %v394
  %396 = vmatmul.bf16.gmra.mxu0 %v161
  %v397 = vpop.f32.mrf.mxu0
  %v398 = vadd.f32 %v99, %v397
  %v399 = vpop.f32.mrf.mxu0
  %v400 = vadd.f32 %v99, %v399
  %401 = vdwg.mxu0
  %402 = vmatpush.bf16.msra.mxu0 %v324
  %403 = vmatpush.bf16.msra.mxu0 %v323
  %404 = vmatpush.bf16.msra.mxu0 %v322
  %405 = vmatpush.bf16.msra.mxu0 %v321
  %406 = vmatpush.bf16.msra.mxu0 %v320
  %407 = vmatpush.bf16.msra.mxu0 %v319
  %408 = vmatpush.bf16.msra.mxu0 %v318
  %409 = vmatpush.bf16.msra.mxu0 %v317
  %410 = vmatmul.bf16.gmra.mxu0 %v150
  %v411 = vpop.f32.mrf.mxu0
  %v412 = vadd.f32 %v383, %v411
  %v413 = vpop.f32.mrf.mxu0
  %v414 = vadd.f32 %v385, %v413
  %415 = vmatmul.bf16.gmra.mxu0 %v154
  %v416 = vpop.f32.mrf.mxu0
  %v417 = vadd.f32 %v388, %v416
  %v418 = vpop.f32.mrf.mxu0
  %v419 = vadd.f32 %v390, %v418
  %420 = vmatmul.bf16.gmra.mxu0 %v158
  %v421 = vpop.f32.mrf.mxu0
  %v422 = vadd.f32 %v393, %v421
  %v423 = vpop.f32.mrf.mxu0
  %v424 = vadd.f32 %v395, %v423
  %425 = vmatmul.bf16.gmra.mxu0 %v162
  %v426 = vpop.f32.mrf.mxu0
  %v427 = vadd.f32 %v398, %v426
  %v428 = vpop.f32.mrf.mxu0
  %v429 = vadd.f32 %v400, %v428
  %430 = vdwg.mxu0
  %431 = vmatpush.bf16.msra.mxu0 %v332
  %432 = vmatpush.bf16.msra.mxu0 %v331
  %433 = vmatpush.bf16.msra.mxu0 %v330
  %434 = vmatpush.bf16.msra.mxu0 %v329
  %435 = vmatpush.bf16.msra.mxu0 %v328
  %436 = vmatpush.bf16.msra.mxu0 %v327
  %437 = vmatpush.bf16.msra.mxu0 %v326
  %438 = vmatpush.bf16.msra.mxu0 %v325
  %439 = vmatmul.bf16.gmra.mxu0 %v151
  %v440 = vpop.f32.mrf.mxu0
  %v441 = vadd.f32 %v412, %v440
  %v442 = vpop.f32.mrf.mxu0
  %v443 = vadd.f32 %v414, %v442
  %444 = vmatmul.bf16.gmra.mxu0 %v155
  %v445 = vpop.f32.mrf.mxu0
  %v446 = vadd.f32 %v417, %v445
  %v447 = vpop.f32.mrf.mxu0
  %v448 = vadd.f32 %v419, %v447
  %449 = vmatmul.bf16.gmra.mxu0 %v159
  %v450 = vpop.f32.mrf.mxu0
  %v451 = vadd.f32 %v422, %v450
  %v452 = vpop.f32.mrf.mxu0
  %v453 = vadd.f32 %v424, %v452
  %454 = vmatmul.bf16.gmra.mxu0 %v163
  %v455 = vpop.f32.mrf.mxu0
  %v456 = vadd.f32 %v427, %v455
  %v457 = vpop.f32.mrf.mxu0
  %v458 = vadd.f32 %v429, %v457
  %459 = vdwg.mxu0
  %460 = vmatpush.bf16.msra.mxu0 %v340
  %461 = vmatpush.bf16.msra.mxu0 %v339
  %462 = vmatpush.bf16.msra.mxu0 %v338
  %463 = vmatpush.bf16.msra.mxu0 %v337
  %464 = vmatpush.bf16.msra.mxu0 %v336
  %465 = vmatpush.bf16.msra.mxu0 %v335
  %466 = vmatpush.bf16.msra.mxu0 %v334
  %467 = vmatpush.bf16.msra.mxu0 %v333
  %468 = vmatmul.bf16.gmra.mxu0 %v152
  %v469 = vpop.f32.mrf.mxu0
  %v470 = vadd.f32 %v441, %v469
  %v471 = vpop.f32.mrf.mxu0
  %v472 = vadd.f32 %v443, %v471
  %473 = vmatmul.bf16.gmra.mxu0 %v156
  %v474 = vpop.f32.mrf.mxu0
  %v475 = vadd.f32 %v446, %v474
  %v476 = vpop.f32.mrf.mxu0
  %v477 = vadd.f32 %v448, %v476
  %478 = vmatmul.bf16.gmra.mxu0 %v160
  %v479 = vpop.f32.mrf.mxu0
  %v480 = vadd.f32 %v451, %v479
  %v481 = vpop.f32.mrf.mxu0
  %v482 = vadd.f32 %v453, %v481
  %483 = vmatmul.bf16.gmra.mxu0 %v164
  %v484 = vpop.f32.mrf.mxu0
  %v485 = vadd.f32 %v456, %v484
  %v486 = vpop.f32.mrf.mxu0
  %v487 = vadd.f32 %v458, %v486
  %488 = vdwg.mxu0
  %v489 = vld [vmem:[%s3] sm:$0xff]
  %v490 = vld [vmem:[%s3 + $0x8] sm:$0xff]
  %v491 = vld [vmem:[%s3 + $0x10] sm:$0xff]
  %v492 = vld [vmem:[%s3 + $0x18] sm:$0xff]
  %v493 = vld [vmem:[%s3 + $0x20] sm:$0xff]
  %v494 = vld [vmem:[%s3 + $0x28] sm:$0xff]
  %v495 = vld [vmem:[%s3 + $0x30] sm:$0xff]
  %v496 = vld [vmem:[%s3 + $0x38] sm:$0xff]
  %v497 = vadd.f32 %v470, %v489
  %v498 = vadd.f32 %v472, %v490
  %v499 = vadd.f32 %v475, %v491
  %v500 = vadd.f32 %v477, %v492
  %v501 = vadd.f32 %v480, %v493
  %v502 = vadd.f32 %v482, %v494
  %v503 = vadd.f32 %v485, %v495
  %v504 = vadd.f32 %v487, %v496
  %505 = vst [vmem:[%s4] sm:$0xff] %v497
  %506 = vst [vmem:[%s4 + $0x8] sm:$0xff] %v498
  %507 = vst [vmem:[%s4 + $0x10] sm:$0xff] %v499
  %508 = vst [vmem:[%s4 + $0x18] sm:$0xff] %v500
  %509 = vst [vmem:[%s4 + $0x20] sm:$0xff] %v501
  %510 = vst [vmem:[%s4 + $0x28] sm:$0xff] %v502
  %511 = vst [vmem:[%s4 + $0x30] sm:$0xff] %v503
  %512 = vst [vmem:[%s4 + $0x38] sm:$0xff] %v504
  // Predicated region
  $region18: #{gpt_forward.15} parent=0 // pred_check
    _
  $region19: #{gpt_forward.15} parent=0 // pred_check_branch
    %514 = sbr.rel (0) target = $region21
  $region20: #{gpt_forward.15} parent=0 // pred_region
    _
  $region21: #{gpt_forward.15} parent=0 // pred_fallthru
    _
  // Predicated region
  $region22: #{gpt_forward.15} parent=0 // pred_check
    _
  $region23: #{gpt_forward.15} parent=0 // pred_check_branch
    %516 = sbr.rel (0) target = $region25
  $region24: #{gpt_forward.15} parent=0 // pred_region
    _
  $region25: #{gpt_forward.15} parent=0 // pred_fallthru
    _

// kernel: gpt_forward.21
$region0: #{gpt_forward.21}
  #allocation0 [shape = 'u32[]', space=smem, size = 0x4, offset = 0x4, fixed_abs, tag = 'smem constant byte address 0x4 - core index']
  #allocation1 [shape = 'u32[72,128]{1,0:T(1,128)}', space=vmem, size = 0x9000, scoped, tag = 'internal scratch']
  %s0 = inlined_call_operand.vmem [shape: f32[64,128], index: 0, kind: input, shape index: {}]
  %s1 = inlined_call_operand.vmem [shape: bf16[256,128], index: 1, kind: input, shape index: {}]
  %s2 = inlined_call_operand.vmem [shape: f32[1,128], index: 2, kind: input, shape index: {}]
  %s3 = inlined_call_operand.vmem [shape: f32[1,128], index: 3, kind: input, shape index: {}]
  %s4 = inlined_call_operand.hbm [shape: f32[64,256], index: 4, kind: output, shape index: {}]
  %s5 = sld [smem:[#allocation0]]
  $region26: #{gpt_forward.21} parent=0
    _
  %s7 = ssub.s32 1, %s5
  %s8 = scalar_select 0, %s7, %s5
  $region1: #{gpt_forward.21} parent=0
    #allocation2 [shape = 'u8[65536]{0}', space=vmem, size = 0x10000, scoped, tag = 'output window, operand 0, single buffered']
    #allocation3 [shape = 's32[1]{0}', space=sflag, size = 0x4, scoped, tag = 'scoped memory for gpt_forward.21']
    %9 = vsyncpa [#allocation3], 0
    // Predicated region
    $region2: #{gpt_forward.21} parent=1 // pred_check
      _
    $region3: #{gpt_forward.21} parent=1 // pred_check_branch
      %11 = sbr.rel (0) target = $region5
    $region4: #{gpt_forward.21} parent=1 // pred_region
      _
    $region5: #{gpt_forward.21} parent=1 // pred_fallthru
      _
    // Predicated region
    $region6: #{gpt_forward.21} parent=1 // pred_check
      _
    $region7: #{gpt_forward.21} parent=1 // pred_check_branch
      %13 = sbr.rel (0) target = $region9
    $region8: #{gpt_forward.21} parent=1 // pred_region
      _
    $region9: #{gpt_forward.21} parent=1 // pred_fallthru
      _
    // Predicated region
    $region10: #{gpt_forward.21} parent=1 // pred_check
      _
    $region11: #{gpt_forward.21} parent=1 // pred_check_branch
      %15 = sbr.rel (0) target = $region13
    $region12: #{gpt_forward.21} parent=1 // pred_region
      _
    $region13: #{gpt_forward.21} parent=1 // pred_fallthru
      _
    // Predicated region
    $region14: #{gpt_forward.21} parent=1 // pred_check
      _
    $region15: #{gpt_forward.21} parent=1 // pred_check_branch
      %17 = sbr.rel (0) target = $region17
    $region16: #{gpt_forward.21} parent=1 // pred_region
      _
    $region17: #{gpt_forward.21} parent=1 // pred_fallthru
      _
    %v18 = vld [vmem:[%s0] sm:$0xff]
    %v19 = vld [vmem:[%s0 + $0x8] sm:$0xff]
    %v20 = vld [vmem:[%s0 + $0x10] sm:$0xff]
    %v21 = vld [vmem:[%s0 + $0x18] sm:$0xff]
    %v22 = vld [vmem:[%s0 + $0x20] sm:$0xff]
    %v23 = vld [vmem:[%s0 + $0x28] sm:$0xff]
    %v24 = vld [vmem:[%s0 + $0x30] sm:$0xff]
    %v25 = vld [vmem:[%s0 + $0x38] sm:$0xff]
    %26 = vadd.xlane.f32.xlu0 %v18
    %v27 = vpop.xlane.xlu0 %26
    %28 = vadd.xlane.f32.xlu0 %v19
    %v29 = vpop.xlane.xlu0 %28
    %30 = vadd.xlane.f32.xlu0 %v20
    %v31 = vpop.xlane.xlu0 %30
    %32 = vadd.xlane.f32.xlu0 %v21
    %v33 = vpop.xlane.xlu0 %32
    %34 = vadd.xlane.f32.xlu0 %v22
    %v35 = vpop.xlane.xlu0 %34
    %36 = vadd.xlane.f32.xlu0 %v23
    %v37 = vpop.xlane.xlu0 %36
    %38 = vadd.xlane.f32.xlu0 %v24
    %v39 = vpop.xlane.xlu0 %38
    %40 = vadd.xlane.f32.xlu0 %v25
    %v41 = vpop.xlane.xlu0 %40
    %v42 = vrcp.pop 128.0
    %v43 = vmul.f32 128.0, %v42
    %v44 = vsub.f32 1.0, %v43
    %v45 = vmul.f32 %v42, %v44
    %v46 = vadd.f32 %v42, %v45
    %vm47 = vweird.f32 %v42
    %v48 = vsel %vm47, %v42, %v46
    %v49 = vmul.f32 %v27, %v48
    %v50 = vmul.f32 %v29, %v48
    %v51 = vmul.f32 %v31, %v48
    %v52 = vmul.f32 %v33, %v48
    %v53 = vmul.f32 %v35, %v48
    %v54 = vmul.f32 %v37, %v48
    %v55 = vmul.f32 %v39, %v48
    %v56 = vmul.f32 %v41, %v48
    %v57 = vsub.f32 %v18, %v49
    %v58 = vsub.f32 %v19, %v50
    %v59 = vsub.f32 %v20, %v51
    %v60 = vsub.f32 %v21, %v52
    %v61 = vsub.f32 %v22, %v53
    %v62 = vsub.f32 %v23, %v54
    %v63 = vsub.f32 %v24, %v55
    %v64 = vsub.f32 %v25, %v56
    %v65 = vmul.f32 %v57, %v57
    %v66 = vmul.f32 %v58, %v58
    %v67 = vmul.f32 %v59, %v59
    %v68 = vmul.f32 %v60, %v60
    %v69 = vmul.f32 %v61, %v61
    %v70 = vmul.f32 %v62, %v62
    %v71 = vmul.f32 %v63, %v63
    %v72 = vmul.f32 %v64, %v64
    %73 = vadd.xlane.f32.xlu0 %v65
    %v74 = vpop.xlane.xlu0 %73
    %75 = vadd.xlane.f32.xlu0 %v66
    %v76 = vpop.xlane.xlu0 %75
    %77 = vadd.xlane.f32.xlu0 %v67
    %v78 = vpop.xlane.xlu0 %77
    %79 = vadd.xlane.f32.xlu0 %v68
    %v80 = vpop.xlane.xlu0 %79
    %81 = vadd.xlane.f32.xlu0 %v69
    %v82 = vpop.xlane.xlu0 %81
    %83 = vadd.xlane.f32.xlu0 %v70
    %v84 = vpop.xlane.xlu0 %83
    %85 = vadd.xlane.f32.xlu0 %v71
    %v86 = vpop.xlane.xlu0 %85
    %87 = vadd.xlane.f32.xlu0 %v72
    %v88 = vpop.xlane.xlu0 %87
    %v89 = vmul.f32 %v74, %v48
    %v90 = vmul.f32 %v76, %v48
    %v91 = vmul.f32 %v78, %v48
    %v92 = vmul.f32 %v80, %v48
    %v93 = vmul.f32 %v82, %v48
    %v94 = vmul.f32 %v84, %v48
    %v95 = vmul.f32 %v86, %v48
    %v96 = vmul.f32 %v88, %v48
    %v97 = vadd.f32 %v89, 1e-05
    %v98 = vadd.f32 %v90, 1e-05
    %v99 = vadd.f32 %v91, 1e-05
    %v100 = vadd.f32 %v92, 1e-05
    %v101 = vadd.f32 %v93, 1e-05
    %v102 = vadd.f32 %v94, 1e-05
    %v103 = vadd.f32 %v95, 1e-05
    %v104 = vadd.f32 %v96, 1e-05
    %v105 = vrsqrt.pop %v97
    %v106 = vmul.f32 %v105, %v97
    %v107 = vmul.f32 %v106, %v105
    %v108 = vmul.f32 0.5, %v107
    %v109 = vsub.f32 1.5, %v108
    %v110 = vmul.f32 %v105, %v109
    %vm111 = vweird.f32 %v97
    %vm112 = vweird.f32 %v105
    %vm113 = vmor %vm111, %vm112
    %v114 = vsel %vm113, %v105, %v110
    %v115 = vrsqrt.pop %v98
    %v116 = vmul.f32 %v115, %v98
    %v117 = vmul.f32 %v116, %v115
    %v118 = vmul.f32 0.5, %v117
    %v119 = vsub.f32 1.5, %v118
    %v120 = vmul.f32 %v115, %v119
    %vm121 = vweird.f32 %v98
    %vm122 = vweird.f32 %v115
    %vm123 = vmor %vm121, %vm122
    %v124 = vsel %vm123, %v115, %v120
    %v125 = vrsqrt.pop %v99
    %v126 = vmul.f32 %v125, %v99
    %v127 = vmul.f32 %v126, %v125
    %v128 = vmul.f32 0.5, %v127
    %v129 = vsub.f32 1.5, %v128
    %v130 = vmul.f32 %v125, %v129
    %vm131 = vweird.f32 %v99
    %vm132 = vweird.f32 %v125
    %vm133 = vmor %vm131, %vm132
    %v134 = vsel %vm133, %v125, %v130
    %v135 = vrsqrt.pop %v100
    %v136 = vmul.f32 %v135, %v100
    %v137 = vmul.f32 %v136, %v135
    %v138 = vmul.f32 0.5, %v137
    %v139 = vsub.f32 1.5, %v138
    %v140 = vmul.f32 %v135, %v139
    %vm141 = vweird.f32 %v100
    %vm142 = vweird.f32 %v135
    %vm143 = vmor %vm141, %vm142
    %v144 = vsel %vm143, %v135, %v140
    %v145 = vrsqrt.pop %v101
    %v146 = vmul.f32 %v145, %v101
    %v147 = vmul.f32 %v146, %v145
    %v148 = vmul.f32 0.5, %v147
    %v149 = vsub.f32 1.5, %v148
    %v150 = vmul.f32 %v145, %v149
    %vm151 = vweird.f32 %v101
    %vm152 = vweird.f32 %v145
    %vm153 = vmor %vm151, %vm152
    %v154 = vsel %vm153, %v145, %v150
    %v155 = vrsqrt.pop %v102
    %v156 = vmul.f32 %v155, %v102
    %v157 = vmul.f32 %v156, %v155
    %v158 = vmul.f32 0.5, %v157
    %v159 = vsub.f32 1.5, %v158
    %v160 = vmul.f32 %v155, %v159
    %vm161 = vweird.f32 %v102
    %vm162 = vweird.f32 %v155
    %vm163 = vmor %vm161, %vm162
    %v164 = vsel %vm163, %v155, %v160
    %v165 = vrsqrt.pop %v103
    %v166 = vmul.f32 %v165, %v103
    %v167 = vmul.f32 %v166, %v165
    %v168 = vmul.f32 0.5, %v167
    %v169 = vsub.f32 1.5, %v168
    %v170 = vmul.f32 %v165, %v169
    %vm171 = vweird.f32 %v103
    %vm172 = vweird.f32 %v165
    %vm173 = vmor %vm171, %vm172
    %v174 = vsel %vm173, %v165, %v170
    %v175 = vrsqrt.pop %v104
    %v176 = vmul.f32 %v175, %v104
    %v177 = vmul.f32 %v176, %v175
    %v178 = vmul.f32 0.5, %v177
    %v179 = vsub.f32 1.5, %v178
    %v180 = vmul.f32 %v175, %v179
    %vm181 = vweird.f32 %v104
    %vm182 = vweird.f32 %v175
    %vm183 = vmor %vm181, %vm182
    %v184 = vsel %vm183, %v175, %v180
    %v185 = vmul.f32 %v57, %v114
    %v186 = vmul.f32 %v58, %v124
    %v187 = vmul.f32 %v59, %v134
    %v188 = vmul.f32 %v60, %v144
    %v189 = vmul.f32 %v61, %v154
    %v190 = vmul.f32 %v62, %v164
    %v191 = vmul.f32 %v63, %v174
    %v192 = vmul.f32 %v64, %v184
    %v193 = vld [vmem:[%s2] sm:$0x1]
    %v195 = vperm.slane %v193, 0
    %v197 = vmul.f32 %v185, %v195
    %v198 = vmul.f32 %v186, %v195
    %v199 = vmul.f32 %v187, %v195
    %v200 = vmul.f32 %v188, %v195
    %v201 = vmul.f32 %v189, %v195
    %v202 = vmul.f32 %v190, %v195
    %v203 = vmul.f32 %v191, %v195
    %v204 = vmul.f32 %v192, %v195
    %v205 = vld [vmem:[%s3] sm:$0x1]
    %v207 = vperm.slane %v205, 0
    %v209 = vadd.f32 %v197, %v207
    %v210 = vadd.f32 %v198, %v207
    %v211 = vadd.f32 %v199, %v207
    %v212 = vadd.f32 %v200, %v207
    %v213 = vadd.f32 %v201, %v207
    %v214 = vadd.f32 %v202, %v207
    %v215 = vadd.f32 %v203, %v207
    %v216 = vadd.f32 %v204, %v207
    %v217 = vpack.c.bf16 %v210, %v209
    %v218 = vpack.c.bf16 %v212, %v211
    %v219 = vpack.c.bf16 %v214, %v213
    %v220 = vpack.c.bf16 %v216, %v215
    %v221 = vld [vmem:[%s1] sm:$0xf]
    %v222 = vld [vmem:[%s1 + $0x4] sm:$0xf]
    %v223 = vld [vmem:[%s1 + $0x8] sm:$0xf]
    %v224 = vld [vmem:[%s1 + $0xc] sm:$0xf]
    %v225 = vld [vmem:[%s1 + $0x10] sm:$0xf]
    %v226 = vld [vmem:[%s1 + $0x14] sm:$0xf]
    %v227 = vld [vmem:[%s1 + $0x18] sm:$0xf]
    %v228 = vld [vmem:[%s1 + $0x1c] sm:$0xf]
    %v229 = vld [vmem:[%s1 + $0x20] sm:$0xf]
    %v230 = vld [vmem:[%s1 + $0x24] sm:$0xf]
    %v231 = vld [vmem:[%s1 + $0x28] sm:$0xf]
    %v232 = vld [vmem:[%s1 + $0x2c] sm:$0xf]
    %v233 = vld [vmem:[%s1 + $0x30] sm:$0xf]
    %v234 = vld [vmem:[%s1 + $0x34] sm:$0xf]
    %v235 = vld [vmem:[%s1 + $0x38] sm:$0xf]
    %v236 = vld [vmem:[%s1 + $0x3c] sm:$0xf]
    %v237 = vld [vmem:[%s1 + $0x40] sm:$0xf]
    %v238 = vld [vmem:[%s1 + $0x44] sm:$0xf]
    %v239 = vld [vmem:[%s1 + $0x48] sm:$0xf]
    %v240 = vld [vmem:[%s1 + $0x4c] sm:$0xf]
    %v241 = vld [vmem:[%s1 + $0x50] sm:$0xf]
    %v242 = vld [vmem:[%s1 + $0x54] sm:$0xf]
    %v243 = vld [vmem:[%s1 + $0x58] sm:$0xf]
    %v244 = vld [vmem:[%s1 + $0x5c] sm:$0xf]
    %v245 = vld [vmem:[%s1 + $0x60] sm:$0xf]
    %v246 = vld [vmem:[%s1 + $0x64] sm:$0xf]
    %v247 = vld [vmem:[%s1 + $0x68] sm:$0xf]
    %v248 = vld [vmem:[%s1 + $0x6c] sm:$0xf]
    %v249 = vld [vmem:[%s1 + $0x70] sm:$0xf]
    %v250 = vld [vmem:[%s1 + $0x74] sm:$0xf]
    %v251 = vld [vmem:[%s1 + $0x78] sm:$0xf]
    %v252 = vld [vmem:[%s1 + $0x7c] sm:$0xf]
    %v285 = vunpack.c.l.b16 %v221
    %v286 = vunpack.c.l.b16 %v222
    %v287 = vunpack.c.l.b16 %v223
    %v288 = vunpack.c.l.b16 %v224
    %v289 = vunpack.c.l.b16 %v225
    %v290 = vunpack.c.l.b16 %v226
    %v291 = vunpack.c.l.b16 %v227
    %v292 = vunpack.c.l.b16 %v228
    %v293 = vunpack.c.l.b16 %v229
    %v294 = vunpack.c.l.b16 %v230
    %v295 = vunpack.c.l.b16 %v231
    %v296 = vunpack.c.l.b16 %v232
    %v297 = vunpack.c.l.b16 %v233
    %v298 = vunpack.c.l.b16 %v234
    %v299 = vunpack.c.l.b16 %v235
    %v300 = vunpack.c.l.b16 %v236
    %v301 = vunpack.c.l.b16 %v237
    %v302 = vunpack.c.l.b16 %v238
    %v303 = vunpack.c.l.b16 %v239
    %v304 = vunpack.c.l.b16 %v240
    %v305 = vunpack.c.l.b16 %v241
    %v306 = vunpack.c.l.b16 %v242
    %v307 = vunpack.c.l.b16 %v243
    %v308 = vunpack.c.l.b16 %v244
    %v309 = vunpack.c.l.b16 %v245
    %v310 = vunpack.c.l.b16 %v246
    %v311 = vunpack.c.l.b16 %v247
    %v312 = vunpack.c.l.b16 %v248
    %v313 = vunpack.c.l.b16 %v249
    %v314 = vunpack.c.l.b16 %v250
    %v315 = vunpack.c.l.b16 %v251
    %v316 = vunpack.c.l.b16 %v252
    %v317 = vpack.c.b16 %v286, %v285
    %v318 = vpack.c.b16 %v288, %v287
    %v319 = vpack.c.b16 %v290, %v289
    %v320 = vpack.c.b16 %v292, %v291
    %v321 = vpack.c.b16 %v294, %v293
    %v322 = vpack.c.b16 %v296, %v295
    %v323 = vpack.c.b16 %v298, %v297
    %v324 = vpack.c.b16 %v300, %v299
    %v325 = vpack.c.b16 %v302, %v301
    %v326 = vpack.c.b16 %v304, %v303
    %v327 = vpack.c.b16 %v306, %v305
    %v328 = vpack.c.b16 %v308, %v307
    %v329 = vpack.c.b16 %v310, %v309
    %v330 = vpack.c.b16 %v312, %v311
    %v331 = vpack.c.b16 %v314, %v313
    %v332 = vpack.c.b16 %v316, %v315
    %349 = vmatpush.bf16.xpose.msra.mxu0 %v324
    %350 = vmatpush.bf16.xpose.msra.mxu0 %v323
    %351 = vmatpush.bf16.xpose.msra.mxu0 %v322
    %352 = vmatpush.bf16.xpose.msra.mxu0 %v321
    %353 = vmatpush.bf16.xpose.msra.mxu0 %v320
    %354 = vmatpush.bf16.xpose.msra.mxu0 %v319
    %355 = vmatpush.bf16.xpose.msra.mxu0 %v318
    %356 = vmatpush.bf16.xpose.msra.mxu0 %v317
    %357 = vmatmul.bf16.gmra.mxu0 %v217
    %v358 = vpop.f32.mrf.mxu0
    %v359 = vadd.f32 0.0, %v358
    %v360 = vpop.f32.mrf.mxu0
    %v361 = vadd.f32 0.0, %v360
    %362 = vmatmul.bf16.gmra.mxu0 %v218
    %v363 = vpop.f32.mrf.mxu0
    %v364 = vadd.f32 0.0, %v363
    %v365 = vpop.f32.mrf.mxu0
    %v366 = vadd.f32 0.0, %v365
    %367 = vmatmul.bf16.gmra.mxu0 %v219
    %v368 = vpop.f32.mrf.mxu0
    %v369 = vadd.f32 0.0, %v368
    %v370 = vpop.f32.mrf.mxu0
    %v371 = vadd.f32 0.0, %v370
    %372 = vmatmul.bf16.gmra.mxu0 %v220
    %v373 = vpop.f32.mrf.mxu0
    %v374 = vadd.f32 0.0, %v373
    %v375 = vpop.f32.mrf.mxu0
    %v376 = vadd.f32 0.0, %v375
    %377 = vdwg.mxu0
    %378 = vmatpush.bf16.xpose.msra.mxu0 %v332
    %379 = vmatpush.bf16.xpose.msra.mxu0 %v331
    %380 = vmatpush.bf16.xpose.msra.mxu0 %v330
    %381 = vmatpush.bf16.xpose.msra.mxu0 %v329
    %382 = vmatpush.bf16.xpose.msra.mxu0 %v328
    %383 = vmatpush.bf16.xpose.msra.mxu0 %v327
    %384 = vmatpush.bf16.xpose.msra.mxu0 %v326
    %385 = vmatpush.bf16.xpose.msra.mxu0 %v325
    %386 = vmatmul.bf16.gmra.mxu0 %v217
    %v387 = vpop.f32.mrf.mxu0
    %v388 = vadd.f32 0.0, %v387
    %v389 = vpop.f32.mrf.mxu0
    %v390 = vadd.f32 0.0, %v389
    %391 = vmatmul.bf16.gmra.mxu0 %v218
    %v392 = vpop.f32.mrf.mxu0
    %v393 = vadd.f32 0.0, %v392
    %v394 = vpop.f32.mrf.mxu0
    %v395 = vadd.f32 0.0, %v394
    %396 = vmatmul.bf16.gmra.mxu0 %v219
    %v397 = vpop.f32.mrf.mxu0
    %v398 = vadd.f32 0.0, %v397
    %v399 = vpop.f32.mrf.mxu0
    %v400 = vadd.f32 0.0, %v399
    %401 = vmatmul.bf16.gmra.mxu0 %v220
    %v402 = vpop.f32.mrf.mxu0
    %v403 = vadd.f32 0.0, %v402
    %v404 = vpop.f32.mrf.mxu0
    %v405 = vadd.f32 0.0, %v404
    %406 = vdwg.mxu0
    %407 = vst [vmem:[#allocation2] sm:$0xff] %v359
    %408 = vst [vmem:[#allocation2 + $0x8] sm:$0xff] %v388
    %409 = vst [vmem:[#allocation2 + $0x10] sm:$0xff] %v361
    %410 = vst [vmem:[#allocation2 + $0x18] sm:$0xff] %v390
    %411 = vst [vmem:[#allocation2 + $0x20] sm:$0xff] %v364
    %412 = vst [vmem:[#allocation2 + $0x28] sm:$0xff] %v393
    %413 = vst [vmem:[#allocation2 + $0x30] sm:$0xff] %v366
    %414 = vst [vmem:[#allocation2 + $0x38] sm:$0xff] %v395
    %415 = vst [vmem:[#allocation2 + $0x40] sm:$0xff] %v369
    %416 = vst [vmem:[#allocation2 + $0x48] sm:$0xff] %v398
    %417 = vst [vmem:[#allocation2 + $0x50] sm:$0xff] %v371
    %418 = vst [vmem:[#allocation2 + $0x58] sm:$0xff] %v400
    %419 = vst [vmem:[#allocation2 + $0x60] sm:$0xff] %v374
    %420 = vst [vmem:[#allocation2 + $0x68] sm:$0xff] %v403
    %421 = vst [vmem:[#allocation2 + $0x70] sm:$0xff] %v376
    %422 = vst [vmem:[#allocation2 + $0x78] sm:$0xff] %v405
    // Predicated region
    $region18: #{gpt_forward.21} parent=1 // pred_check
      _
    $region19: #{gpt_forward.21} parent=1 // pred_check_branch
      %424 = sbr.rel (0) target = $region21
    $region20: #{gpt_forward.21} parent=1 // pred_region
      %426 = vsyncadd [#allocation3], 0
      %s427 = sshll.u32 [#allocation2], 4
      %s428 = int_to_ptr.vmem [resolvable:$true] %s427
      %s429 = sshll.u32 %s4, 4
      %s430 = int_to_ptr.hbm [resolvable:$true] %s429
      %435 = dma.vmem_to_hbm [thread:$0]  %s428, 2048, %s430, [#allocation3], 256, 256, 16
    $region21: #{gpt_forward.21} parent=1 // pred_fallthru
      _
    // Predicated region
    $region22: #{gpt_forward.21} parent=1 // pred_check
      _
    $region23: #{gpt_forward.21} parent=1 // pred_check_branch
      %437 = sbr.rel (0) target = $region25
    $region24: #{gpt_forward.21} parent=1 // pred_region
      %439 = dma.done [#allocation3], 2048
    $region25: #{gpt_forward.21} parent=1 // pred_fallthru
      _
    %440 = vsyncpa [#allocation3], 1

</llo_original>
